<compile_context>
chip_gen: v5e
topology: v5e:2x2
jax: 0.10.0
libtpu: 0.0.40
codegen_flags: <defaults>
</compile_context>

<pallas_src>
import functools
import math

import jax
import jax.numpy as jnp
from jax import lax
from jax.experimental import pallas as pl
from jax.experimental.pallas import tpu as pltpu

_BN_EPS = 1e-5
_VM = pltpu.MemorySpace.VMEM


# ------------------------------------------------------------------ kernel --

def _basic_block_kernel(x_ref, w1_ref, wt1_ref, w2_ref, wt2_ref, w3_ref, wt3_ref,
                        w4a_ref, w4b_ref, wt4_ref,
                        mem1_ref, mem2_ref, mem3_ref, mem4_ref,
                        mem1_o, mem2_o, mem3_o, mem4_o,
                        spk1_o, spk2_o, spk3_o, spk4_o, pool_o, fr_o,
                        *, N, H, W, C):
    f32, bf16 = jnp.float32, jnp.bfloat16
    R = N * H                       # packed rows (n, h)
    half = C // 2
    cnt = float(N * H * W)          # BN element count per channel
    inv_cnt = 1.0 / cnt

    # ---- row masks for the H-direction 'same' padding ----------------------
    row = lax.broadcasted_iota(jnp.int32, (R, 1), 0)
    at_start = (row % H) == 0
    at_end = (row % H) == (H - 1)

    def shift_down(a):              # out[r] = a[r-1], zero at each image's first row
        s = jnp.concatenate([jnp.zeros((1, a.shape[1]), a.dtype), a[:-1, :]], axis=0)
        return jnp.where(at_start, 0.0, s)

    def shift_up(a):                # out[r] = a[r+1], zero at each image's last row
        s = jnp.concatenate([a[1:, :], jnp.zeros((1, a.shape[1]), a.dtype)], axis=0)
        return jnp.where(at_end, 0.0, s)

    def conv3x3(xb, w_ref):         # xb (R, W*Cin) bf16, w_ref (3, W*Cin, W*Cout) bf16
        a0 = jnp.dot(xb, w_ref[0], preferred_element_type=f32)
        a1 = jnp.dot(xb, w_ref[1], preferred_element_type=f32)
        a2 = jnp.dot(xb, w_ref[2], preferred_element_type=f32)
        # tap kh=0 uses input row h-1, kh=2 uses h+1; kw taps + W padding are
        # already folded into the banded weight matrices.
        return a1 + shift_down(a0) + shift_up(a2)

    def batchnorm(a, Cc):           # training-mode batch stats, weight=1 / bias=0
        L_ = a.shape[1]

        def gsum(t):                # exact per-channel sum broadcast over the W groups
            s = Cc
            while s < L_:           # circular lane-shift tree (W is a power of two)
                t = t + jnp.concatenate([t[:, s:], t[:, :s]], axis=1)
                s *= 2
            return t

        mean = gsum(jnp.sum(a, axis=0, keepdims=True)) * inv_cnt
        cen = a - mean              # two-pass (center-then-square): no cancellation
        var = gsum(jnp.sum(cen * cen, axis=0, keepdims=True)) * inv_cnt
        return cen * lax.rsqrt(var + _BN_EPS)

    def snn_cell(acc, mem_ref, wt_ref, Cc, mem_o, spk_o):
        conv_bnx = batchnorm(acc, Cc)                       # (R, W*Cc) f32
        mem = mem_ref[...]
        # conv_tauM's per-channel bias is dropped: exactly cancelled by the
        # training-mode BN1 mean subtraction that follows.
        acc_t = conv3x3((conv_bnx + mem).astype(bf16), wt_ref)
        tau = jax.nn.sigmoid(batchnorm(acc_t, Cc))
        mem_new = mem + (conv_bnx - mem) * tau              # mem_update_adp
        spk = (mem_new > 1.0).astype(f32)
        mem_o[...] = (1.0 - spk) * mem_new
        spk_b = spk.astype(bf16)                            # spikes are exactly 0/1
        spk_o[...] = spk_b
        fr_sum = jnp.sum(jnp.sum(spk, axis=0, keepdims=True), axis=1, keepdims=True)
        return spk_b, fr_sum

    # ---- the four fused SNN_Conv_cells -------------------------------------
    spk1, f1 = snn_cell(conv3x3(x_ref[...], w1_ref), mem1_ref, wt1_ref, C, mem1_o, spk1_o)
    # conv2: torch.split(route, planes//2)[1] folded into zero weight rows
    spk2, f2 = snn_cell(conv3x3(spk1, w2_ref), mem2_ref, wt2_ref, half, mem2_o, spk2_o)
    spk3, f3 = snn_cell(conv3x3(spk2, w3_ref), mem3_ref, wt3_ref, half, mem3_o, spk3_o)
    # conv4 (1x1): torch.cat([spk3, spk2], C) folded into two summed matmuls
    acc4 = (jnp.dot(spk3, w4a_ref[...], preferred_element_type=f32) +
            jnp.dot(spk2, w4b_ref[...], preferred_element_type=f32))
    spk4, f4 = snn_cell(acc4, mem4_ref, wt4_ref, C, mem4_o, spk4_o)

    # firing-rate contributions: mean of each spike map
    fr_o[...] = (f1 + f4) * (1.0 / (cnt * C)) + (f2 + f3) * (1.0 / (cnt * half))

    # ---- fused maxpool2x2/2 of cat([route=spk1, feat=spk4], channel) --------
    L = W * C

    def hpool(v):                   # reduce H pairs: (N*H, L) -> (N*H/2, L)
        rows = [jnp.maximum(v[2 * i:2 * i + 1, :], v[2 * i + 1:2 * i + 2, :])
                for i in range(R // 2)]
        return jnp.concatenate(rows, axis=0)

    ry, fy = hpool(spk1), hpool(spk4)
    lane = lax.broadcasted_iota(jnp.int32, ry.shape, 1)
    is_route = (lane % (2 * C)) < C                         # out channel < C -> route
    zc = jnp.zeros((R // 2, C), ry.dtype)
    fy_r = jnp.concatenate([zc, fy[:, :L - C]], axis=1)     # fy shifted right by C lanes
    ry_l = jnp.concatenate([ry[:, C:], zc], axis=1)         # ry shifted left  by C lanes
    pool_o[...] = jnp.maximum(jnp.where(is_route, ry, fy_r),
                              jnp.where(is_route, ry_l, fy))


# ----------------------------------------------------------------- wrapper --

def _banded_taps(w_hwio, W):
    """(K,K,Cin,Cout) conv weight -> (K, W*Cin, W*Cout) bf16 banded matrices.

    Tap kh acts on input row h+kh-K//2; the kw taps and the W-direction 'same'
    zero padding are folded into the band structure so the kernel needs no
    lane shifts and no im2col."""
    K, _, Cin, Cout = w_hwio.shape
    p = K // 2
    taps = []
    for kh in range(K):
        blk = jnp.zeros((W, Cin, W, Cout), jnp.float32)
        for kw in range(K):
            band = jnp.eye(W, k=p - kw, dtype=jnp.float32)   # w_in = w_out + kw - p
            blk = blk + jnp.einsum("io,cd->icod", band, w_hwio[kh, kw].astype(jnp.float32))
        taps.append(blk.reshape(W * Cin, W * Cout))
    return jnp.stack(taps).astype(jnp.bfloat16)


def basic_block_forward(x, h, layer_idx, fr, params, planes):
    """BasicBlock.forward.  h[2*i] = membrane (f32 NHWC), h[2*i+1] = spikes (bf16 NHWC)."""
    h = list(h)
    N, H, W, Cin = x.shape
    C, half = planes, planes // 2
    R = N * H
    assert W & (W - 1) == 0 and H % 2 == 0 and W % 2 == 0
    base = layer_idx + 1
    chans = (C, half, half, C)
    mems = [h[2 * (base + i)] for i in range(4)]

    # lane-packed (free contiguous reshapes): activations/state as (N*H, W*ch)
    x_p = x.reshape(R, W * Cin).astype(jnp.bfloat16)
    mems_p = [m.reshape(R, W * c) for m, c in zip(mems, chans)]

    # banded bf16 conv weights; channel split / concat folded into them
    w1b = _banded_taps(params["conv1"]["w1"], W)
    wt1b = _banded_taps(params["conv1"]["wt"], W)
    w2_full = jnp.concatenate(
        [jnp.zeros((3, 3, half, half), jnp.float32), params["conv2"]["w1"]], axis=2)
    w2b = _banded_taps(w2_full, W)
    wt2b = _banded_taps(params["conv2"]["wt"], W)
    w3b = _banded_taps(params["conv3"]["w1"], W)
    wt3b = _banded_taps(params["conv3"]["wt"], W)
    w4 = params["conv4"]["w1"]                                  # (1,1,C,C)
    w4a = _banded_taps(w4[:, :, :half, :], W)[0]                # acts on spk3
    w4b = _banded_taps(w4[:, :, half:, :], W)[0]                # acts on spk2 (route1)
    wt4b = _banded_taps(params["conv4"]["wt"], W)

    out_shapes = (
        jax.ShapeDtypeStruct((R, W * C), jnp.float32),          # mem1
        jax.ShapeDtypeStruct((R, W * half), jnp.float32),       # mem2
        jax.ShapeDtypeStruct((R, W * half), jnp.float32),       # mem3
        jax.ShapeDtypeStruct((R, W * C), jnp.float32),          # mem4
        jax.ShapeDtypeStruct((R, W * C), jnp.bfloat16),         # spk1 (route)
        jax.ShapeDtypeStruct((R, W * half), jnp.bfloat16),      # spk2
        jax.ShapeDtypeStruct((R, W * half), jnp.bfloat16),      # spk3
        jax.ShapeDtypeStruct((R, W * C), jnp.bfloat16),         # spk4 (feat)
        jax.ShapeDtypeStruct((R // 2, W * C), jnp.bfloat16),    # maxpool(cat) packed
        jax.ShapeDtypeStruct((1, 1), jnp.float32),              # firing-rate sum
    )
    kernel = functools.partial(_basic_block_kernel, N=N, H=H, W=W, C=C)
    outs = pl.pallas_call(
        kernel,
        out_shape=out_shapes,
        in_specs=[pl.BlockSpec(memory_space=_VM)] * 14,
        out_specs=tuple(pl.BlockSpec(memory_space=_VM) for _ in out_shapes),
        input_output_aliases={10: 0, 11: 1, 12: 2, 13: 3},      # membranes in place
    )(x_p, w1b, wt1b, w2b, wt2b, w3b, wt3b, w4a, w4b, wt4b, *mems_p)
    # TODO(synk): for production feature-map sizes add a grid over N*H
    # ("parallel" for the v7x megacore) with cross-tile BN sum accumulation and
    # re-derive tile sizes against 64 MiB VMEM / explicit vmem_limit_bytes.

    for i in range(4):
        h[2 * (base + i)] = outs[i].reshape(N, H, W, chans[i])
        h[2 * (base + i) + 1] = outs[4 + i].reshape(N, H, W, chans[i])
    feat = h[2 * (base + 3) + 1]
    out = outs[8].reshape(N, H // 2, W // 2, 2 * C)
    fr = fr + outs[9][0, 0]
    return out, feat, base + 3, h, fr


# --------------------------------------------------------------- param init --

def _xavier_normal(key, K, cin, cout):
    fan_in, fan_out = cin * K * K, cout * K * K
    std = math.sqrt(2.0 / (fan_in + fan_out))
    return std * jax.random.normal(key, (K, K, cin, cout), jnp.float32)


def init_snn_cell_params(key, cin, cout, K):
    k1, k2, k3 = jax.random.split(key, 3)
    w1 = _xavier_normal(k1, K, cin, cout)          # conv1_x weight (no bias)
    wt = _xavier_normal(k2, 3, cout, cout)         # conv_tauM weight
    bound = 1.0 / math.sqrt(cout * 9)
    # bt kept for parameter parity only; a constant per-channel bias is exactly
    # cancelled by the training-mode BN1 that follows conv_tauM.
    bt = jax.random.uniform(k3, (1, cout), jnp.float32, -bound, bound)
    return {"w1": w1, "wt": wt, "bt": bt}


def init_basic_block_params(key, cin, planes):
    k1, k2, k3, k4 = jax.random.split(key, 4)
    return {
        "conv1": init_snn_cell_params(k1, cin, planes, 3),
        "conv2": init_snn_cell_params(k2, planes // 2, planes // 2, 3),
        "conv3": init_snn_cell_params(k3, planes // 2, planes // 2, 3),
        "conv4": init_snn_cell_params(k4, planes, planes, 1),
    }


# --------------------------------------------------------------------- main --

if __name__ == "__main__":
    key = jax.random.PRNGKey(0)
    N, Cin, H, W = 2, 4, 16, 16
    planes = 8

    keys = jax.random.split(key, 10)
    kx, kp, kh = keys[0], keys[1], keys[2:]

    x_nchw = jax.random.normal(kx, (N, Cin, H, W), jnp.float32)   # PyTorch NCHW
    x = jnp.transpose(x_nchw, (0, 2, 3, 1))                       # -> NHWC

    params = init_basic_block_params(kp, Cin, planes)

    # hidden-state list h: indices 2..9 used for layer_idx=0 (mem f32, spk bf16)
    chans = [planes, planes // 2, planes // 2, planes]
    h = [jnp.zeros((1,), jnp.float32), jnp.zeros((1,), jnp.float32)]
    for i, c in enumerate(chans):
        mem0 = 0.1 * jax.random.normal(kh[2 * i], (N, H, W, c), jnp.float32)
        spk0 = jnp.zeros((N, H, W, c), jnp.bfloat16)
        h += [mem0, spk0]

    # TODO(synk): BatchNorm running_mean/running_var updates (training-time side
    # effect of the PyTorch module) are not reproduced; normalization uses
    # training-mode batch statistics with biased variance, matching forward.
    fwd = jax.jit(lambda x_, h_, fr_, p_: basic_block_forward(x_, h_, 0, fr_, p_, planes))
    out, feat, layer_i, h_new, fr = fwd(x, h, 0.0, params)
    jax.block_until_ready((out, feat, fr, h_new))

    assert out.shape == (N, H // 2, W // 2, 2 * planes), out.shape
    assert feat.shape == (N, H, W, planes), feat.shape
    assert int(layer_i) == 4
    print("KERNEL_OK")
</pallas_src>

<mosaic_0001>
module attributes {stable_mosaic.version = 11 : i64} {
  func.func @_basic_block_kernel(%arg0: memref<32x64xbf16, #tpu.memory_space<vmem>>, %arg1: memref<3x64x128xbf16, #tpu.memory_space<vmem>>, %arg2: memref<3x128x128xbf16, #tpu.memory_space<vmem>>, %arg3: memref<3x128x64xbf16, #tpu.memory_space<vmem>>, %arg4: memref<3x64x64xbf16, #tpu.memory_space<vmem>>, %arg5: memref<3x64x64xbf16, #tpu.memory_space<vmem>>, %arg6: memref<3x64x64xbf16, #tpu.memory_space<vmem>>, %arg7: memref<64x128xbf16, #tpu.memory_space<vmem>>, %arg8: memref<64x128xbf16, #tpu.memory_space<vmem>>, %arg9: memref<3x128x128xbf16, #tpu.memory_space<vmem>>, %arg10: memref<32x128xf32, #tpu.memory_space<vmem>>, %arg11: memref<32x64xf32, #tpu.memory_space<vmem>>, %arg12: memref<32x64xf32, #tpu.memory_space<vmem>>, %arg13: memref<32x128xf32, #tpu.memory_space<vmem>>, %arg14: memref<32x128xf32, #tpu.memory_space<vmem>>, %arg15: memref<32x64xf32, #tpu.memory_space<vmem>>, %arg16: memref<32x64xf32, #tpu.memory_space<vmem>>, %arg17: memref<32x128xf32, #tpu.memory_space<vmem>>, %arg18: memref<32x128xbf16, #tpu.memory_space<vmem>>, %arg19: memref<32x64xbf16, #tpu.memory_space<vmem>>, %arg20: memref<32x64xbf16, #tpu.memory_space<vmem>>, %arg21: memref<32x128xbf16, #tpu.memory_space<vmem>>, %arg22: memref<16x128xbf16, #tpu.memory_space<vmem>>, %arg23: memref<1x1xf32, #tpu.memory_space<vmem>>) attributes {dimension_semantics = [], scalar_prefetch = 0 : i64, scratch_operands = 0 : i64, tpu.core_type = #tpu.core_type<tc>} {
    %0 = tpu.iota {dimensions = array<i32: 0>} : vector<32x1xi32>
    %c16_i32 = arith.constant 16 : i32
    %c0_i32 = arith.constant 0 : i32
    %1 = arith.cmpi eq, %c16_i32, %c0_i32 : i32
    %c1_i32 = arith.constant 1 : i32
    %2 = arith.select %1, %c1_i32, %c16_i32 : i32
    %3 = vector.broadcast %2 : i32 to vector<32x1xi32>
    %4 = arith.remsi %0, %3 : vector<32x1xi32>
    %c0_i32_0 = arith.constant 0 : i32
    %5 = vector.broadcast %c0_i32_0 : i32 to vector<32x1xi32>
    %6 = arith.cmpi ne, %4, %5 : vector<32x1xi32>
    %c0_i32_1 = arith.constant 0 : i32
    %7 = vector.broadcast %c0_i32_1 : i32 to vector<32x1xi32>
    %8 = arith.cmpi slt, %4, %7 : vector<32x1xi32>
    %c0_i32_2 = arith.constant 0 : i32
    %9 = arith.cmpi slt, %2, %c0_i32_2 : i32
    %10 = vector.broadcast %9 : i1 to vector<32x1xi1>
    %11 = vector.broadcast %10 : vector<32x1xi1> to vector<32x1xi1>
    %12 = arith.xori %8, %11 : vector<32x1xi1>
    %13 = arith.andi %12, %6 : vector<32x1xi1>
    %14 = vector.broadcast %2 : i32 to vector<32x1xi32>
    %15 = arith.addi %4, %14 : vector<32x1xi32>
    %16 = arith.select %13, %15, %4 : vector<32x1xi1>, vector<32x1xi32>
    %c0_i32_3 = arith.constant 0 : i32
    %17 = vector.broadcast %c0_i32_3 : i32 to vector<32x1xi32>
    %18 = arith.cmpi eq, %16, %17 : vector<32x1xi32>
    %c16_i32_4 = arith.constant 16 : i32
    %c0_i32_5 = arith.constant 0 : i32
    %19 = arith.cmpi eq, %c16_i32_4, %c0_i32_5 : i32
    %c1_i32_6 = arith.constant 1 : i32
    %20 = arith.select %19, %c1_i32_6, %c16_i32_4 : i32
    %21 = vector.broadcast %20 : i32 to vector<32x1xi32>
    %22 = arith.remsi %0, %21 : vector<32x1xi32>
    %c0_i32_7 = arith.constant 0 : i32
    %23 = vector.broadcast %c0_i32_7 : i32 to vector<32x1xi32>
    %24 = arith.cmpi ne, %22, %23 : vector<32x1xi32>
    %c0_i32_8 = arith.constant 0 : i32
    %25 = vector.broadcast %c0_i32_8 : i32 to vector<32x1xi32>
    %26 = arith.cmpi slt, %22, %25 : vector<32x1xi32>
    %c0_i32_9 = arith.constant 0 : i32
    %27 = arith.cmpi slt, %20, %c0_i32_9 : i32
    %28 = vector.broadcast %27 : i1 to vector<32x1xi1>
    %29 = vector.broadcast %28 : vector<32x1xi1> to vector<32x1xi1>
    %30 = arith.xori %26, %29 : vector<32x1xi1>
    %31 = arith.andi %30, %24 : vector<32x1xi1>
    %32 = vector.broadcast %20 : i32 to vector<32x1xi32>
    %33 = arith.addi %22, %32 : vector<32x1xi32>
    %34 = arith.select %31, %33, %22 : vector<32x1xi1>, vector<32x1xi32>
    %c15_i32 = arith.constant 15 : i32
    %35 = vector.broadcast %c15_i32 : i32 to vector<32x1xi32>
    %36 = arith.cmpi eq, %34, %35 : vector<32x1xi32>
    %c0 = arith.constant 0 : index
    %c0_10 = arith.constant 0 : index
    %37 = vector.load %arg0[%c0, %c0_10] : memref<32x64xbf16, #tpu.memory_space<vmem>>, vector<32x64xbf16>
    %c0_11 = arith.constant 0 : index
    %c0_12 = arith.constant 0 : index
    %c0_13 = arith.constant 0 : index
    %38 = vector.load %arg1[%c0_11, %c0_12, %c0_13] : memref<3x64x128xbf16, #tpu.memory_space<vmem>>, vector<1x64x128xbf16>
    %39 = vector.shape_cast %38 : vector<1x64x128xbf16> to vector<64x128xbf16>
    %cst = arith.constant dense<0.000000e+00> : vector<32x128xf32>
    %40 = tpu.matmul %37, %39, %cst {dimension_numbers = #tpu.dot_dimension_numbers<[1], [0], [0], [1], [0, 0, 1, 1], [], []>} : vector<32x64xbf16>, vector<64x128xbf16>, vector<32x128xf32> -> vector<32x128xf32>
    %c1 = arith.constant 1 : index
    %c0_14 = arith.constant 0 : index
    %c0_15 = arith.constant 0 : index
    %41 = vector.load %arg1[%c1, %c0_14, %c0_15] : memref<3x64x128xbf16, #tpu.memory_space<vmem>>, vector<1x64x128xbf16>
    %42 = vector.shape_cast %41 : vector<1x64x128xbf16> to vector<64x128xbf16>
    %cst_16 = arith.constant dense<0.000000e+00> : vector<32x128xf32>
    %43 = tpu.matmul %37, %42, %cst_16 {dimension_numbers = #tpu.dot_dimension_numbers<[1], [0], [0], [1], [0, 0, 1, 1], [], []>} : vector<32x64xbf16>, vector<64x128xbf16>, vector<32x128xf32> -> vector<32x128xf32>
    %c2 = arith.constant 2 : index
    %c0_17 = arith.constant 0 : index
    %c0_18 = arith.constant 0 : index
    %44 = vector.load %arg1[%c2, %c0_17, %c0_18] : memref<3x64x128xbf16, #tpu.memory_space<vmem>>, vector<1x64x128xbf16>
    %45 = vector.shape_cast %44 : vector<1x64x128xbf16> to vector<64x128xbf16>
    %cst_19 = arith.constant dense<0.000000e+00> : vector<32x128xf32>
    %46 = tpu.matmul %37, %45, %cst_19 {dimension_numbers = #tpu.dot_dimension_numbers<[1], [0], [0], [1], [0, 0, 1, 1], [], []>} : vector<32x64xbf16>, vector<64x128xbf16>, vector<32x128xf32> -> vector<32x128xf32>
    %cst_20 = arith.constant 0.000000e+00 : f32
    %47 = vector.broadcast %cst_20 : f32 to vector<1x128xf32>
    %48 = vector.extract_strided_slice %40 {offsets = [0, 0], sizes = [31, 128], strides = [1, 1]} : vector<32x128xf32> to vector<31x128xf32>
    %49 = tpu.concatenate %47, %48 in 0 : vector<1x128xf32>, vector<31x128xf32> -> vector<32x128xf32>
    %cst_21 = arith.constant 0.000000e+00 : f32
    %50 = vector.shape_cast %18 : vector<32x1xi1> to vector<32x1xi1>
    %51 = vector.broadcast %50 : vector<32x1xi1> to vector<32x128xi1>
    %52 = vector.broadcast %cst_21 : f32 to vector<32x128xf32>
    %53 = arith.select %51, %52, %49 : vector<32x128xi1>, vector<32x128xf32>
    %54 = arith.addf %43, %53 : vector<32x128xf32>
    %55 = vector.extract_strided_slice %46 {offsets = [1, 0], sizes = [31, 128], strides = [1, 1]} : vector<32x128xf32> to vector<31x128xf32>
    %cst_22 = arith.constant 0.000000e+00 : f32
    %56 = vector.broadcast %cst_22 : f32 to vector<1x128xf32>
    %57 = tpu.concatenate %55, %56 in 0 : vector<31x128xf32>, vector<1x128xf32> -> vector<32x128xf32>
    %cst_23 = arith.constant 0.000000e+00 : f32
    %58 = vector.shape_cast %36 : vector<32x1xi1> to vector<32x1xi1>
    %59 = vector.broadcast %58 : vector<32x1xi1> to vector<32x128xi1>
    %60 = vector.broadcast %cst_23 : f32 to vector<32x128xf32>
    %61 = arith.select %59, %60, %57 : vector<32x128xi1>, vector<32x128xf32>
    %62 = arith.addf %54, %61 : vector<32x128xf32>
    %cst_24 = arith.constant dense<0.000000e+00> : vector<128xf32>
    %63 = vector.multi_reduction <add>, %62, %cst_24 [0] : vector<32x128xf32> to vector<128xf32>
    %64 = vector.shape_cast %63 : vector<128xf32> to vector<1x128xf32>
    %65 = vector.extract_strided_slice %64 {offsets = [0, 8], sizes = [1, 120], strides = [1, 1]} : vector<1x128xf32> to vector<1x120xf32>
    %66 = vector.extract_strided_slice %64 {offsets = [0, 0], sizes = [1, 8], strides = [1, 1]} : vector<1x128xf32> to vector<1x8xf32>
    %67 = tpu.concatenate %65, %66 in 1 : vector<1x120xf32>, vector<1x8xf32> -> vector<1x128xf32>
    %68 = arith.addf %64, %67 : vector<1x128xf32>
    %69 = vector.extract_strided_slice %68 {offsets = [0, 16], sizes = [1, 112], strides = [1, 1]} : vector<1x128xf32> to vector<1x112xf32>
    %70 = vector.extract_strided_slice %68 {offsets = [0, 0], sizes = [1, 16], strides = [1, 1]} : vector<1x128xf32> to vector<1x16xf32>
    %71 = tpu.concatenate %69, %70 in 1 : vector<1x112xf32>, vector<1x16xf32> -> vector<1x128xf32>
    %72 = arith.addf %68, %71 : vector<1x128xf32>
    %73 = vector.extract_strided_slice %72 {offsets = [0, 32], sizes = [1, 96], strides = [1, 1]} : vector<1x128xf32> to vector<1x96xf32>
    %74 = vector.extract_strided_slice %72 {offsets = [0, 0], sizes = [1, 32], strides = [1, 1]} : vector<1x128xf32> to vector<1x32xf32>
    %75 = tpu.concatenate %73, %74 in 1 : vector<1x96xf32>, vector<1x32xf32> -> vector<1x128xf32>
    %76 = arith.addf %72, %75 : vector<1x128xf32>
    %77 = vector.extract_strided_slice %76 {offsets = [0, 64], sizes = [1, 64], strides = [1, 1]} : vector<1x128xf32> to vector<1x64xf32>
    %78 = vector.extract_strided_slice %76 {offsets = [0, 0], sizes = [1, 64], strides = [1, 1]} : vector<1x128xf32> to vector<1x64xf32>
    %79 = tpu.concatenate %77, %78 in 1 : vector<1x64xf32>, vector<1x64xf32> -> vector<1x128xf32>
    %80 = arith.addf %76, %79 : vector<1x128xf32>
    %cst_25 = arith.constant 0.001953125 : f32
    %81 = vector.broadcast %cst_25 : f32 to vector<1x128xf32>
    %82 = arith.mulf %80, %81 : vector<1x128xf32>
    %83 = vector.broadcast %82 : vector<1x128xf32> to vector<32x128xf32>
    %84 = arith.subf %62, %83 : vector<32x128xf32>
    %85 = arith.mulf %84, %84 : vector<32x128xf32>
    %cst_26 = arith.constant dense<0.000000e+00> : vector<128xf32>
    %86 = vector.multi_reduction <add>, %85, %cst_26 [0] : vector<32x128xf32> to vector<128xf32>
    %87 = vector.shape_cast %86 : vector<128xf32> to vector<1x128xf32>
    %88 = vector.extract_strided_slice %87 {offsets = [0, 8], sizes = [1, 120], strides = [1, 1]} : vector<1x128xf32> to vector<1x120xf32>
    %89 = vector.extract_strided_slice %87 {offsets = [0, 0], sizes = [1, 8], strides = [1, 1]} : vector<1x128xf32> to vector<1x8xf32>
    %90 = tpu.concatenate %88, %89 in 1 : vector<1x120xf32>, vector<1x8xf32> -> vector<1x128xf32>
    %91 = arith.addf %87, %90 : vector<1x128xf32>
    %92 = vector.extract_strided_slice %91 {offsets = [0, 16], sizes = [1, 112], strides = [1, 1]} : vector<1x128xf32> to vector<1x112xf32>
    %93 = vector.extract_strided_slice %91 {offsets = [0, 0], sizes = [1, 16], strides = [1, 1]} : vector<1x128xf32> to vector<1x16xf32>
    %94 = tpu.concatenate %92, %93 in 1 : vector<1x112xf32>, vector<1x16xf32> -> vector<1x128xf32>
    %95 = arith.addf %91, %94 : vector<1x128xf32>
    %96 = vector.extract_strided_slice %95 {offsets = [0, 32], sizes = [1, 96], strides = [1, 1]} : vector<1x128xf32> to vector<1x96xf32>
    %97 = vector.extract_strided_slice %95 {offsets = [0, 0], sizes = [1, 32], strides = [1, 1]} : vector<1x128xf32> to vector<1x32xf32>
    %98 = tpu.concatenate %96, %97 in 1 : vector<1x96xf32>, vector<1x32xf32> -> vector<1x128xf32>
    %99 = arith.addf %95, %98 : vector<1x128xf32>
    %100 = vector.extract_strided_slice %99 {offsets = [0, 64], sizes = [1, 64], strides = [1, 1]} : vector<1x128xf32> to vector<1x64xf32>
    %101 = vector.extract_strided_slice %99 {offsets = [0, 0], sizes = [1, 64], strides = [1, 1]} : vector<1x128xf32> to vector<1x64xf32>
    %102 = tpu.concatenate %100, %101 in 1 : vector<1x64xf32>, vector<1x64xf32> -> vector<1x128xf32>
    %103 = arith.addf %99, %102 : vector<1x128xf32>
    %cst_27 = arith.constant 0.001953125 : f32
    %104 = vector.broadcast %cst_27 : f32 to vector<1x128xf32>
    %105 = arith.mulf %103, %104 : vector<1x128xf32>
    %cst_28 = arith.constant 9.99999974E-6 : f32
    %106 = vector.broadcast %cst_28 : f32 to vector<1x128xf32>
    %107 = arith.addf %105, %106 : vector<1x128xf32>
    %108 = math.rsqrt %107 : vector<1x128xf32>
    %109 = vector.broadcast %108 : vector<1x128xf32> to vector<32x128xf32>
    %110 = arith.mulf %84, %109 : vector<32x128xf32>
    %c0_29 = arith.constant 0 : index
    %c0_30 = arith.constant 0 : index
    %111 = vector.load %arg10[%c0_29, %c0_30] : memref<32x128xf32, #tpu.memory_space<vmem>>, vector<32x128xf32>
    %112 = arith.addf %110, %111 : vector<32x128xf32>
    %113 = arith.truncf %112 : vector<32x128xf32> to vector<32x128xbf16>
    %c0_31 = arith.constant 0 : index
    %c0_32 = arith.constant 0 : index
    %c0_33 = arith.constant 0 : index
    %114 = vector.load %arg2[%c0_31, %c0_32, %c0_33] : memref<3x128x128xbf16, #tpu.memory_space<vmem>>, vector<1x128x128xbf16>
    %115 = vector.shape_cast %114 : vector<1x128x128xbf16> to vector<128x128xbf16>
    %cst_34 = arith.constant dense<0.000000e+00> : vector<32x128xf32>
    %116 = tpu.matmul %113, %115, %cst_34 {dimension_numbers = #tpu.dot_dimension_numbers<[1], [0], [0], [1], [0, 0, 1, 1], [], []>} : vector<32x128xbf16>, vector<128x128xbf16>, vector<32x128xf32> -> vector<32x128xf32>
    %c1_35 = arith.constant 1 : index
    %c0_36 = arith.constant 0 : index
    %c0_37 = arith.constant 0 : index
    %117 = vector.load %arg2[%c1_35, %c0_36, %c0_37] : memref<3x128x128xbf16, #tpu.memory_space<vmem>>, vector<1x128x128xbf16>
    %118 = vector.shape_cast %117 : vector<1x128x128xbf16> to vector<128x128xbf16>
    %cst_38 = arith.constant dense<0.000000e+00> : vector<32x128xf32>
    %119 = tpu.matmul %113, %118, %cst_38 {dimension_numbers = #tpu.dot_dimension_numbers<[1], [0], [0], [1], [0, 0, 1, 1], [], []>} : vector<32x128xbf16>, vector<128x128xbf16>, vector<32x128xf32> -> vector<32x128xf32>
    %c2_39 = arith.constant 2 : index
    %c0_40 = arith.constant 0 : index
    %c0_41 = arith.constant 0 : index
    %120 = vector.load %arg2[%c2_39, %c0_40, %c0_41] : memref<3x128x128xbf16, #tpu.memory_space<vmem>>, vector<1x128x128xbf16>
    %121 = vector.shape_cast %120 : vector<1x128x128xbf16> to vector<128x128xbf16>
    %cst_42 = arith.constant dense<0.000000e+00> : vector<32x128xf32>
    %122 = tpu.matmul %113, %121, %cst_42 {dimension_numbers = #tpu.dot_dimension_numbers<[1], [0], [0], [1], [0, 0, 1, 1], [], []>} : vector<32x128xbf16>, vector<128x128xbf16>, vector<32x128xf32> -> vector<32x128xf32>
    %cst_43 = arith.constant 0.000000e+00 : f32
    %123 = vector.broadcast %cst_43 : f32 to vector<1x128xf32>
    %124 = vector.extract_strided_slice %116 {offsets = [0, 0], sizes = [31, 128], strides = [1, 1]} : vector<32x128xf32> to vector<31x128xf32>
    %125 = tpu.concatenate %123, %124 in 0 : vector<1x128xf32>, vector<31x128xf32> -> vector<32x128xf32>
    %cst_44 = arith.constant 0.000000e+00 : f32
    %126 = vector.shape_cast %18 : vector<32x1xi1> to vector<32x1xi1>
    %127 = vector.broadcast %126 : vector<32x1xi1> to vector<32x128xi1>
    %128 = vector.broadcast %cst_44 : f32 to vector<32x128xf32>
    %129 = arith.select %127, %128, %125 : vector<32x128xi1>, vector<32x128xf32>
    %130 = arith.addf %119, %129 : vector<32x128xf32>
    %131 = vector.extract_strided_slice %122 {offsets = [1, 0], sizes = [31, 128], strides = [1, 1]} : vector<32x128xf32> to vector<31x128xf32>
    %cst_45 = arith.constant 0.000000e+00 : f32
    %132 = vector.broadcast %cst_45 : f32 to vector<1x128xf32>
    %133 = tpu.concatenate %131, %132 in 0 : vector<31x128xf32>, vector<1x128xf32> -> vector<32x128xf32>
    %cst_46 = arith.constant 0.000000e+00 : f32
    %134 = vector.shape_cast %36 : vector<32x1xi1> to vector<32x1xi1>
    %135 = vector.broadcast %134 : vector<32x1xi1> to vector<32x128xi1>
    %136 = vector.broadcast %cst_46 : f32 to vector<32x128xf32>
    %137 = arith.select %135, %136, %133 : vector<32x128xi1>, vector<32x128xf32>
    %138 = arith.addf %130, %137 : vector<32x128xf32>
    %cst_47 = arith.constant dense<0.000000e+00> : vector<128xf32>
    %139 = vector.multi_reduction <add>, %138, %cst_47 [0] : vector<32x128xf32> to vector<128xf32>
    %140 = vector.shape_cast %139 : vector<128xf32> to vector<1x128xf32>
    %141 = vector.extract_strided_slice %140 {offsets = [0, 8], sizes = [1, 120], strides = [1, 1]} : vector<1x128xf32> to vector<1x120xf32>
    %142 = vector.extract_strided_slice %140 {offsets = [0, 0], sizes = [1, 8], strides = [1, 1]} : vector<1x128xf32> to vector<1x8xf32>
    %143 = tpu.concatenate %141, %142 in 1 : vector<1x120xf32>, vector<1x8xf32> -> vector<1x128xf32>
    %144 = arith.addf %140, %143 : vector<1x128xf32>
    %145 = vector.extract_strided_slice %144 {offsets = [0, 16], sizes = [1, 112], strides = [1, 1]} : vector<1x128xf32> to vector<1x112xf32>
    %146 = vector.extract_strided_slice %144 {offsets = [0, 0], sizes = [1, 16], strides = [1, 1]} : vector<1x128xf32> to vector<1x16xf32>
    %147 = tpu.concatenate %145, %146 in 1 : vector<1x112xf32>, vector<1x16xf32> -> vector<1x128xf32>
    %148 = arith.addf %144, %147 : vector<1x128xf32>
    %149 = vector.extract_strided_slice %148 {offsets = [0, 32], sizes = [1, 96], strides = [1, 1]} : vector<1x128xf32> to vector<1x96xf32>
    %150 = vector.extract_strided_slice %148 {offsets = [0, 0], sizes = [1, 32], strides = [1, 1]} : vector<1x128xf32> to vector<1x32xf32>
    %151 = tpu.concatenate %149, %150 in 1 : vector<1x96xf32>, vector<1x32xf32> -> vector<1x128xf32>
    %152 = arith.addf %148, %151 : vector<1x128xf32>
    %153 = vector.extract_strided_slice %152 {offsets = [0, 64], sizes = [1, 64], strides = [1, 1]} : vector<1x128xf32> to vector<1x64xf32>
    %154 = vector.extract_strided_slice %152 {offsets = [0, 0], sizes = [1, 64], strides = [1, 1]} : vector<1x128xf32> to vector<1x64xf32>
    %155 = tpu.concatenate %153, %154 in 1 : vector<1x64xf32>, vector<1x64xf32> -> vector<1x128xf32>
    %156 = arith.addf %152, %155 : vector<1x128xf32>
    %cst_48 = arith.constant 0.001953125 : f32
    %157 = vector.broadcast %cst_48 : f32 to vector<1x128xf32>
    %158 = arith.mulf %156, %157 : vector<1x128xf32>
    %159 = vector.broadcast %158 : vector<1x128xf32> to vector<32x128xf32>
    %160 = arith.subf %138, %159 : vector<32x128xf32>
    %161 = arith.mulf %160, %160 : vector<32x128xf32>
    %cst_49 = arith.constant dense<0.000000e+00> : vector<128xf32>
    %162 = vector.multi_reduction <add>, %161, %cst_49 [0] : vector<32x128xf32> to vector<128xf32>
    %163 = vector.shape_cast %162 : vector<128xf32> to vector<1x128xf32>
    %164 = vector.extract_strided_slice %163 {offsets = [0, 8], sizes = [1, 120], strides = [1, 1]} : vector<1x128xf32> to vector<1x120xf32>
    %165 = vector.extract_strided_slice %163 {offsets = [0, 0], sizes = [1, 8], strides = [1, 1]} : vector<1x128xf32> to vector<1x8xf32>
    %166 = tpu.concatenate %164, %165 in 1 : vector<1x120xf32>, vector<1x8xf32> -> vector<1x128xf32>
    %167 = arith.addf %163, %166 : vector<1x128xf32>
    %168 = vector.extract_strided_slice %167 {offsets = [0, 16], sizes = [1, 112], strides = [1, 1]} : vector<1x128xf32> to vector<1x112xf32>
    %169 = vector.extract_strided_slice %167 {offsets = [0, 0], sizes = [1, 16], strides = [1, 1]} : vector<1x128xf32> to vector<1x16xf32>
    %170 = tpu.concatenate %168, %169 in 1 : vector<1x112xf32>, vector<1x16xf32> -> vector<1x128xf32>
    %171 = arith.addf %167, %170 : vector<1x128xf32>
    %172 = vector.extract_strided_slice %171 {offsets = [0, 32], sizes = [1, 96], strides = [1, 1]} : vector<1x128xf32> to vector<1x96xf32>
    %173 = vector.extract_strided_slice %171 {offsets = [0, 0], sizes = [1, 32], strides = [1, 1]} : vector<1x128xf32> to vector<1x32xf32>
    %174 = tpu.concatenate %172, %173 in 1 : vector<1x96xf32>, vector<1x32xf32> -> vector<1x128xf32>
    %175 = arith.addf %171, %174 : vector<1x128xf32>
    %176 = vector.extract_strided_slice %175 {offsets = [0, 64], sizes = [1, 64], strides = [1, 1]} : vector<1x128xf32> to vector<1x64xf32>
    %177 = vector.extract_strided_slice %175 {offsets = [0, 0], sizes = [1, 64], strides = [1, 1]} : vector<1x128xf32> to vector<1x64xf32>
    %178 = tpu.concatenate %176, %177 in 1 : vector<1x64xf32>, vector<1x64xf32> -> vector<1x128xf32>
    %179 = arith.addf %175, %178 : vector<1x128xf32>
    %cst_50 = arith.constant 0.001953125 : f32
    %180 = vector.broadcast %cst_50 : f32 to vector<1x128xf32>
    %181 = arith.mulf %179, %180 : vector<1x128xf32>
    %cst_51 = arith.constant 9.99999974E-6 : f32
    %182 = vector.broadcast %cst_51 : f32 to vector<1x128xf32>
    %183 = arith.addf %181, %182 : vector<1x128xf32>
    %184 = math.rsqrt %183 : vector<1x128xf32>
    %185 = vector.broadcast %184 : vector<1x128xf32> to vector<32x128xf32>
    %186 = arith.mulf %160, %185 : vector<32x128xf32>
    %187 = arith.negf %186 : vector<32x128xf32>
    %188 = math.exp %187 : vector<32x128xf32>
    %cst_52 = arith.constant 1.000000e+00 : f32
    %189 = vector.broadcast %cst_52 : f32 to vector<32x128xf32>
    %190 = arith.addf %189, %188 : vector<32x128xf32>
    %191 = arith.divf %189, %190 : vector<32x128xf32>
    %192 = arith.subf %110, %111 : vector<32x128xf32>
    %193 = arith.mulf %192, %191 : vector<32x128xf32>
    %194 = arith.addf %111, %193 : vector<32x128xf32>
    %cst_53 = arith.constant 1.000000e+00 : f32
    %195 = vector.broadcast %cst_53 : f32 to vector<32x128xf32>
    %196 = arith.cmpf ogt, %194, %195 : vector<32x128xf32>
    %197 = arith.extui %196 : vector<32x128xi1> to vector<32x128xi32>
    %198 = arith.sitofp %197 : vector<32x128xi32> to vector<32x128xf32>
    %cst_54 = arith.constant 1.000000e+00 : f32
    %199 = vector.broadcast %cst_54 : f32 to vector<32x128xf32>
    %200 = arith.subf %199, %198 : vector<32x128xf32>
    %201 = arith.mulf %200, %194 : vector<32x128xf32>
    %c0_55 = arith.constant 0 : index
    %c0_56 = arith.constant 0 : index
    %202 = vector.load %arg14[%c0_55, %c0_56] : memref<32x128xf32, #tpu.memory_space<vmem>>, vector<32x128xf32>
    tpu.vector_store %arg14[%c0_55, %c0_56], %201 {strides = array<i32>} : memref<32x128xf32, #tpu.memory_space<vmem>>, vector<32x128xf32>,
    %203 = arith.truncf %198 : vector<32x128xf32> to vector<32x128xbf16>
    %c0_57 = arith.constant 0 : index
    %c0_58 = arith.constant 0 : index
    %204 = vector.load %arg18[%c0_57, %c0_58] : memref<32x128xbf16, #tpu.memory_space<vmem>>, vector<32x128xbf16>
    tpu.vector_store %arg18[%c0_57, %c0_58], %203 {strides = array<i32>} : memref<32x128xbf16, #tpu.memory_space<vmem>>, vector<32x128xbf16>,
    %cst_59 = arith.constant dense<0.000000e+00> : vector<128xf32>
    %205 = vector.multi_reduction <add>, %198, %cst_59 [0] : vector<32x128xf32> to vector<128xf32>
    %206 = vector.shape_cast %205 : vector<128xf32> to vector<1x128xf32>
    %cst_60 = arith.constant dense<0.000000e+00> : vector<1xf32>
    %207 = vector.multi_reduction <add>, %206, %cst_60 [1] : vector<1x128xf32> to vector<1xf32>
    %208 = vector.shape_cast %207 : vector<1xf32> to vector<1x1xf32>
    %c0_61 = arith.constant 0 : index
    %c0_62 = arith.constant 0 : index
    %c0_63 = arith.constant 0 : index
    %209 = vector.load %arg3[%c0_61, %c0_62, %c0_63] : memref<3x128x64xbf16, #tpu.memory_space<vmem>>, vector<1x128x64xbf16>
    %210 = vector.shape_cast %209 : vector<1x128x64xbf16> to vector<128x64xbf16>
    %cst_64 = arith.constant dense<0.000000e+00> : vector<32x64xf32>
    %211 = tpu.matmul %203, %210, %cst_64 {dimension_numbers = #tpu.dot_dimension_numbers<[1], [0], [0], [1], [0, 0, 1, 1], [], []>} : vector<32x128xbf16>, vector<128x64xbf16>, vector<32x64xf32> -> vector<32x64xf32>
    %c1_65 = arith.constant 1 : index
    %c0_66 = arith.constant 0 : index
    %c0_67 = arith.constant 0 : index
    %212 = vector.load %arg3[%c1_65, %c0_66, %c0_67] : memref<3x128x64xbf16, #tpu.memory_space<vmem>>, vector<1x128x64xbf16>
    %213 = vector.shape_cast %212 : vector<1x128x64xbf16> to vector<128x64xbf16>
    %cst_68 = arith.constant dense<0.000000e+00> : vector<32x64xf32>
    %214 = tpu.matmul %203, %213, %cst_68 {dimension_numbers = #tpu.dot_dimension_numbers<[1], [0], [0], [1], [0, 0, 1, 1], [], []>} : vector<32x128xbf16>, vector<128x64xbf16>, vector<32x64xf32> -> vector<32x64xf32>
    %c2_69 = arith.constant 2 : index
    %c0_70 = arith.constant 0 : index
    %c0_71 = arith.constant 0 : index
    %215 = vector.load %arg3[%c2_69, %c0_70, %c0_71] : memref<3x128x64xbf16, #tpu.memory_space<vmem>>, vector<1x128x64xbf16>
    %216 = vector.shape_cast %215 : vector<1x128x64xbf16> to vector<128x64xbf16>
    %cst_72 = arith.constant dense<0.000000e+00> : vector<32x64xf32>
    %217 = tpu.matmul %203, %216, %cst_72 {dimension_numbers = #tpu.dot_dimension_numbers<[1], [0], [0], [1], [0, 0, 1, 1], [], []>} : vector<32x128xbf16>, vector<128x64xbf16>, vector<32x64xf32> -> vector<32x64xf32>
    %cst_73 = arith.constant 0.000000e+00 : f32
    %218 = vector.broadcast %cst_73 : f32 to vector<1x64xf32>
    %219 = vector.extract_strided_slice %211 {offsets = [0, 0], sizes = [31, 64], strides = [1, 1]} : vector<32x64xf32> to vector<31x64xf32>
    %220 = tpu.concatenate %218, %219 in 0 : vector<1x64xf32>, vector<31x64xf32> -> vector<32x64xf32>
    %cst_74 = arith.constant 0.000000e+00 : f32
    %221 = vector.shape_cast %18 : vector<32x1xi1> to vector<32x1xi1>
    %222 = vector.broadcast %221 : vector<32x1xi1> to vector<32x64xi1>
    %223 = vector.broadcast %cst_74 : f32 to vector<32x64xf32>
    %224 = arith.select %222, %223, %220 : vector<32x64xi1>, vector<32x64xf32>
    %225 = arith.addf %214, %224 : vector<32x64xf32>
    %226 = vector.extract_strided_slice %217 {offsets = [1, 0], sizes = [31, 64], strides = [1, 1]} : vector<32x64xf32> to vector<31x64xf32>
    %cst_75 = arith.constant 0.000000e+00 : f32
    %227 = vector.broadcast %cst_75 : f32 to vector<1x64xf32>
    %228 = tpu.concatenate %226, %227 in 0 : vector<31x64xf32>, vector<1x64xf32> -> vector<32x64xf32>
    %cst_76 = arith.constant 0.000000e+00 : f32
    %229 = vector.shape_cast %36 : vector<32x1xi1> to vector<32x1xi1>
    %230 = vector.broadcast %229 : vector<32x1xi1> to vector<32x64xi1>
    %231 = vector.broadcast %cst_76 : f32 to vector<32x64xf32>
    %232 = arith.select %230, %231, %228 : vector<32x64xi1>, vector<32x64xf32>
    %233 = arith.addf %225, %232 : vector<32x64xf32>
    %cst_77 = arith.constant dense<0.000000e+00> : vector<64xf32>
    %234 = vector.multi_reduction <add>, %233, %cst_77 [0] : vector<32x64xf32> to vector<64xf32>
    %235 = vector.shape_cast %234 : vector<64xf32> to vector<1x64xf32>
    %236 = vector.extract_strided_slice %235 {offsets = [0, 4], sizes = [1, 60], strides = [1, 1]} : vector<1x64xf32> to vector<1x60xf32>
    %237 = vector.extract_strided_slice %235 {offsets = [0, 0], sizes = [1, 4], strides = [1, 1]} : vector<1x64xf32> to vector<1x4xf32>
    %238 = tpu.concatenate %236, %237 in 1 : vector<1x60xf32>, vector<1x4xf32> -> vector<1x64xf32>
    %239 = arith.addf %235, %238 : vector<1x64xf32>
    %240 = vector.extract_strided_slice %239 {offsets = [0, 8], sizes = [1, 56], strides = [1, 1]} : vector<1x64xf32> to vector<1x56xf32>
    %241 = vector.extract_strided_slice %239 {offsets = [0, 0], sizes = [1, 8], strides = [1, 1]} : vector<1x64xf32> to vector<1x8xf32>
    %242 = tpu.concatenate %240, %241 in 1 : vector<1x56xf32>, vector<1x8xf32> -> vector<1x64xf32>
    %243 = arith.addf %239, %242 : vector<1x64xf32>
    %244 = vector.extract_strided_slice %243 {offsets = [0, 16], sizes = [1, 48], strides = [1, 1]} : vector<1x64xf32> to vector<1x48xf32>
    %245 = vector.extract_strided_slice %243 {offsets = [0, 0], sizes = [1, 16], strides = [1, 1]} : vector<1x64xf32> to vector<1x16xf32>
    %246 = tpu.concatenate %244, %245 in 1 : vector<1x48xf32>, vector<1x16xf32> -> vector<1x64xf32>
    %247 = arith.addf %243, %246 : vector<1x64xf32>
    %248 = vector.extract_strided_slice %247 {offsets = [0, 32], sizes = [1, 32], strides = [1, 1]} : vector<1x64xf32> to vector<1x32xf32>
    %249 = vector.extract_strided_slice %247 {offsets = [0, 0], sizes = [1, 32], strides = [1, 1]} : vector<1x64xf32> to vector<1x32xf32>
    %250 = tpu.concatenate %248, %249 in 1 : vector<1x32xf32>, vector<1x32xf32> -> vector<1x64xf32>
    %251 = arith.addf %247, %250 : vector<1x64xf32>
    %cst_78 = arith.constant 0.001953125 : f32
    %252 = vector.broadcast %cst_78 : f32 to vector<1x64xf32>
    %253 = arith.mulf %251, %252 : vector<1x64xf32>
    %254 = vector.broadcast %253 : vector<1x64xf32> to vector<32x64xf32>
    %255 = arith.subf %233, %254 : vector<32x64xf32>
    %256 = arith.mulf %255, %255 : vector<32x64xf32>
    %cst_79 = arith.constant dense<0.000000e+00> : vector<64xf32>
    %257 = vector.multi_reduction <add>, %256, %cst_79 [0] : vector<32x64xf32> to vector<64xf32>
    %258 = vector.shape_cast %257 : vector<64xf32> to vector<1x64xf32>
    %259 = vector.extract_strided_slice %258 {offsets = [0, 4], sizes = [1, 60], strides = [1, 1]} : vector<1x64xf32> to vector<1x60xf32>
    %260 = vector.extract_strided_slice %258 {offsets = [0, 0], sizes = [1, 4], strides = [1, 1]} : vector<1x64xf32> to vector<1x4xf32>
    %261 = tpu.concatenate %259, %260 in 1 : vector<1x60xf32>, vector<1x4xf32> -> vector<1x64xf32>
    %262 = arith.addf %258, %261 : vector<1x64xf32>
    %263 = vector.extract_strided_slice %262 {offsets = [0, 8], sizes = [1, 56], strides = [1, 1]} : vector<1x64xf32> to vector<1x56xf32>
    %264 = vector.extract_strided_slice %262 {offsets = [0, 0], sizes = [1, 8], strides = [1, 1]} : vector<1x64xf32> to vector<1x8xf32>
    %265 = tpu.concatenate %263, %264 in 1 : vector<1x56xf32>, vector<1x8xf32> -> vector<1x64xf32>
    %266 = arith.addf %262, %265 : vector<1x64xf32>
    %267 = vector.extract_strided_slice %266 {offsets = [0, 16], sizes = [1, 48], strides = [1, 1]} : vector<1x64xf32> to vector<1x48xf32>
    %268 = vector.extract_strided_slice %266 {offsets = [0, 0], sizes = [1, 16], strides = [1, 1]} : vector<1x64xf32> to vector<1x16xf32>
    %269 = tpu.concatenate %267, %268 in 1 : vector<1x48xf32>, vector<1x16xf32> -> vector<1x64xf32>
    %270 = arith.addf %266, %269 : vector<1x64xf32>
    %271 = vector.extract_strided_slice %270 {offsets = [0, 32], sizes = [1, 32], strides = [1, 1]} : vector<1x64xf32> to vector<1x32xf32>
    %272 = vector.extract_strided_slice %270 {offsets = [0, 0], sizes = [1, 32], strides = [1, 1]} : vector<1x64xf32> to vector<1x32xf32>
    %273 = tpu.concatenate %271, %272 in 1 : vector<1x32xf32>, vector<1x32xf32> -> vector<1x64xf32>
    %274 = arith.addf %270, %273 : vector<1x64xf32>
    %cst_80 = arith.constant 0.001953125 : f32
    %275 = vector.broadcast %cst_80 : f32 to vector<1x64xf32>
    %276 = arith.mulf %274, %275 : vector<1x64xf32>
    %cst_81 = arith.constant 9.99999974E-6 : f32
    %277 = vector.broadcast %cst_81 : f32 to vector<1x64xf32>
    %278 = arith.addf %276, %277 : vector<1x64xf32>
    %279 = math.rsqrt %278 : vector<1x64xf32>
    %280 = vector.broadcast %279 : vector<1x64xf32> to vector<32x64xf32>
    %281 = arith.mulf %255, %280 : vector<32x64xf32>
    %c0_82 = arith.constant 0 : index
    %c0_83 = arith.constant 0 : index
    %282 = vector.load %arg11[%c0_82, %c0_83] : memref<32x64xf32, #tpu.memory_space<vmem>>, vector<32x64xf32>
    %283 = arith.addf %281, %282 : vector<32x64xf32>
    %284 = arith.truncf %283 : vector<32x64xf32> to vector<32x64xbf16>
    %c0_84 = arith.constant 0 : index
    %c0_85 = arith.constant 0 : index
    %c0_86 = arith.constant 0 : index
    %285 = vector.load %arg4[%c0_84, %c0_85, %c0_86] : memref<3x64x64xbf16, #tpu.memory_space<vmem>>, vector<1x64x64xbf16>
    %286 = vector.shape_cast %285 : vector<1x64x64xbf16> to vector<64x64xbf16>
    %cst_87 = arith.constant dense<0.000000e+00> : vector<32x64xf32>
    %287 = tpu.matmul %284, %286, %cst_87 {dimension_numbers = #tpu.dot_dimension_numbers<[1], [0], [0], [1], [0, 0, 1, 1], [], []>} : vector<32x64xbf16>, vector<64x64xbf16>, vector<32x64xf32> -> vector<32x64xf32>
    %c1_88 = arith.constant 1 : index
    %c0_89 = arith.constant 0 : index
    %c0_90 = arith.constant 0 : index
    %288 = vector.load %arg4[%c1_88, %c0_89, %c0_90] : memref<3x64x64xbf16, #tpu.memory_space<vmem>>, vector<1x64x64xbf16>
    %289 = vector.shape_cast %288 : vector<1x64x64xbf16> to vector<64x64xbf16>
    %cst_91 = arith.constant dense<0.000000e+00> : vector<32x64xf32>
    %290 = tpu.matmul %284, %289, %cst_91 {dimension_numbers = #tpu.dot_dimension_numbers<[1], [0], [0], [1], [0, 0, 1, 1], [], []>} : vector<32x64xbf16>, vector<64x64xbf16>, vector<32x64xf32> -> vector<32x64xf32>
    %c2_92 = arith.constant 2 : index
    %c0_93 = arith.constant 0 : index
    %c0_94 = arith.constant 0 : index
    %291 = vector.load %arg4[%c2_92, %c0_93, %c0_94] : memref<3x64x64xbf16, #tpu.memory_space<vmem>>, vector<1x64x64xbf16>
    %292 = vector.shape_cast %291 : vector<1x64x64xbf16> to vector<64x64xbf16>
    %cst_95 = arith.constant dense<0.000000e+00> : vector<32x64xf32>
    %293 = tpu.matmul %284, %292, %cst_95 {dimension_numbers = #tpu.dot_dimension_numbers<[1], [0], [0], [1], [0, 0, 1, 1], [], []>} : vector<32x64xbf16>, vector<64x64xbf16>, vector<32x64xf32> -> vector<32x64xf32>
    %cst_96 = arith.constant 0.000000e+00 : f32
    %294 = vector.broadcast %cst_96 : f32 to vector<1x64xf32>
    %295 = vector.extract_strided_slice %287 {offsets = [0, 0], sizes = [31, 64], strides = [1, 1]} : vector<32x64xf32> to vector<31x64xf32>
    %296 = tpu.concatenate %294, %295 in 0 : vector<1x64xf32>, vector<31x64xf32> -> vector<32x64xf32>
    %cst_97 = arith.constant 0.000000e+00 : f32
    %297 = vector.shape_cast %18 : vector<32x1xi1> to vector<32x1xi1>
    %298 = vector.broadcast %297 : vector<32x1xi1> to vector<32x64xi1>
    %299 = vector.broadcast %cst_97 : f32 to vector<32x64xf32>
    %300 = arith.select %298, %299, %296 : vector<32x64xi1>, vector<32x64xf32>
    %301 = arith.addf %290, %300 : vector<32x64xf32>
    %302 = vector.extract_strided_slice %293 {offsets = [1, 0], sizes = [31, 64], strides = [1, 1]} : vector<32x64xf32> to vector<31x64xf32>
    %cst_98 = arith.constant 0.000000e+00 : f32
    %303 = vector.broadcast %cst_98 : f32 to vector<1x64xf32>
    %304 = tpu.concatenate %302, %303 in 0 : vector<31x64xf32>, vector<1x64xf32> -> vector<32x64xf32>
    %cst_99 = arith.constant 0.000000e+00 : f32
    %305 = vector.shape_cast %36 : vector<32x1xi1> to vector<32x1xi1>
    %306 = vector.broadcast %305 : vector<32x1xi1> to vector<32x64xi1>
    %307 = vector.broadcast %cst_99 : f32 to vector<32x64xf32>
    %308 = arith.select %306, %307, %304 : vector<32x64xi1>, vector<32x64xf32>
    %309 = arith.addf %301, %308 : vector<32x64xf32>
    %cst_100 = arith.constant dense<0.000000e+00> : vector<64xf32>
    %310 = vector.multi_reduction <add>, %309, %cst_100 [0] : vector<32x64xf32> to vector<64xf32>
    %311 = vector.shape_cast %310 : vector<64xf32> to vector<1x64xf32>
    %312 = vector.extract_strided_slice %311 {offsets = [0, 4], sizes = [1, 60], strides = [1, 1]} : vector<1x64xf32> to vector<1x60xf32>
    %313 = vector.extract_strided_slice %311 {offsets = [0, 0], sizes = [1, 4], strides = [1, 1]} : vector<1x64xf32> to vector<1x4xf32>
    %314 = tpu.concatenate %312, %313 in 1 : vector<1x60xf32>, vector<1x4xf32> -> vector<1x64xf32>
    %315 = arith.addf %311, %314 : vector<1x64xf32>
    %316 = vector.extract_strided_slice %315 {offsets = [0, 8], sizes = [1, 56], strides = [1, 1]} : vector<1x64xf32> to vector<1x56xf32>
    %317 = vector.extract_strided_slice %315 {offsets = [0, 0], sizes = [1, 8], strides = [1, 1]} : vector<1x64xf32> to vector<1x8xf32>
    %318 = tpu.concatenate %316, %317 in 1 : vector<1x56xf32>, vector<1x8xf32> -> vector<1x64xf32>
    %319 = arith.addf %315, %318 : vector<1x64xf32>
    %320 = vector.extract_strided_slice %319 {offsets = [0, 16], sizes = [1, 48], strides = [1, 1]} : vector<1x64xf32> to vector<1x48xf32>
    %321 = vector.extract_strided_slice %319 {offsets = [0, 0], sizes = [1, 16], strides = [1, 1]} : vector<1x64xf32> to vector<1x16xf32>
    %322 = tpu.concatenate %320, %321 in 1 : vector<1x48xf32>, vector<1x16xf32> -> vector<1x64xf32>
    %323 = arith.addf %319, %322 : vector<1x64xf32>
    %324 = vector.extract_strided_slice %323 {offsets = [0, 32], sizes = [1, 32], strides = [1, 1]} : vector<1x64xf32> to vector<1x32xf32>
    %325 = vector.extract_strided_slice %323 {offsets = [0, 0], sizes = [1, 32], strides = [1, 1]} : vector<1x64xf32> to vector<1x32xf32>
    %326 = tpu.concatenate %324, %325 in 1 : vector<1x32xf32>, vector<1x32xf32> -> vector<1x64xf32>
    %327 = arith.addf %323, %326 : vector<1x64xf32>
    %cst_101 = arith.constant 0.001953125 : f32
    %328 = vector.broadcast %cst_101 : f32 to vector<1x64xf32>
    %329 = arith.mulf %327, %328 : vector<1x64xf32>
    %330 = vector.broadcast %329 : vector<1x64xf32> to vector<32x64xf32>
    %331 = arith.subf %309, %330 : vector<32x64xf32>
    %332 = arith.mulf %331, %331 : vector<32x64xf32>
    %cst_102 = arith.constant dense<0.000000e+00> : vector<64xf32>
    %333 = vector.multi_reduction <add>, %332, %cst_102 [0] : vector<32x64xf32> to vector<64xf32>
    %334 = vector.shape_cast %333 : vector<64xf32> to vector<1x64xf32>
    %335 = vector.extract_strided_slice %334 {offsets = [0, 4], sizes = [1, 60], strides = [1, 1]} : vector<1x64xf32> to vector<1x60xf32>
    %336 = vector.extract_strided_slice %334 {offsets = [0, 0], sizes = [1, 4], strides = [1, 1]} : vector<1x64xf32> to vector<1x4xf32>
    %337 = tpu.concatenate %335, %336 in 1 : vector<1x60xf32>, vector<1x4xf32> -> vector<1x64xf32>
    %338 = arith.addf %334, %337 : vector<1x64xf32>
    %339 = vector.extract_strided_slice %338 {offsets = [0, 8], sizes = [1, 56], strides = [1, 1]} : vector<1x64xf32> to vector<1x56xf32>
    %340 = vector.extract_strided_slice %338 {offsets = [0, 0], sizes = [1, 8], strides = [1, 1]} : vector<1x64xf32> to vector<1x8xf32>
    %341 = tpu.concatenate %339, %340 in 1 : vector<1x56xf32>, vector<1x8xf32> -> vector<1x64xf32>
    %342 = arith.addf %338, %341 : vector<1x64xf32>
    %343 = vector.extract_strided_slice %342 {offsets = [0, 16], sizes = [1, 48], strides = [1, 1]} : vector<1x64xf32> to vector<1x48xf32>
    %344 = vector.extract_strided_slice %342 {offsets = [0, 0], sizes = [1, 16], strides = [1, 1]} : vector<1x64xf32> to vector<1x16xf32>
    %345 = tpu.concatenate %343, %344 in 1 : vector<1x48xf32>, vector<1x16xf32> -> vector<1x64xf32>
    %346 = arith.addf %342, %345 : vector<1x64xf32>
    %347 = vector.extract_strided_slice %346 {offsets = [0, 32], sizes = [1, 32], strides = [1, 1]} : vector<1x64xf32> to vector<1x32xf32>
    %348 = vector.extract_strided_slice %346 {offsets = [0, 0], sizes = [1, 32], strides = [1, 1]} : vector<1x64xf32> to vector<1x32xf32>
    %349 = tpu.concatenate %347, %348 in 1 : vector<1x32xf32>, vector<1x32xf32> -> vector<1x64xf32>
    %350 = arith.addf %346, %349 : vector<1x64xf32>
    %cst_103 = arith.constant 0.001953125 : f32
    %351 = vector.broadcast %cst_103 : f32 to vector<1x64xf32>
    %352 = arith.mulf %350, %351 : vector<1x64xf32>
    %cst_104 = arith.constant 9.99999974E-6 : f32
    %353 = vector.broadcast %cst_104 : f32 to vector<1x64xf32>
    %354 = arith.addf %352, %353 : vector<1x64xf32>
    %355 = math.rsqrt %354 : vector<1x64xf32>
    %356 = vector.broadcast %355 : vector<1x64xf32> to vector<32x64xf32>
    %357 = arith.mulf %331, %356 : vector<32x64xf32>
    %358 = arith.negf %357 : vector<32x64xf32>
    %359 = math.exp %358 : vector<32x64xf32>
    %cst_105 = arith.constant 1.000000e+00 : f32
    %360 = vector.broadcast %cst_105 : f32 to vector<32x64xf32>
    %361 = arith.addf %360, %359 : vector<32x64xf32>
    %362 = arith.divf %360, %361 : vector<32x64xf32>
    %363 = arith.subf %281, %282 : vector<32x64xf32>
    %364 = arith.mulf %363, %362 : vector<32x64xf32>
    %365 = arith.addf %282, %364 : vector<32x64xf32>
    %cst_106 = arith.constant 1.000000e+00 : f32
    %366 = vector.broadcast %cst_106 : f32 to vector<32x64xf32>
    %367 = arith.cmpf ogt, %365, %366 : vector<32x64xf32>
    %368 = arith.extui %367 : vector<32x64xi1> to vector<32x64xi32>
    %369 = arith.sitofp %368 : vector<32x64xi32> to vector<32x64xf32>
    %cst_107 = arith.constant 1.000000e+00 : f32
    %370 = vector.broadcast %cst_107 : f32 to vector<32x64xf32>
    %371 = arith.subf %370, %369 : vector<32x64xf32>
    %372 = arith.mulf %371, %365 : vector<32x64xf32>
    %c0_108 = arith.constant 0 : index
    %c0_109 = arith.constant 0 : index
    %373 = vector.load %arg15[%c0_108, %c0_109] : memref<32x64xf32, #tpu.memory_space<vmem>>, vector<32x64xf32>
    tpu.vector_store %arg15[%c0_108, %c0_109], %372 {strides = array<i32>} : memref<32x64xf32, #tpu.memory_space<vmem>>, vector<32x64xf32>,
    %374 = arith.truncf %369 : vector<32x64xf32> to vector<32x64xbf16>
    %c0_110 = arith.constant 0 : index
    %c0_111 = arith.constant 0 : index
    %375 = vector.load %arg19[%c0_110, %c0_111] : memref<32x64xbf16, #tpu.memory_space<vmem>>, vector<32x64xbf16>
    tpu.vector_store %arg19[%c0_110, %c0_111], %374 {strides = array<i32>} : memref<32x64xbf16, #tpu.memory_space<vmem>>, vector<32x64xbf16>,
    %cst_112 = arith.constant dense<0.000000e+00> : vector<64xf32>
    %376 = vector.multi_reduction <add>, %369, %cst_112 [0] : vector<32x64xf32> to vector<64xf32>
    %377 = vector.shape_cast %376 : vector<64xf32> to vector<1x64xf32>
    %cst_113 = arith.constant dense<0.000000e+00> : vector<1xf32>
    %378 = vector.multi_reduction <add>, %377, %cst_113 [1] : vector<1x64xf32> to vector<1xf32>
    %379 = vector.shape_cast %378 : vector<1xf32> to vector<1x1xf32>
    %c0_114 = arith.constant 0 : index
    %c0_115 = arith.constant 0 : index
    %c0_116 = arith.constant 0 : index
    %380 = vector.load %arg5[%c0_114, %c0_115, %c0_116] : memref<3x64x64xbf16, #tpu.memory_space<vmem>>, vector<1x64x64xbf16>
    %381 = vector.shape_cast %380 : vector<1x64x64xbf16> to vector<64x64xbf16>
    %cst_117 = arith.constant dense<0.000000e+00> : vector<32x64xf32>
    %382 = tpu.matmul %374, %381, %cst_117 {dimension_numbers = #tpu.dot_dimension_numbers<[1], [0], [0], [1], [0, 0, 1, 1], [], []>} : vector<32x64xbf16>, vector<64x64xbf16>, vector<32x64xf32> -> vector<32x64xf32>
    %c1_118 = arith.constant 1 : index
    %c0_119 = arith.constant 0 : index
    %c0_120 = arith.constant 0 : index
    %383 = vector.load %arg5[%c1_118, %c0_119, %c0_120] : memref<3x64x64xbf16, #tpu.memory_space<vmem>>, vector<1x64x64xbf16>
    %384 = vector.shape_cast %383 : vector<1x64x64xbf16> to vector<64x64xbf16>
    %cst_121 = arith.constant dense<0.000000e+00> : vector<32x64xf32>
    %385 = tpu.matmul %374, %384, %cst_121 {dimension_numbers = #tpu.dot_dimension_numbers<[1], [0], [0], [1], [0, 0, 1, 1], [], []>} : vector<32x64xbf16>, vector<64x64xbf16>, vector<32x64xf32> -> vector<32x64xf32>
    %c2_122 = arith.constant 2 : index
    %c0_123 = arith.constant 0 : index
    %c0_124 = arith.constant 0 : index
    %386 = vector.load %arg5[%c2_122, %c0_123, %c0_124] : memref<3x64x64xbf16, #tpu.memory_space<vmem>>, vector<1x64x64xbf16>
    %387 = vector.shape_cast %386 : vector<1x64x64xbf16> to vector<64x64xbf16>
    %cst_125 = arith.constant dense<0.000000e+00> : vector<32x64xf32>
    %388 = tpu.matmul %374, %387, %cst_125 {dimension_numbers = #tpu.dot_dimension_numbers<[1], [0], [0], [1], [0, 0, 1, 1], [], []>} : vector<32x64xbf16>, vector<64x64xbf16>, vector<32x64xf32> -> vector<32x64xf32>
    %cst_126 = arith.constant 0.000000e+00 : f32
    %389 = vector.broadcast %cst_126 : f32 to vector<1x64xf32>
    %390 = vector.extract_strided_slice %382 {offsets = [0, 0], sizes = [31, 64], strides = [1, 1]} : vector<32x64xf32> to vector<31x64xf32>
    %391 = tpu.concatenate %389, %390 in 0 : vector<1x64xf32>, vector<31x64xf32> -> vector<32x64xf32>
    %cst_127 = arith.constant 0.000000e+00 : f32
    %392 = vector.shape_cast %18 : vector<32x1xi1> to vector<32x1xi1>
    %393 = vector.broadcast %392 : vector<32x1xi1> to vector<32x64xi1>
    %394 = vector.broadcast %cst_127 : f32 to vector<32x64xf32>
    %395 = arith.select %393, %394, %391 : vector<32x64xi1>, vector<32x64xf32>
    %396 = arith.addf %385, %395 : vector<32x64xf32>
    %397 = vector.extract_strided_slice %388 {offsets = [1, 0], sizes = [31, 64], strides = [1, 1]} : vector<32x64xf32> to vector<31x64xf32>
    %cst_128 = arith.constant 0.000000e+00 : f32
    %398 = vector.broadcast %cst_128 : f32 to vector<1x64xf32>
    %399 = tpu.concatenate %397, %398 in 0 : vector<31x64xf32>, vector<1x64xf32> -> vector<32x64xf32>
    %cst_129 = arith.constant 0.000000e+00 : f32
    %400 = vector.shape_cast %36 : vector<32x1xi1> to vector<32x1xi1>
    %401 = vector.broadcast %400 : vector<32x1xi1> to vector<32x64xi1>
    %402 = vector.broadcast %cst_129 : f32 to vector<32x64xf32>
    %403 = arith.select %401, %402, %399 : vector<32x64xi1>, vector<32x64xf32>
    %404 = arith.addf %396, %403 : vector<32x64xf32>
    %cst_130 = arith.constant dense<0.000000e+00> : vector<64xf32>
    %405 = vector.multi_reduction <add>, %404, %cst_130 [0] : vector<32x64xf32> to vector<64xf32>
    %406 = vector.shape_cast %405 : vector<64xf32> to vector<1x64xf32>
    %407 = vector.extract_strided_slice %406 {offsets = [0, 4], sizes = [1, 60], strides = [1, 1]} : vector<1x64xf32> to vector<1x60xf32>
    %408 = vector.extract_strided_slice %406 {offsets = [0, 0], sizes = [1, 4], strides = [1, 1]} : vector<1x64xf32> to vector<1x4xf32>
    %409 = tpu.concatenate %407, %408 in 1 : vector<1x60xf32>, vector<1x4xf32> -> vector<1x64xf32>
    %410 = arith.addf %406, %409 : vector<1x64xf32>
    %411 = vector.extract_strided_slice %410 {offsets = [0, 8], sizes = [1, 56], strides = [1, 1]} : vector<1x64xf32> to vector<1x56xf32>
    %412 = vector.extract_strided_slice %410 {offsets = [0, 0], sizes = [1, 8], strides = [1, 1]} : vector<1x64xf32> to vector<1x8xf32>
    %413 = tpu.concatenate %411, %412 in 1 : vector<1x56xf32>, vector<1x8xf32> -> vector<1x64xf32>
    %414 = arith.addf %410, %413 : vector<1x64xf32>
    %415 = vector.extract_strided_slice %414 {offsets = [0, 16], sizes = [1, 48], strides = [1, 1]} : vector<1x64xf32> to vector<1x48xf32>
    %416 = vector.extract_strided_slice %414 {offsets = [0, 0], sizes = [1, 16], strides = [1, 1]} : vector<1x64xf32> to vector<1x16xf32>
    %417 = tpu.concatenate %415, %416 in 1 : vector<1x48xf32>, vector<1x16xf32> -> vector<1x64xf32>
    %418 = arith.addf %414, %417 : vector<1x64xf32>
    %419 = vector.extract_strided_slice %418 {offsets = [0, 32], sizes = [1, 32], strides = [1, 1]} : vector<1x64xf32> to vector<1x32xf32>
    %420 = vector.extract_strided_slice %418 {offsets = [0, 0], sizes = [1, 32], strides = [1, 1]} : vector<1x64xf32> to vector<1x32xf32>
    %421 = tpu.concatenate %419, %420 in 1 : vector<1x32xf32>, vector<1x32xf32> -> vector<1x64xf32>
    %422 = arith.addf %418, %421 : vector<1x64xf32>
    %cst_131 = arith.constant 0.001953125 : f32
    %423 = vector.broadcast %cst_131 : f32 to vector<1x64xf32>
    %424 = arith.mulf %422, %423 : vector<1x64xf32>
    %425 = vector.broadcast %424 : vector<1x64xf32> to vector<32x64xf32>
    %426 = arith.subf %404, %425 : vector<32x64xf32>
    %427 = arith.mulf %426, %426 : vector<32x64xf32>
    %cst_132 = arith.constant dense<0.000000e+00> : vector<64xf32>
    %428 = vector.multi_reduction <add>, %427, %cst_132 [0] : vector<32x64xf32> to vector<64xf32>
    %429 = vector.shape_cast %428 : vector<64xf32> to vector<1x64xf32>
    %430 = vector.extract_strided_slice %429 {offsets = [0, 4], sizes = [1, 60], strides = [1, 1]} : vector<1x64xf32> to vector<1x60xf32>
    %431 = vector.extract_strided_slice %429 {offsets = [0, 0], sizes = [1, 4], strides = [1, 1]} : vector<1x64xf32> to vector<1x4xf32>
    %432 = tpu.concatenate %430, %431 in 1 : vector<1x60xf32>, vector<1x4xf32> -> vector<1x64xf32>
    %433 = arith.addf %429, %432 : vector<1x64xf32>
    %434 = vector.extract_strided_slice %433 {offsets = [0, 8], sizes = [1, 56], strides = [1, 1]} : vector<1x64xf32> to vector<1x56xf32>
    %435 = vector.extract_strided_slice %433 {offsets = [0, 0], sizes = [1, 8], strides = [1, 1]} : vector<1x64xf32> to vector<1x8xf32>
    %436 = tpu.concatenate %434, %435 in 1 : vector<1x56xf32>, vector<1x8xf32> -> vector<1x64xf32>
    %437 = arith.addf %433, %436 : vector<1x64xf32>
    %438 = vector.extract_strided_slice %437 {offsets = [0, 16], sizes = [1, 48], strides = [1, 1]} : vector<1x64xf32> to vector<1x48xf32>
    %439 = vector.extract_strided_slice %437 {offsets = [0, 0], sizes = [1, 16], strides = [1, 1]} : vector<1x64xf32> to vector<1x16xf32>
    %440 = tpu.concatenate %438, %439 in 1 : vector<1x48xf32>, vector<1x16xf32> -> vector<1x64xf32>
    %441 = arith.addf %437, %440 : vector<1x64xf32>
    %442 = vector.extract_strided_slice %441 {offsets = [0, 32], sizes = [1, 32], strides = [1, 1]} : vector<1x64xf32> to vector<1x32xf32>
    %443 = vector.extract_strided_slice %441 {offsets = [0, 0], sizes = [1, 32], strides = [1, 1]} : vector<1x64xf32> to vector<1x32xf32>
    %444 = tpu.concatenate %442, %443 in 1 : vector<1x32xf32>, vector<1x32xf32> -> vector<1x64xf32>
    %445 = arith.addf %441, %444 : vector<1x64xf32>
    %cst_133 = arith.constant 0.001953125 : f32
    %446 = vector.broadcast %cst_133 : f32 to vector<1x64xf32>
    %447 = arith.mulf %445, %446 : vector<1x64xf32>
    %cst_134 = arith.constant 9.99999974E-6 : f32
    %448 = vector.broadcast %cst_134 : f32 to vector<1x64xf32>
    %449 = arith.addf %447, %448 : vector<1x64xf32>
    %450 = math.rsqrt %449 : vector<1x64xf32>
    %451 = vector.broadcast %450 : vector<1x64xf32> to vector<32x64xf32>
    %452 = arith.mulf %426, %451 : vector<32x64xf32>
    %c0_135 = arith.constant 0 : index
    %c0_136 = arith.constant 0 : index
    %453 = vector.load %arg12[%c0_135, %c0_136] : memref<32x64xf32, #tpu.memory_space<vmem>>, vector<32x64xf32>
    %454 = arith.addf %452, %453 : vector<32x64xf32>
    %455 = arith.truncf %454 : vector<32x64xf32> to vector<32x64xbf16>
    %c0_137 = arith.constant 0 : index
    %c0_138 = arith.constant 0 : index
    %c0_139 = arith.constant 0 : index
    %456 = vector.load %arg6[%c0_137, %c0_138, %c0_139] : memref<3x64x64xbf16, #tpu.memory_space<vmem>>, vector<1x64x64xbf16>
    %457 = vector.shape_cast %456 : vector<1x64x64xbf16> to vector<64x64xbf16>
    %cst_140 = arith.constant dense<0.000000e+00> : vector<32x64xf32>
    %458 = tpu.matmul %455, %457, %cst_140 {dimension_numbers = #tpu.dot_dimension_numbers<[1], [0], [0], [1], [0, 0, 1, 1], [], []>} : vector<32x64xbf16>, vector<64x64xbf16>, vector<32x64xf32> -> vector<32x64xf32>
    %c1_141 = arith.constant 1 : index
    %c0_142 = arith.constant 0 : index
    %c0_143 = arith.constant 0 : index
    %459 = vector.load %arg6[%c1_141, %c0_142, %c0_143] : memref<3x64x64xbf16, #tpu.memory_space<vmem>>, vector<1x64x64xbf16>
    %460 = vector.shape_cast %459 : vector<1x64x64xbf16> to vector<64x64xbf16>
    %cst_144 = arith.constant dense<0.000000e+00> : vector<32x64xf32>
    %461 = tpu.matmul %455, %460, %cst_144 {dimension_numbers = #tpu.dot_dimension_numbers<[1], [0], [0], [1], [0, 0, 1, 1], [], []>} : vector<32x64xbf16>, vector<64x64xbf16>, vector<32x64xf32> -> vector<32x64xf32>
    %c2_145 = arith.constant 2 : index
    %c0_146 = arith.constant 0 : index
    %c0_147 = arith.constant 0 : index
    %462 = vector.load %arg6[%c2_145, %c0_146, %c0_147] : memref<3x64x64xbf16, #tpu.memory_space<vmem>>, vector<1x64x64xbf16>
    %463 = vector.shape_cast %462 : vector<1x64x64xbf16> to vector<64x64xbf16>
    %cst_148 = arith.constant dense<0.000000e+00> : vector<32x64xf32>
    %464 = tpu.matmul %455, %463, %cst_148 {dimension_numbers = #tpu.dot_dimension_numbers<[1], [0], [0], [1], [0, 0, 1, 1], [], []>} : vector<32x64xbf16>, vector<64x64xbf16>, vector<32x64xf32> -> vector<32x64xf32>
    %cst_149 = arith.constant 0.000000e+00 : f32
    %465 = vector.broadcast %cst_149 : f32 to vector<1x64xf32>
    %466 = vector.extract_strided_slice %458 {offsets = [0, 0], sizes = [31, 64], strides = [1, 1]} : vector<32x64xf32> to vector<31x64xf32>
    %467 = tpu.concatenate %465, %466 in 0 : vector<1x64xf32>, vector<31x64xf32> -> vector<32x64xf32>
    %cst_150 = arith.constant 0.000000e+00 : f32
    %468 = vector.shape_cast %18 : vector<32x1xi1> to vector<32x1xi1>
    %469 = vector.broadcast %468 : vector<32x1xi1> to vector<32x64xi1>
    %470 = vector.broadcast %cst_150 : f32 to vector<32x64xf32>
    %471 = arith.select %469, %470, %467 : vector<32x64xi1>, vector<32x64xf32>
    %472 = arith.addf %461, %471 : vector<32x64xf32>
    %473 = vector.extract_strided_slice %464 {offsets = [1, 0], sizes = [31, 64], strides = [1, 1]} : vector<32x64xf32> to vector<31x64xf32>
    %cst_151 = arith.constant 0.000000e+00 : f32
    %474 = vector.broadcast %cst_151 : f32 to vector<1x64xf32>
    %475 = tpu.concatenate %473, %474 in 0 : vector<31x64xf32>, vector<1x64xf32> -> vector<32x64xf32>
    %cst_152 = arith.constant 0.000000e+00 : f32
    %476 = vector.shape_cast %36 : vector<32x1xi1> to vector<32x1xi1>
    %477 = vector.broadcast %476 : vector<32x1xi1> to vector<32x64xi1>
    %478 = vector.broadcast %cst_152 : f32 to vector<32x64xf32>
    %479 = arith.select %477, %478, %475 : vector<32x64xi1>, vector<32x64xf32>
    %480 = arith.addf %472, %479 : vector<32x64xf32>
    %cst_153 = arith.constant dense<0.000000e+00> : vector<64xf32>
    %481 = vector.multi_reduction <add>, %480, %cst_153 [0] : vector<32x64xf32> to vector<64xf32>
    %482 = vector.shape_cast %481 : vector<64xf32> to vector<1x64xf32>
    %483 = vector.extract_strided_slice %482 {offsets = [0, 4], sizes = [1, 60], strides = [1, 1]} : vector<1x64xf32> to vector<1x60xf32>
    %484 = vector.extract_strided_slice %482 {offsets = [0, 0], sizes = [1, 4], strides = [1, 1]} : vector<1x64xf32> to vector<1x4xf32>
    %485 = tpu.concatenate %483, %484 in 1 : vector<1x60xf32>, vector<1x4xf32> -> vector<1x64xf32>
    %486 = arith.addf %482, %485 : vector<1x64xf32>
    %487 = vector.extract_strided_slice %486 {offsets = [0, 8], sizes = [1, 56], strides = [1, 1]} : vector<1x64xf32> to vector<1x56xf32>
    %488 = vector.extract_strided_slice %486 {offsets = [0, 0], sizes = [1, 8], strides = [1, 1]} : vector<1x64xf32> to vector<1x8xf32>
    %489 = tpu.concatenate %487, %488 in 1 : vector<1x56xf32>, vector<1x8xf32> -> vector<1x64xf32>
    %490 = arith.addf %486, %489 : vector<1x64xf32>
    %491 = vector.extract_strided_slice %490 {offsets = [0, 16], sizes = [1, 48], strides = [1, 1]} : vector<1x64xf32> to vector<1x48xf32>
    %492 = vector.extract_strided_slice %490 {offsets = [0, 0], sizes = [1, 16], strides = [1, 1]} : vector<1x64xf32> to vector<1x16xf32>
    %493 = tpu.concatenate %491, %492 in 1 : vector<1x48xf32>, vector<1x16xf32> -> vector<1x64xf32>
    %494 = arith.addf %490, %493 : vector<1x64xf32>
    %495 = vector.extract_strided_slice %494 {offsets = [0, 32], sizes = [1, 32], strides = [1, 1]} : vector<1x64xf32> to vector<1x32xf32>
    %496 = vector.extract_strided_slice %494 {offsets = [0, 0], sizes = [1, 32], strides = [1, 1]} : vector<1x64xf32> to vector<1x32xf32>
    %497 = tpu.concatenate %495, %496 in 1 : vector<1x32xf32>, vector<1x32xf32> -> vector<1x64xf32>
    %498 = arith.addf %494, %497 : vector<1x64xf32>
    %cst_154 = arith.constant 0.001953125 : f32
    %499 = vector.broadcast %cst_154 : f32 to vector<1x64xf32>
    %500 = arith.mulf %498, %499 : vector<1x64xf32>
    %501 = vector.broadcast %500 : vector<1x64xf32> to vector<32x64xf32>
    %502 = arith.subf %480, %501 : vector<32x64xf32>
    %503 = arith.mulf %502, %502 : vector<32x64xf32>
    %cst_155 = arith.constant dense<0.000000e+00> : vector<64xf32>
    %504 = vector.multi_reduction <add>, %503, %cst_155 [0] : vector<32x64xf32> to vector<64xf32>
    %505 = vector.shape_cast %504 : vector<64xf32> to vector<1x64xf32>
    %506 = vector.extract_strided_slice %505 {offsets = [0, 4], sizes = [1, 60], strides = [1, 1]} : vector<1x64xf32> to vector<1x60xf32>
    %507 = vector.extract_strided_slice %505 {offsets = [0, 0], sizes = [1, 4], strides = [1, 1]} : vector<1x64xf32> to vector<1x4xf32>
    %508 = tpu.concatenate %506, %507 in 1 : vector<1x60xf32>, vector<1x4xf32> -> vector<1x64xf32>
    %509 = arith.addf %505, %508 : vector<1x64xf32>
    %510 = vector.extract_strided_slice %509 {offsets = [0, 8], sizes = [1, 56], strides = [1, 1]} : vector<1x64xf32> to vector<1x56xf32>
    %511 = vector.extract_strided_slice %509 {offsets = [0, 0], sizes = [1, 8], strides = [1, 1]} : vector<1x64xf32> to vector<1x8xf32>
    %512 = tpu.concatenate %510, %511 in 1 : vector<1x56xf32>, vector<1x8xf32> -> vector<1x64xf32>
    %513 = arith.addf %509, %512 : vector<1x64xf32>
    %514 = vector.extract_strided_slice %513 {offsets = [0, 16], sizes = [1, 48], strides = [1, 1]} : vector<1x64xf32> to vector<1x48xf32>
    %515 = vector.extract_strided_slice %513 {offsets = [0, 0], sizes = [1, 16], strides = [1, 1]} : vector<1x64xf32> to vector<1x16xf32>
    %516 = tpu.concatenate %514, %515 in 1 : vector<1x48xf32>, vector<1x16xf32> -> vector<1x64xf32>
    %517 = arith.addf %513, %516 : vector<1x64xf32>
    %518 = vector.extract_strided_slice %517 {offsets = [0, 32], sizes = [1, 32], strides = [1, 1]} : vector<1x64xf32> to vector<1x32xf32>
    %519 = vector.extract_strided_slice %517 {offsets = [0, 0], sizes = [1, 32], strides = [1, 1]} : vector<1x64xf32> to vector<1x32xf32>
    %520 = tpu.concatenate %518, %519 in 1 : vector<1x32xf32>, vector<1x32xf32> -> vector<1x64xf32>
    %521 = arith.addf %517, %520 : vector<1x64xf32>
    %cst_156 = arith.constant 0.001953125 : f32
    %522 = vector.broadcast %cst_156 : f32 to vector<1x64xf32>
    %523 = arith.mulf %521, %522 : vector<1x64xf32>
    %cst_157 = arith.constant 9.99999974E-6 : f32
    %524 = vector.broadcast %cst_157 : f32 to vector<1x64xf32>
    %525 = arith.addf %523, %524 : vector<1x64xf32>
    %526 = math.rsqrt %525 : vector<1x64xf32>
    %527 = vector.broadcast %526 : vector<1x64xf32> to vector<32x64xf32>
    %528 = arith.mulf %502, %527 : vector<32x64xf32>
    %529 = arith.negf %528 : vector<32x64xf32>
    %530 = math.exp %529 : vector<32x64xf32>
    %cst_158 = arith.constant 1.000000e+00 : f32
    %531 = vector.broadcast %cst_158 : f32 to vector<32x64xf32>
    %532 = arith.addf %531, %530 : vector<32x64xf32>
    %533 = arith.divf %531, %532 : vector<32x64xf32>
    %534 = arith.subf %452, %453 : vector<32x64xf32>
    %535 = arith.mulf %534, %533 : vector<32x64xf32>
    %536 = arith.addf %453, %535 : vector<32x64xf32>
    %cst_159 = arith.constant 1.000000e+00 : f32
    %537 = vector.broadcast %cst_159 : f32 to vector<32x64xf32>
    %538 = arith.cmpf ogt, %536, %537 : vector<32x64xf32>
    %539 = arith.extui %538 : vector<32x64xi1> to vector<32x64xi32>
    %540 = arith.sitofp %539 : vector<32x64xi32> to vector<32x64xf32>
    %cst_160 = arith.constant 1.000000e+00 : f32
    %541 = vector.broadcast %cst_160 : f32 to vector<32x64xf32>
    %542 = arith.subf %541, %540 : vector<32x64xf32>
    %543 = arith.mulf %542, %536 : vector<32x64xf32>
    %c0_161 = arith.constant 0 : index
    %c0_162 = arith.constant 0 : index
    %544 = vector.load %arg16[%c0_161, %c0_162] : memref<32x64xf32, #tpu.memory_space<vmem>>, vector<32x64xf32>
    tpu.vector_store %arg16[%c0_161, %c0_162], %543 {strides = array<i32>} : memref<32x64xf32, #tpu.memory_space<vmem>>, vector<32x64xf32>,
    %545 = arith.truncf %540 : vector<32x64xf32> to vector<32x64xbf16>
    %c0_163 = arith.constant 0 : index
    %c0_164 = arith.constant 0 : index
    %546 = vector.load %arg20[%c0_163, %c0_164] : memref<32x64xbf16, #tpu.memory_space<vmem>>, vector<32x64xbf16>
    tpu.vector_store %arg20[%c0_163, %c0_164], %545 {strides = array<i32>} : memref<32x64xbf16, #tpu.memory_space<vmem>>, vector<32x64xbf16>,
    %cst_165 = arith.constant dense<0.000000e+00> : vector<64xf32>
    %547 = vector.multi_reduction <add>, %540, %cst_165 [0] : vector<32x64xf32> to vector<64xf32>
    %548 = vector.shape_cast %547 : vector<64xf32> to vector<1x64xf32>
    %cst_166 = arith.constant dense<0.000000e+00> : vector<1xf32>
    %549 = vector.multi_reduction <add>, %548, %cst_166 [1] : vector<1x64xf32> to vector<1xf32>
    %550 = vector.shape_cast %549 : vector<1xf32> to vector<1x1xf32>
    %c0_167 = arith.constant 0 : index
    %c0_168 = arith.constant 0 : index
    %551 = vector.load %arg7[%c0_167, %c0_168] : memref<64x128xbf16, #tpu.memory_space<vmem>>, vector<64x128xbf16>
    %cst_169 = arith.constant dense<0.000000e+00> : vector<32x128xf32>
    %552 = tpu.matmul %545, %551, %cst_169 {dimension_numbers = #tpu.dot_dimension_numbers<[1], [0], [0], [1], [0, 0, 1, 1], [], []>} : vector<32x64xbf16>, vector<64x128xbf16>, vector<32x128xf32> -> vector<32x128xf32>
    %c0_170 = arith.constant 0 : index
    %c0_171 = arith.constant 0 : index
    %553 = vector.load %arg8[%c0_170, %c0_171] : memref<64x128xbf16, #tpu.memory_space<vmem>>, vector<64x128xbf16>
    %cst_172 = arith.constant dense<0.000000e+00> : vector<32x128xf32>
    %554 = tpu.matmul %374, %553, %cst_172 {dimension_numbers = #tpu.dot_dimension_numbers<[1], [0], [0], [1], [0, 0, 1, 1], [], []>} : vector<32x64xbf16>, vector<64x128xbf16>, vector<32x128xf32> -> vector<32x128xf32>
    %555 = arith.addf %552, %554 : vector<32x128xf32>
    %cst_173 = arith.constant dense<0.000000e+00> : vector<128xf32>
    %556 = vector.multi_reduction <add>, %555, %cst_173 [0] : vector<32x128xf32> to vector<128xf32>
    %557 = vector.shape_cast %556 : vector<128xf32> to vector<1x128xf32>
    %558 = vector.extract_strided_slice %557 {offsets = [0, 8], sizes = [1, 120], strides = [1, 1]} : vector<1x128xf32> to vector<1x120xf32>
    %559 = vector.extract_strided_slice %557 {offsets = [0, 0], sizes = [1, 8], strides = [1, 1]} : vector<1x128xf32> to vector<1x8xf32>
    %560 = tpu.concatenate %558, %559 in 1 : vector<1x120xf32>, vector<1x8xf32> -> vector<1x128xf32>
    %561 = arith.addf %557, %560 : vector<1x128xf32>
    %562 = vector.extract_strided_slice %561 {offsets = [0, 16], sizes = [1, 112], strides = [1, 1]} : vector<1x128xf32> to vector<1x112xf32>
    %563 = vector.extract_strided_slice %561 {offsets = [0, 0], sizes = [1, 16], strides = [1, 1]} : vector<1x128xf32> to vector<1x16xf32>
    %564 = tpu.concatenate %562, %563 in 1 : vector<1x112xf32>, vector<1x16xf32> -> vector<1x128xf32>
    %565 = arith.addf %561, %564 : vector<1x128xf32>
    %566 = vector.extract_strided_slice %565 {offsets = [0, 32], sizes = [1, 96], strides = [1, 1]} : vector<1x128xf32> to vector<1x96xf32>
    %567 = vector.extract_strided_slice %565 {offsets = [0, 0], sizes = [1, 32], strides = [1, 1]} : vector<1x128xf32> to vector<1x32xf32>
    %568 = tpu.concatenate %566, %567 in 1 : vector<1x96xf32>, vector<1x32xf32> -> vector<1x128xf32>
    %569 = arith.addf %565, %568 : vector<1x128xf32>
    %570 = vector.extract_strided_slice %569 {offsets = [0, 64], sizes = [1, 64], strides = [1, 1]} : vector<1x128xf32> to vector<1x64xf32>
    %571 = vector.extract_strided_slice %569 {offsets = [0, 0], sizes = [1, 64], strides = [1, 1]} : vector<1x128xf32> to vector<1x64xf32>
    %572 = tpu.concatenate %570, %571 in 1 : vector<1x64xf32>, vector<1x64xf32> -> vector<1x128xf32>
    %573 = arith.addf %569, %572 : vector<1x128xf32>
    %cst_174 = arith.constant 0.001953125 : f32
    %574 = vector.broadcast %cst_174 : f32 to vector<1x128xf32>
    %575 = arith.mulf %573, %574 : vector<1x128xf32>
    %576 = vector.broadcast %575 : vector<1x128xf32> to vector<32x128xf32>
    %577 = arith.subf %555, %576 : vector<32x128xf32>
    %578 = arith.mulf %577, %577 : vector<32x128xf32>
    %cst_175 = arith.constant dense<0.000000e+00> : vector<128xf32>
    %579 = vector.multi_reduction <add>, %578, %cst_175 [0] : vector<32x128xf32> to vector<128xf32>
    %580 = vector.shape_cast %579 : vector<128xf32> to vector<1x128xf32>
    %581 = vector.extract_strided_slice %580 {offsets = [0, 8], sizes = [1, 120], strides = [1, 1]} : vector<1x128xf32> to vector<1x120xf32>
    %582 = vector.extract_strided_slice %580 {offsets = [0, 0], sizes = [1, 8], strides = [1, 1]} : vector<1x128xf32> to vector<1x8xf32>
    %583 = tpu.concatenate %581, %582 in 1 : vector<1x120xf32>, vector<1x8xf32> -> vector<1x128xf32>
    %584 = arith.addf %580, %583 : vector<1x128xf32>
    %585 = vector.extract_strided_slice %584 {offsets = [0, 16], sizes = [1, 112], strides = [1, 1]} : vector<1x128xf32> to vector<1x112xf32>
    %586 = vector.extract_strided_slice %584 {offsets = [0, 0], sizes = [1, 16], strides = [1, 1]} : vector<1x128xf32> to vector<1x16xf32>
    %587 = tpu.concatenate %585, %586 in 1 : vector<1x112xf32>, vector<1x16xf32> -> vector<1x128xf32>
    %588 = arith.addf %584, %587 : vector<1x128xf32>
    %589 = vector.extract_strided_slice %588 {offsets = [0, 32], sizes = [1, 96], strides = [1, 1]} : vector<1x128xf32> to vector<1x96xf32>
    %590 = vector.extract_strided_slice %588 {offsets = [0, 0], sizes = [1, 32], strides = [1, 1]} : vector<1x128xf32> to vector<1x32xf32>
    %591 = tpu.concatenate %589, %590 in 1 : vector<1x96xf32>, vector<1x32xf32> -> vector<1x128xf32>
    %592 = arith.addf %588, %591 : vector<1x128xf32>
    %593 = vector.extract_strided_slice %592 {offsets = [0, 64], sizes = [1, 64], strides = [1, 1]} : vector<1x128xf32> to vector<1x64xf32>
    %594 = vector.extract_strided_slice %592 {offsets = [0, 0], sizes = [1, 64], strides = [1, 1]} : vector<1x128xf32> to vector<1x64xf32>
    %595 = tpu.concatenate %593, %594 in 1 : vector<1x64xf32>, vector<1x64xf32> -> vector<1x128xf32>
    %596 = arith.addf %592, %595 : vector<1x128xf32>
    %cst_176 = arith.constant 0.001953125 : f32
    %597 = vector.broadcast %cst_176 : f32 to vector<1x128xf32>
    %598 = arith.mulf %596, %597 : vector<1x128xf32>
    %cst_177 = arith.constant 9.99999974E-6 : f32
    %599 = vector.broadcast %cst_177 : f32 to vector<1x128xf32>
    %600 = arith.addf %598, %599 : vector<1x128xf32>
    %601 = math.rsqrt %600 : vector<1x128xf32>
    %602 = vector.broadcast %601 : vector<1x128xf32> to vector<32x128xf32>
    %603 = arith.mulf %577, %602 : vector<32x128xf32>
    %c0_178 = arith.constant 0 : index
    %c0_179 = arith.constant 0 : index
    %604 = vector.load %arg13[%c0_178, %c0_179] : memref<32x128xf32, #tpu.memory_space<vmem>>, vector<32x128xf32>
    %605 = arith.addf %603, %604 : vector<32x128xf32>
    %606 = arith.truncf %605 : vector<32x128xf32> to vector<32x128xbf16>
    %c0_180 = arith.constant 0 : index
    %c0_181 = arith.constant 0 : index
    %c0_182 = arith.constant 0 : index
    %607 = vector.load %arg9[%c0_180, %c0_181, %c0_182] : memref<3x128x128xbf16, #tpu.memory_space<vmem>>, vector<1x128x128xbf16>
    %608 = vector.shape_cast %607 : vector<1x128x128xbf16> to vector<128x128xbf16>
    %cst_183 = arith.constant dense<0.000000e+00> : vector<32x128xf32>
    %609 = tpu.matmul %606, %608, %cst_183 {dimension_numbers = #tpu.dot_dimension_numbers<[1], [0], [0], [1], [0, 0, 1, 1], [], []>} : vector<32x128xbf16>, vector<128x128xbf16>, vector<32x128xf32> -> vector<32x128xf32>
    %c1_184 = arith.constant 1 : index
    %c0_185 = arith.constant 0 : index
    %c0_186 = arith.constant 0 : index
    %610 = vector.load %arg9[%c1_184, %c0_185, %c0_186] : memref<3x128x128xbf16, #tpu.memory_space<vmem>>, vector<1x128x128xbf16>
    %611 = vector.shape_cast %610 : vector<1x128x128xbf16> to vector<128x128xbf16>
    %cst_187 = arith.constant dense<0.000000e+00> : vector<32x128xf32>
    %612 = tpu.matmul %606, %611, %cst_187 {dimension_numbers = #tpu.dot_dimension_numbers<[1], [0], [0], [1], [0, 0, 1, 1], [], []>} : vector<32x128xbf16>, vector<128x128xbf16>, vector<32x128xf32> -> vector<32x128xf32>
    %c2_188 = arith.constant 2 : index
    %c0_189 = arith.constant 0 : index
    %c0_190 = arith.constant 0 : index
    %613 = vector.load %arg9[%c2_188, %c0_189, %c0_190] : memref<3x128x128xbf16, #tpu.memory_space<vmem>>, vector<1x128x128xbf16>
    %614 = vector.shape_cast %613 : vector<1x128x128xbf16> to vector<128x128xbf16>
    %cst_191 = arith.constant dense<0.000000e+00> : vector<32x128xf32>
    %615 = tpu.matmul %606, %614, %cst_191 {dimension_numbers = #tpu.dot_dimension_numbers<[1], [0], [0], [1], [0, 0, 1, 1], [], []>} : vector<32x128xbf16>, vector<128x128xbf16>, vector<32x128xf32> -> vector<32x128xf32>
    %cst_192 = arith.constant 0.000000e+00 : f32
    %616 = vector.broadcast %cst_192 : f32 to vector<1x128xf32>
    %617 = vector.extract_strided_slice %609 {offsets = [0, 0], sizes = [31, 128], strides = [1, 1]} : vector<32x128xf32> to vector<31x128xf32>
    %618 = tpu.concatenate %616, %617 in 0 : vector<1x128xf32>, vector<31x128xf32> -> vector<32x128xf32>
    %cst_193 = arith.constant 0.000000e+00 : f32
    %619 = vector.shape_cast %18 : vector<32x1xi1> to vector<32x1xi1>
    %620 = vector.broadcast %619 : vector<32x1xi1> to vector<32x128xi1>
    %621 = vector.broadcast %cst_193 : f32 to vector<32x128xf32>
    %622 = arith.select %620, %621, %618 : vector<32x128xi1>, vector<32x128xf32>
    %623 = arith.addf %612, %622 : vector<32x128xf32>
    %624 = vector.extract_strided_slice %615 {offsets = [1, 0], sizes = [31, 128], strides = [1, 1]} : vector<32x128xf32> to vector<31x128xf32>
    %cst_194 = arith.constant 0.000000e+00 : f32
    %625 = vector.broadcast %cst_194 : f32 to vector<1x128xf32>
    %626 = tpu.concatenate %624, %625 in 0 : vector<31x128xf32>, vector<1x128xf32> -> vector<32x128xf32>
    %cst_195 = arith.constant 0.000000e+00 : f32
    %627 = vector.shape_cast %36 : vector<32x1xi1> to vector<32x1xi1>
    %628 = vector.broadcast %627 : vector<32x1xi1> to vector<32x128xi1>
    %629 = vector.broadcast %cst_195 : f32 to vector<32x128xf32>
    %630 = arith.select %628, %629, %626 : vector<32x128xi1>, vector<32x128xf32>
    %631 = arith.addf %623, %630 : vector<32x128xf32>
    %cst_196 = arith.constant dense<0.000000e+00> : vector<128xf32>
    %632 = vector.multi_reduction <add>, %631, %cst_196 [0] : vector<32x128xf32> to vector<128xf32>
    %633 = vector.shape_cast %632 : vector<128xf32> to vector<1x128xf32>
    %634 = vector.extract_strided_slice %633 {offsets = [0, 8], sizes = [1, 120], strides = [1, 1]} : vector<1x128xf32> to vector<1x120xf32>
    %635 = vector.extract_strided_slice %633 {offsets = [0, 0], sizes = [1, 8], strides = [1, 1]} : vector<1x128xf32> to vector<1x8xf32>
    %636 = tpu.concatenate %634, %635 in 1 : vector<1x120xf32>, vector<1x8xf32> -> vector<1x128xf32>
    %637 = arith.addf %633, %636 : vector<1x128xf32>
    %638 = vector.extract_strided_slice %637 {offsets = [0, 16], sizes = [1, 112], strides = [1, 1]} : vector<1x128xf32> to vector<1x112xf32>
    %639 = vector.extract_strided_slice %637 {offsets = [0, 0], sizes = [1, 16], strides = [1, 1]} : vector<1x128xf32> to vector<1x16xf32>
    %640 = tpu.concatenate %638, %639 in 1 : vector<1x112xf32>, vector<1x16xf32> -> vector<1x128xf32>
    %641 = arith.addf %637, %640 : vector<1x128xf32>
    %642 = vector.extract_strided_slice %641 {offsets = [0, 32], sizes = [1, 96], strides = [1, 1]} : vector<1x128xf32> to vector<1x96xf32>
    %643 = vector.extract_strided_slice %641 {offsets = [0, 0], sizes = [1, 32], strides = [1, 1]} : vector<1x128xf32> to vector<1x32xf32>
    %644 = tpu.concatenate %642, %643 in 1 : vector<1x96xf32>, vector<1x32xf32> -> vector<1x128xf32>
    %645 = arith.addf %641, %644 : vector<1x128xf32>
    %646 = vector.extract_strided_slice %645 {offsets = [0, 64], sizes = [1, 64], strides = [1, 1]} : vector<1x128xf32> to vector<1x64xf32>
    %647 = vector.extract_strided_slice %645 {offsets = [0, 0], sizes = [1, 64], strides = [1, 1]} : vector<1x128xf32> to vector<1x64xf32>
    %648 = tpu.concatenate %646, %647 in 1 : vector<1x64xf32>, vector<1x64xf32> -> vector<1x128xf32>
    %649 = arith.addf %645, %648 : vector<1x128xf32>
    %cst_197 = arith.constant 0.001953125 : f32
    %650 = vector.broadcast %cst_197 : f32 to vector<1x128xf32>
    %651 = arith.mulf %649, %650 : vector<1x128xf32>
    %652 = vector.broadcast %651 : vector<1x128xf32> to vector<32x128xf32>
    %653 = arith.subf %631, %652 : vector<32x128xf32>
    %654 = arith.mulf %653, %653 : vector<32x128xf32>
    %cst_198 = arith.constant dense<0.000000e+00> : vector<128xf32>
    %655 = vector.multi_reduction <add>, %654, %cst_198 [0] : vector<32x128xf32> to vector<128xf32>
    %656 = vector.shape_cast %655 : vector<128xf32> to vector<1x128xf32>
    %657 = vector.extract_strided_slice %656 {offsets = [0, 8], sizes = [1, 120], strides = [1, 1]} : vector<1x128xf32> to vector<1x120xf32>
    %658 = vector.extract_strided_slice %656 {offsets = [0, 0], sizes = [1, 8], strides = [1, 1]} : vector<1x128xf32> to vector<1x8xf32>
    %659 = tpu.concatenate %657, %658 in 1 : vector<1x120xf32>, vector<1x8xf32> -> vector<1x128xf32>
    %660 = arith.addf %656, %659 : vector<1x128xf32>
    %661 = vector.extract_strided_slice %660 {offsets = [0, 16], sizes = [1, 112], strides = [1, 1]} : vector<1x128xf32> to vector<1x112xf32>
    %662 = vector.extract_strided_slice %660 {offsets = [0, 0], sizes = [1, 16], strides = [1, 1]} : vector<1x128xf32> to vector<1x16xf32>
    %663 = tpu.concatenate %661, %662 in 1 : vector<1x112xf32>, vector<1x16xf32> -> vector<1x128xf32>
    %664 = arith.addf %660, %663 : vector<1x128xf32>
    %665 = vector.extract_strided_slice %664 {offsets = [0, 32], sizes = [1, 96], strides = [1, 1]} : vector<1x128xf32> to vector<1x96xf32>
    %666 = vector.extract_strided_slice %664 {offsets = [0, 0], sizes = [1, 32], strides = [1, 1]} : vector<1x128xf32> to vector<1x32xf32>
    %667 = tpu.concatenate %665, %666 in 1 : vector<1x96xf32>, vector<1x32xf32> -> vector<1x128xf32>
    %668 = arith.addf %664, %667 : vector<1x128xf32>
    %669 = vector.extract_strided_slice %668 {offsets = [0, 64], sizes = [1, 64], strides = [1, 1]} : vector<1x128xf32> to vector<1x64xf32>
    %670 = vector.extract_strided_slice %668 {offsets = [0, 0], sizes = [1, 64], strides = [1, 1]} : vector<1x128xf32> to vector<1x64xf32>
    %671 = tpu.concatenate %669, %670 in 1 : vector<1x64xf32>, vector<1x64xf32> -> vector<1x128xf32>
    %672 = arith.addf %668, %671 : vector<1x128xf32>
    %cst_199 = arith.constant 0.001953125 : f32
    %673 = vector.broadcast %cst_199 : f32 to vector<1x128xf32>
    %674 = arith.mulf %672, %673 : vector<1x128xf32>
    %cst_200 = arith.constant 9.99999974E-6 : f32
    %675 = vector.broadcast %cst_200 : f32 to vector<1x128xf32>
    %676 = arith.addf %674, %675 : vector<1x128xf32>
    %677 = math.rsqrt %676 : vector<1x128xf32>
    %678 = vector.broadcast %677 : vector<1x128xf32> to vector<32x128xf32>
    %679 = arith.mulf %653, %678 : vector<32x128xf32>
    %680 = arith.negf %679 : vector<32x128xf32>
    %681 = math.exp %680 : vector<32x128xf32>
    %cst_201 = arith.constant 1.000000e+00 : f32
    %682 = vector.broadcast %cst_201 : f32 to vector<32x128xf32>
    %683 = arith.addf %682, %681 : vector<32x128xf32>
    %684 = arith.divf %682, %683 : vector<32x128xf32>
    %685 = arith.subf %603, %604 : vector<32x128xf32>
    %686 = arith.mulf %685, %684 : vector<32x128xf32>
    %687 = arith.addf %604, %686 : vector<32x128xf32>
    %cst_202 = arith.constant 1.000000e+00 : f32
    %688 = vector.broadcast %cst_202 : f32 to vector<32x128xf32>
    %689 = arith.cmpf ogt, %687, %688 : vector<32x128xf32>
    %690 = arith.extui %689 : vector<32x128xi1> to vector<32x128xi32>
    %691 = arith.sitofp %690 : vector<32x128xi32> to vector<32x128xf32>
    %cst_203 = arith.constant 1.000000e+00 : f32
    %692 = vector.broadcast %cst_203 : f32 to vector<32x128xf32>
    %693 = arith.subf %692, %691 : vector<32x128xf32>
    %694 = arith.mulf %693, %687 : vector<32x128xf32>
    %c0_204 = arith.constant 0 : index
    %c0_205 = arith.constant 0 : index
    %695 = vector.load %arg17[%c0_204, %c0_205] : memref<32x128xf32, #tpu.memory_space<vmem>>, vector<32x128xf32>
    tpu.vector_store %arg17[%c0_204, %c0_205], %694 {strides = array<i32>} : memref<32x128xf32, #tpu.memory_space<vmem>>, vector<32x128xf32>,
    %696 = arith.truncf %691 : vector<32x128xf32> to vector<32x128xbf16>
    %c0_206 = arith.constant 0 : index
    %c0_207 = arith.constant 0 : index
    %697 = vector.load %arg21[%c0_206, %c0_207] : memref<32x128xbf16, #tpu.memory_space<vmem>>, vector<32x128xbf16>
    tpu.vector_store %arg21[%c0_206, %c0_207], %696 {strides = array<i32>} : memref<32x128xbf16, #tpu.memory_space<vmem>>, vector<32x128xbf16>,
    %cst_208 = arith.constant dense<0.000000e+00> : vector<128xf32>
    %698 = vector.multi_reduction <add>, %691, %cst_208 [0] : vector<32x128xf32> to vector<128xf32>
    %699 = vector.shape_cast %698 : vector<128xf32> to vector<1x128xf32>
    %cst_209 = arith.constant dense<0.000000e+00> : vector<1xf32>
    %700 = vector.multi_reduction <add>, %699, %cst_209 [1] : vector<1x128xf32> to vector<1xf32>
    %701 = vector.shape_cast %700 : vector<1xf32> to vector<1x1xf32>
    %702 = arith.addf %208, %701 : vector<1x1xf32>
    %cst_210 = arith.constant 2.44140625E-4 : f32
    %703 = vector.broadcast %cst_210 : f32 to vector<1x1xf32>
    %704 = arith.mulf %702, %703 : vector<1x1xf32>
    %705 = arith.addf %379, %550 : vector<1x1xf32>
    %cst_211 = arith.constant 4.8828125E-4 : f32
    %706 = vector.broadcast %cst_211 : f32 to vector<1x1xf32>
    %707 = arith.mulf %705, %706 : vector<1x1xf32>
    %708 = arith.addf %704, %707 : vector<1x1xf32>
    %c0_212 = arith.constant 0 : index
    %c0_213 = arith.constant 0 : index
    %709 = vector.load %arg23[%c0_212, %c0_213] : memref<1x1xf32, #tpu.memory_space<vmem>>, vector<1x1xf32>
    tpu.vector_store %arg23[%c0_212, %c0_213], %708 {strides = array<i32>} : memref<1x1xf32, #tpu.memory_space<vmem>>, vector<1x1xf32>,
    %710 = vector.extract_strided_slice %203 {offsets = [0, 0], sizes = [1, 128], strides = [1, 1]} : vector<32x128xbf16> to vector<1x128xbf16>
    %711 = vector.extract_strided_slice %203 {offsets = [1, 0], sizes = [1, 128], strides = [1, 1]} : vector<32x128xbf16> to vector<1x128xbf16>
    %712 = arith.maximumf %710, %711 : vector<1x128xbf16>
    %713 = vector.extract_strided_slice %203 {offsets = [2, 0], sizes = [1, 128], strides = [1, 1]} : vector<32x128xbf16> to vector<1x128xbf16>
    %714 = vector.extract_strided_slice %203 {offsets = [3, 0], sizes = [1, 128], strides = [1, 1]} : vector<32x128xbf16> to vector<1x128xbf16>
    %715 = arith.maximumf %713, %714 : vector<1x128xbf16>
    %716 = vector.extract_strided_slice %203 {offsets = [4, 0], sizes = [1, 128], strides = [1, 1]} : vector<32x128xbf16> to vector<1x128xbf16>
    %717 = vector.extract_strided_slice %203 {offsets = [5, 0], sizes = [1, 128], strides = [1, 1]} : vector<32x128xbf16> to vector<1x128xbf16>
    %718 = arith.maximumf %716, %717 : vector<1x128xbf16>
    %719 = vector.extract_strided_slice %203 {offsets = [6, 0], sizes = [1, 128], strides = [1, 1]} : vector<32x128xbf16> to vector<1x128xbf16>
    %720 = vector.extract_strided_slice %203 {offsets = [7, 0], sizes = [1, 128], strides = [1, 1]} : vector<32x128xbf16> to vector<1x128xbf16>
    %721 = arith.maximumf %719, %720 : vector<1x128xbf16>
    %722 = vector.extract_strided_slice %203 {offsets = [8, 0], sizes = [1, 128], strides = [1, 1]} : vector<32x128xbf16> to vector<1x128xbf16>
    %723 = vector.extract_strided_slice %203 {offsets = [9, 0], sizes = [1, 128], strides = [1, 1]} : vector<32x128xbf16> to vector<1x128xbf16>
    %724 = arith.maximumf %722, %723 : vector<1x128xbf16>
    %725 = vector.extract_strided_slice %203 {offsets = [10, 0], sizes = [1, 128], strides = [1, 1]} : vector<32x128xbf16> to vector<1x128xbf16>
    %726 = vector.extract_strided_slice %203 {offsets = [11, 0], sizes = [1, 128], strides = [1, 1]} : vector<32x128xbf16> to vector<1x128xbf16>
    %727 = arith.maximumf %725, %726 : vector<1x128xbf16>
    %728 = vector.extract_strided_slice %203 {offsets = [12, 0], sizes = [1, 128], strides = [1, 1]} : vector<32x128xbf16> to vector<1x128xbf16>
    %729 = vector.extract_strided_slice %203 {offsets = [13, 0], sizes = [1, 128], strides = [1, 1]} : vector<32x128xbf16> to vector<1x128xbf16>
    %730 = arith.maximumf %728, %729 : vector<1x128xbf16>
    %731 = vector.extract_strided_slice %203 {offsets = [14, 0], sizes = [1, 128], strides = [1, 1]} : vector<32x128xbf16> to vector<1x128xbf16>
    %732 = vector.extract_strided_slice %203 {offsets = [15, 0], sizes = [1, 128], strides = [1, 1]} : vector<32x128xbf16> to vector<1x128xbf16>
    %733 = arith.maximumf %731, %732 : vector<1x128xbf16>
    %734 = vector.extract_strided_slice %203 {offsets = [16, 0], sizes = [1, 128], strides = [1, 1]} : vector<32x128xbf16> to vector<1x128xbf16>
    %735 = vector.extract_strided_slice %203 {offsets = [17, 0], sizes = [1, 128], strides = [1, 1]} : vector<32x128xbf16> to vector<1x128xbf16>
    %736 = arith.maximumf %734, %735 : vector<1x128xbf16>
    %737 = vector.extract_strided_slice %203 {offsets = [18, 0], sizes = [1, 128], strides = [1, 1]} : vector<32x128xbf16> to vector<1x128xbf16>
    %738 = vector.extract_strided_slice %203 {offsets = [19, 0], sizes = [1, 128], strides = [1, 1]} : vector<32x128xbf16> to vector<1x128xbf16>
    %739 = arith.maximumf %737, %738 : vector<1x128xbf16>
    %740 = vector.extract_strided_slice %203 {offsets = [20, 0], sizes = [1, 128], strides = [1, 1]} : vector<32x128xbf16> to vector<1x128xbf16>
    %741 = vector.extract_strided_slice %203 {offsets = [21, 0], sizes = [1, 128], strides = [1, 1]} : vector<32x128xbf16> to vector<1x128xbf16>
    %742 = arith.maximumf %740, %741 : vector<1x128xbf16>
    %743 = vector.extract_strided_slice %203 {offsets = [22, 0], sizes = [1, 128], strides = [1, 1]} : vector<32x128xbf16> to vector<1x128xbf16>
    %744 = vector.extract_strided_slice %203 {offsets = [23, 0], sizes = [1, 128], strides = [1, 1]} : vector<32x128xbf16> to vector<1x128xbf16>
    %745 = arith.maximumf %743, %744 : vector<1x128xbf16>
    %746 = vector.extract_strided_slice %203 {offsets = [24, 0], sizes = [1, 128], strides = [1, 1]} : vector<32x128xbf16> to vector<1x128xbf16>
    %747 = vector.extract_strided_slice %203 {offsets = [25, 0], sizes = [1, 128], strides = [1, 1]} : vector<32x128xbf16> to vector<1x128xbf16>
    %748 = arith.maximumf %746, %747 : vector<1x128xbf16>
    %749 = vector.extract_strided_slice %203 {offsets = [26, 0], sizes = [1, 128], strides = [1, 1]} : vector<32x128xbf16> to vector<1x128xbf16>
    %750 = vector.extract_strided_slice %203 {offsets = [27, 0], sizes = [1, 128], strides = [1, 1]} : vector<32x128xbf16> to vector<1x128xbf16>
    %751 = arith.maximumf %749, %750 : vector<1x128xbf16>
    %752 = vector.extract_strided_slice %203 {offsets = [28, 0], sizes = [1, 128], strides = [1, 1]} : vector<32x128xbf16> to vector<1x128xbf16>
    %753 = vector.extract_strided_slice %203 {offsets = [29, 0], sizes = [1, 128], strides = [1, 1]} : vector<32x128xbf16> to vector<1x128xbf16>
    %754 = arith.maximumf %752, %753 : vector<1x128xbf16>
    %755 = vector.extract_strided_slice %203 {offsets = [30, 0], sizes = [1, 128], strides = [1, 1]} : vector<32x128xbf16> to vector<1x128xbf16>
    %756 = vector.extract_strided_slice %203 {offsets = [31, 0], sizes = [1, 128], strides = [1, 1]} : vector<32x128xbf16> to vector<1x128xbf16>
    %757 = arith.maximumf %755, %756 : vector<1x128xbf16>
    %758 = tpu.concatenate %712, %715, %718, %721, %724, %727, %730, %733, %736, %739, %742, %745, %748, %751, %754, %757 in 0 : vector<1x128xbf16>, vector<1x128xbf16>, vector<1x128xbf16>, vector<1x128xbf16>, vector<1x128xbf16>, vector<1x128xbf16>, vector<1x128xbf16>, vector<1x128xbf16>, vector<1x128xbf16>, vector<1x128xbf16>, vector<1x128xbf16>, vector<1x128xbf16>, vector<1x128xbf16>, vector<1x128xbf16>, vector<1x128xbf16>, vector<1x128xbf16> -> vector<16x128xbf16>
    %759 = vector.extract_strided_slice %696 {offsets = [0, 0], sizes = [1, 128], strides = [1, 1]} : vector<32x128xbf16> to vector<1x128xbf16>
    %760 = vector.extract_strided_slice %696 {offsets = [1, 0], sizes = [1, 128], strides = [1, 1]} : vector<32x128xbf16> to vector<1x128xbf16>
    %761 = arith.maximumf %759, %760 : vector<1x128xbf16>
    %762 = vector.extract_strided_slice %696 {offsets = [2, 0], sizes = [1, 128], strides = [1, 1]} : vector<32x128xbf16> to vector<1x128xbf16>
    %763 = vector.extract_strided_slice %696 {offsets = [3, 0], sizes = [1, 128], strides = [1, 1]} : vector<32x128xbf16> to vector<1x128xbf16>
    %764 = arith.maximumf %762, %763 : vector<1x128xbf16>
    %765 = vector.extract_strided_slice %696 {offsets = [4, 0], sizes = [1, 128], strides = [1, 1]} : vector<32x128xbf16> to vector<1x128xbf16>
    %766 = vector.extract_strided_slice %696 {offsets = [5, 0], sizes = [1, 128], strides = [1, 1]} : vector<32x128xbf16> to vector<1x128xbf16>
    %767 = arith.maximumf %765, %766 : vector<1x128xbf16>
    %768 = vector.extract_strided_slice %696 {offsets = [6, 0], sizes = [1, 128], strides = [1, 1]} : vector<32x128xbf16> to vector<1x128xbf16>
    %769 = vector.extract_strided_slice %696 {offsets = [7, 0], sizes = [1, 128], strides = [1, 1]} : vector<32x128xbf16> to vector<1x128xbf16>
    %770 = arith.maximumf %768, %769 : vector<1x128xbf16>
    %771 = vector.extract_strided_slice %696 {offsets = [8, 0], sizes = [1, 128], strides = [1, 1]} : vector<32x128xbf16> to vector<1x128xbf16>
    %772 = vector.extract_strided_slice %696 {offsets = [9, 0], sizes = [1, 128], strides = [1, 1]} : vector<32x128xbf16> to vector<1x128xbf16>
    %773 = arith.maximumf %771, %772 : vector<1x128xbf16>
    %774 = vector.extract_strided_slice %696 {offsets = [10, 0], sizes = [1, 128], strides = [1, 1]} : vector<32x128xbf16> to vector<1x128xbf16>
    %775 = vector.extract_strided_slice %696 {offsets = [11, 0], sizes = [1, 128], strides = [1, 1]} : vector<32x128xbf16> to vector<1x128xbf16>
    %776 = arith.maximumf %774, %775 : vector<1x128xbf16>
    %777 = vector.extract_strided_slice %696 {offsets = [12, 0], sizes = [1, 128], strides = [1, 1]} : vector<32x128xbf16> to vector<1x128xbf16>
    %778 = vector.extract_strided_slice %696 {offsets = [13, 0], sizes = [1, 128], strides = [1, 1]} : vector<32x128xbf16> to vector<1x128xbf16>
    %779 = arith.maximumf %777, %778 : vector<1x128xbf16>
    %780 = vector.extract_strided_slice %696 {offsets = [14, 0], sizes = [1, 128], strides = [1, 1]} : vector<32x128xbf16> to vector<1x128xbf16>
    %781 = vector.extract_strided_slice %696 {offsets = [15, 0], sizes = [1, 128], strides = [1, 1]} : vector<32x128xbf16> to vector<1x128xbf16>
    %782 = arith.maximumf %780, %781 : vector<1x128xbf16>
    %783 = vector.extract_strided_slice %696 {offsets = [16, 0], sizes = [1, 128], strides = [1, 1]} : vector<32x128xbf16> to vector<1x128xbf16>
    %784 = vector.extract_strided_slice %696 {offsets = [17, 0], sizes = [1, 128], strides = [1, 1]} : vector<32x128xbf16> to vector<1x128xbf16>
    %785 = arith.maximumf %783, %784 : vector<1x128xbf16>
    %786 = vector.extract_strided_slice %696 {offsets = [18, 0], sizes = [1, 128], strides = [1, 1]} : vector<32x128xbf16> to vector<1x128xbf16>
    %787 = vector.extract_strided_slice %696 {offsets = [19, 0], sizes = [1, 128], strides = [1, 1]} : vector<32x128xbf16> to vector<1x128xbf16>
    %788 = arith.maximumf %786, %787 : vector<1x128xbf16>
    %789 = vector.extract_strided_slice %696 {offsets = [20, 0], sizes = [1, 128], strides = [1, 1]} : vector<32x128xbf16> to vector<1x128xbf16>
    %790 = vector.extract_strided_slice %696 {offsets = [21, 0], sizes = [1, 128], strides = [1, 1]} : vector<32x128xbf16> to vector<1x128xbf16>
    %791 = arith.maximumf %789, %790 : vector<1x128xbf16>
    %792 = vector.extract_strided_slice %696 {offsets = [22, 0], sizes = [1, 128], strides = [1, 1]} : vector<32x128xbf16> to vector<1x128xbf16>
    %793 = vector.extract_strided_slice %696 {offsets = [23, 0], sizes = [1, 128], strides = [1, 1]} : vector<32x128xbf16> to vector<1x128xbf16>
    %794 = arith.maximumf %792, %793 : vector<1x128xbf16>
    %795 = vector.extract_strided_slice %696 {offsets = [24, 0], sizes = [1, 128], strides = [1, 1]} : vector<32x128xbf16> to vector<1x128xbf16>
    %796 = vector.extract_strided_slice %696 {offsets = [25, 0], sizes = [1, 128], strides = [1, 1]} : vector<32x128xbf16> to vector<1x128xbf16>
    %797 = arith.maximumf %795, %796 : vector<1x128xbf16>
    %798 = vector.extract_strided_slice %696 {offsets = [26, 0], sizes = [1, 128], strides = [1, 1]} : vector<32x128xbf16> to vector<1x128xbf16>
    %799 = vector.extract_strided_slice %696 {offsets = [27, 0], sizes = [1, 128], strides = [1, 1]} : vector<32x128xbf16> to vector<1x128xbf16>
    %800 = arith.maximumf %798, %799 : vector<1x128xbf16>
    %801 = vector.extract_strided_slice %696 {offsets = [28, 0], sizes = [1, 128], strides = [1, 1]} : vector<32x128xbf16> to vector<1x128xbf16>
    %802 = vector.extract_strided_slice %696 {offsets = [29, 0], sizes = [1, 128], strides = [1, 1]} : vector<32x128xbf16> to vector<1x128xbf16>
    %803 = arith.maximumf %801, %802 : vector<1x128xbf16>
    %804 = vector.extract_strided_slice %696 {offsets = [30, 0], sizes = [1, 128], strides = [1, 1]} : vector<32x128xbf16> to vector<1x128xbf16>
    %805 = vector.extract_strided_slice %696 {offsets = [31, 0], sizes = [1, 128], strides = [1, 1]} : vector<32x128xbf16> to vector<1x128xbf16>
    %806 = arith.maximumf %804, %805 : vector<1x128xbf16>
    %807 = tpu.concatenate %761, %764, %767, %770, %773, %776, %779, %782, %785, %788, %791, %794, %797, %800, %803, %806 in 0 : vector<1x128xbf16>, vector<1x128xbf16>, vector<1x128xbf16>, vector<1x128xbf16>, vector<1x128xbf16>, vector<1x128xbf16>, vector<1x128xbf16>, vector<1x128xbf16>, vector<1x128xbf16>, vector<1x128xbf16>, vector<1x128xbf16>, vector<1x128xbf16>, vector<1x128xbf16>, vector<1x128xbf16>, vector<1x128xbf16>, vector<1x128xbf16> -> vector<16x128xbf16>
    %808 = tpu.iota {dimensions = array<i32: 1>} : vector<16x128xi32>
    %c16_i32_214 = arith.constant 16 : i32
    %c0_i32_215 = arith.constant 0 : i32
    %809 = arith.cmpi eq, %c16_i32_214, %c0_i32_215 : i32
    %c1_i32_216 = arith.constant 1 : i32
    %810 = arith.select %809, %c1_i32_216, %c16_i32_214 : i32
    %811 = vector.broadcast %810 : i32 to vector<16x128xi32>
    %812 = arith.remsi %808, %811 : vector<16x128xi32>
    %c0_i32_217 = arith.constant 0 : i32
    %813 = vector.broadcast %c0_i32_217 : i32 to vector<16x128xi32>
    %814 = arith.cmpi ne, %812, %813 : vector<16x128xi32>
    %c0_i32_218 = arith.constant 0 : i32
    %815 = vector.broadcast %c0_i32_218 : i32 to vector<16x128xi32>
    %816 = arith.cmpi slt, %812, %815 : vector<16x128xi32>
    %c0_i32_219 = arith.constant 0 : i32
    %817 = arith.cmpi slt, %810, %c0_i32_219 : i32
    %818 = vector.broadcast %817 : i1 to vector<16x128xi1>
    %819 = vector.broadcast %818 : vector<16x128xi1> to vector<16x128xi1>
    %820 = arith.xori %816, %819 : vector<16x128xi1>
    %821 = arith.andi %820, %814 : vector<16x128xi1>
    %822 = vector.broadcast %810 : i32 to vector<16x128xi32>
    %823 = arith.addi %812, %822 : vector<16x128xi32>
    %824 = arith.select %821, %823, %812 : vector<16x128xi1>, vector<16x128xi32>
    %c8_i32 = arith.constant 8 : i32
    %825 = vector.broadcast %c8_i32 : i32 to vector<16x128xi32>
    %826 = arith.cmpi slt, %824, %825 : vector<16x128xi32>
    %cst_220 = arith.constant 0.000000e+00 : bf16
    %827 = vector.broadcast %cst_220 : bf16 to vector<16x8xbf16>
    %828 = vector.extract_strided_slice %807 {offsets = [0, 0], sizes = [16, 120], strides = [1, 1]} : vector<16x128xbf16> to vector<16x120xbf16>
    %829 = tpu.concatenate %827, %828 in 1 : vector<16x8xbf16>, vector<16x120xbf16> -> vector<16x128xbf16>
    %830 = vector.extract_strided_slice %758 {offsets = [0, 8], sizes = [16, 120], strides = [1, 1]} : vector<16x128xbf16> to vector<16x120xbf16>
    %831 = tpu.concatenate %830, %827 in 1 : vector<16x120xbf16>, vector<16x8xbf16> -> vector<16x128xbf16>
    %832 = arith.select %826, %758, %829 : vector<16x128xi1>, vector<16x128xbf16>
    %833 = arith.select %826, %831, %807 : vector<16x128xi1>, vector<16x128xbf16>
    %834 = arith.maximumf %832, %833 : vector<16x128xbf16>
    %c0_221 = arith.constant 0 : index
    %c0_222 = arith.constant 0 : index
    %835 = vector.load %arg22[%c0_221, %c0_222] : memref<16x128xbf16, #tpu.memory_space<vmem>>, vector<16x128xbf16>
    tpu.vector_store %arg22[%c0_221, %c0_222], %834 {strides = array<i32>} : memref<16x128xbf16, #tpu.memory_space<vmem>>, vector<16x128xbf16>,
    return
  }
}

</mosaic_0001>

<llo_original>
// kernel: _lambda_.1
$region0: #{_lambda_.1}
  #allocation0 [shape = 'u32[]', space=smem, size = 0x4, offset = 0x4, fixed_abs, tag = 'smem constant byte address 0x4 - core index']
  #allocation1 [shape = 'u32[72,128]{1,0:T(1,128)}', space=vmem, size = 0x9000, scoped, tag = 'internal scratch']
  %s0 = inlined_call_operand.vmem [shape: bf16[32,64], index: 0, kind: input, shape index: {}]
  %s1 = inlined_call_operand.vmem [shape: bf16[3,64,128], index: 1, kind: input, shape index: {}]
  %s2 = inlined_call_operand.vmem [shape: bf16[3,128,128], index: 2, kind: input, shape index: {}]
  %s3 = inlined_call_operand.vmem [shape: bf16[3,128,64], index: 3, kind: input, shape index: {}]
  %s4 = inlined_call_operand.vmem [shape: bf16[3,64,64], index: 4, kind: input, shape index: {}]
  %s5 = inlined_call_operand.vmem [shape: bf16[3,64,64], index: 5, kind: input, shape index: {}]
  %s6 = inlined_call_operand.vmem [shape: bf16[3,64,64], index: 6, kind: input, shape index: {}]
  %s7 = inlined_call_operand.vmem [shape: bf16[64,128], index: 7, kind: input, shape index: {}]
  %s8 = inlined_call_operand.vmem [shape: bf16[64,128], index: 8, kind: input, shape index: {}]
  %s9 = inlined_call_operand.vmem [shape: bf16[3,128,128], index: 9, kind: input, shape index: {}]
  %s10 = inlined_call_operand.vmem [shape: f32[32,128], index: 10, kind: input, shape index: {}, may-alias: {10,14}]
  %s11 = inlined_call_operand.vmem [shape: f32[32,64], index: 11, kind: input, shape index: {}, may-alias: {11,15}]
  %s12 = inlined_call_operand.vmem [shape: f32[32,64], index: 12, kind: input, shape index: {}, may-alias: {12,16}]
  %s13 = inlined_call_operand.vmem [shape: f32[32,128], index: 13, kind: input, shape index: {}, may-alias: {13,17}]
  %s14 = inlined_call_operand.vmem [shape: f32[32,128], index: 14, kind: output, shape index: {0}, may-alias: {10,14}]
  %s15 = inlined_call_operand.vmem [shape: f32[32,64], index: 15, kind: output, shape index: {1}, may-alias: {11,15}]
  %s16 = inlined_call_operand.vmem [shape: f32[32,64], index: 16, kind: output, shape index: {2}, may-alias: {12,16}]
  %s17 = inlined_call_operand.vmem [shape: f32[32,128], index: 17, kind: output, shape index: {3}, may-alias: {13,17}]
  %s18 = inlined_call_operand.vmem [shape: bf16[32,128], index: 18, kind: output, shape index: {4}]
  %s19 = inlined_call_operand.vmem [shape: bf16[32,64], index: 19, kind: output, shape index: {5}]
  %s20 = inlined_call_operand.vmem [shape: bf16[32,64], index: 20, kind: output, shape index: {6}]
  %s21 = inlined_call_operand.vmem [shape: bf16[32,128], index: 21, kind: output, shape index: {7}]
  %s22 = inlined_call_operand.vmem [shape: bf16[16,128], index: 22, kind: output, shape index: {8}]
  %s23 = inlined_call_operand.hbm [shape: f32[1,1], index: 23, kind: output, shape index: {9}]
  %24 = xla_tuple %s14, %s15, %s16, %s17, %s18, %s19, %s20, %s21, %s22, %s23
  %s25 = sld [smem:[#allocation0]]
  $region138: #{_lambda_.1} parent=0
    _
  %s27 = ssub.s32 1, %s25
  %s28 = scalar_select 0, %s27, %s25
  $region1: #{_lambda_.1} parent=0
    #allocation2 [shape = 'u8[512]{0}', space=vmem, size = 0x400, scoped, tag = 'output window, operand 9, single buffered']
    #allocation3 [shape = 's32[1]{0}', space=sflag, size = 0x4, scoped, tag = 'scoped memory for _lambda_.1']
    %29 = vsyncpa [#allocation3], 0
    // Predicated region
    $region2: #{_lambda_.1} parent=1 // pred_check
      _
    $region3: #{_lambda_.1} parent=1 // pred_check_branch
      %31 = sbr.rel (0) target = $region5
    $region4: #{_lambda_.1} parent=1 // pred_region
      _
    $region5: #{_lambda_.1} parent=1 // pred_fallthru
      _
    // Predicated region
    $region6: #{_lambda_.1} parent=1 // pred_check
      _
    $region7: #{_lambda_.1} parent=1 // pred_check_branch
      %33 = sbr.rel (0) target = $region9
    $region8: #{_lambda_.1} parent=1 // pred_region
      _
    $region9: #{_lambda_.1} parent=1 // pred_fallthru
      _
    // Predicated region
    $region10: #{_lambda_.1} parent=1 // pred_check
      _
    $region11: #{_lambda_.1} parent=1 // pred_check_branch
      %35 = sbr.rel (0) target = $region13
    $region12: #{_lambda_.1} parent=1 // pred_region
      _
    $region13: #{_lambda_.1} parent=1 // pred_fallthru
      _
    // Predicated region
    $region14: #{_lambda_.1} parent=1 // pred_check
      _
    $region15: #{_lambda_.1} parent=1 // pred_check_branch
      %37 = sbr.rel (0) target = $region17
    $region16: #{_lambda_.1} parent=1 // pred_region
      _
    $region17: #{_lambda_.1} parent=1 // pred_fallthru
      _
    // Predicated region
    $region18: #{_lambda_.1} parent=1 // pred_check
      _
    $region19: #{_lambda_.1} parent=1 // pred_check_branch
      %39 = sbr.rel (0) target = $region21
    $region20: #{_lambda_.1} parent=1 // pred_region
      _
    $region21: #{_lambda_.1} parent=1 // pred_fallthru
      _
    // Predicated region
    $region22: #{_lambda_.1} parent=1 // pred_check
      _
    $region23: #{_lambda_.1} parent=1 // pred_check_branch
      %41 = sbr.rel (0) target = $region25
    $region24: #{_lambda_.1} parent=1 // pred_region
      _
    $region25: #{_lambda_.1} parent=1 // pred_fallthru
      _
    // Predicated region
    $region26: #{_lambda_.1} parent=1 // pred_check
      _
    $region27: #{_lambda_.1} parent=1 // pred_check_branch
      %43 = sbr.rel (0) target = $region29
    $region28: #{_lambda_.1} parent=1 // pred_region
      _
    $region29: #{_lambda_.1} parent=1 // pred_fallthru
      _
    // Predicated region
    $region30: #{_lambda_.1} parent=1 // pred_check
      _
    $region31: #{_lambda_.1} parent=1 // pred_check_branch
      %45 = sbr.rel (0) target = $region33
    $region32: #{_lambda_.1} parent=1 // pred_region
      _
    $region33: #{_lambda_.1} parent=1 // pred_fallthru
      _
    // Predicated region
    $region34: #{_lambda_.1} parent=1 // pred_check
      _
    $region35: #{_lambda_.1} parent=1 // pred_check_branch
      %47 = sbr.rel (0) target = $region37
    $region36: #{_lambda_.1} parent=1 // pred_region
      _
    $region37: #{_lambda_.1} parent=1 // pred_fallthru
      _
    // Predicated region
    $region38: #{_lambda_.1} parent=1 // pred_check
      _
    $region39: #{_lambda_.1} parent=1 // pred_check_branch
      %49 = sbr.rel (0) target = $region41
    $region40: #{_lambda_.1} parent=1 // pred_region
      _
    $region41: #{_lambda_.1} parent=1 // pred_fallthru
      _
    // Predicated region
    $region42: #{_lambda_.1} parent=1 // pred_check
      _
    $region43: #{_lambda_.1} parent=1 // pred_check_branch
      %51 = sbr.rel (0) target = $region45
    $region44: #{_lambda_.1} parent=1 // pred_region
      _
    $region45: #{_lambda_.1} parent=1 // pred_fallthru
      _
    // Predicated region
    $region46: #{_lambda_.1} parent=1 // pred_check
      _
    $region47: #{_lambda_.1} parent=1 // pred_check_branch
      %53 = sbr.rel (0) target = $region49
    $region48: #{_lambda_.1} parent=1 // pred_region
      _
    $region49: #{_lambda_.1} parent=1 // pred_fallthru
      _
    // Predicated region
    $region50: #{_lambda_.1} parent=1 // pred_check
      _
    $region51: #{_lambda_.1} parent=1 // pred_check_branch
      %55 = sbr.rel (0) target = $region53
    $region52: #{_lambda_.1} parent=1 // pred_region
      _
    $region53: #{_lambda_.1} parent=1 // pred_fallthru
      _
    // Predicated region
    $region54: #{_lambda_.1} parent=1 // pred_check
      _
    $region55: #{_lambda_.1} parent=1 // pred_check_branch
      %57 = sbr.rel (0) target = $region57
    $region56: #{_lambda_.1} parent=1 // pred_region
      _
    $region57: #{_lambda_.1} parent=1 // pred_fallthru
      _
    %v61 = vlaneseq
    %v62 = vshrl.u32 %v61, 7
    %v63 = vadd.s32 %v62, 8
    %v64 = vadd.s32 %v62, 16
    %v65 = vadd.s32 %v62, 24
    %vm66 = vcmp.lt.s32.totalorder %v62, 0
    %v67 = vsub.s32 0, %v62
    %v68 = vsel %vm66, %v67, %v62
    %v69 = vshrl.u32 %v68, 4
    %v70 = vand.u32 %v68, 15
    %v71 = vsub.s32 0, %v70
    %v72 = vsel %vm66, %v71, %v70
    %vm73 = vcmp.lt.s32.totalorder %v63, 0
    %v74 = vsub.s32 0, %v63
    %v75 = vsel %vm73, %v74, %v63
    %v76 = vshrl.u32 %v75, 4
    %v77 = vand.u32 %v75, 15
    %v78 = vsub.s32 0, %v77
    %v79 = vsel %vm73, %v78, %v77
    %vm80 = vcmp.lt.s32.totalorder %v64, 0
    %v81 = vsub.s32 0, %v64
    %v82 = vsel %vm80, %v81, %v64
    %v83 = vshrl.u32 %v82, 4
    %v84 = vand.u32 %v82, 15
    %v85 = vsub.s32 0, %v84
    %v86 = vsel %vm80, %v85, %v84
    %vm87 = vcmp.lt.s32.totalorder %v65, 0
    %v88 = vsub.s32 0, %v65
    %v89 = vsel %vm87, %v88, %v65
    %v90 = vshrl.u32 %v89, 4
    %v91 = vand.u32 %v89, 15
    %v92 = vsub.s32 0, %v91
    %v93 = vsel %vm87, %v92, %v91
    %vm94 = vcmp.ne.s32.totalorder %v72, 0
    %vm95 = vcmp.ne.s32.totalorder %v79, 0
    %vm96 = vcmp.ne.s32.totalorder %v86, 0
    %vm97 = vcmp.ne.s32.totalorder %v93, 0
    %vm98 = vcmp.lt.s32.totalorder %v72, 0
    %vm99 = vcmp.lt.s32.totalorder %v79, 0
    %vm100 = vcmp.lt.s32.totalorder %v86, 0
    %vm101 = vcmp.lt.s32.totalorder %v93, 0
    %vm102 = vmand %vm98, %vm94
    %vm103 = vmand %vm99, %vm95
    %vm104 = vmand %vm100, %vm96
    %vm105 = vmand %vm101, %vm97
    %v106 = vadd.s32 %v72, 16
    %v107 = vadd.s32 %v79, 16
    %v108 = vadd.s32 %v86, 16
    %v109 = vadd.s32 %v93, 16
    %v110 = vsel %vm102, %v106, %v72
    %v111 = vsel %vm103, %v107, %v79
    %v112 = vsel %vm104, %v108, %v86
    %v113 = vsel %vm105, %v109, %v93
    %vm114 = vcmp.eq.s32.totalorder %v110, 0
    %vm115 = vcmp.eq.s32.totalorder %v111, 0
    %vm116 = vcmp.eq.s32.totalorder %v112, 0
    %vm117 = vcmp.eq.s32.totalorder %v113, 0
    %vm118 = vcmp.eq.s32.totalorder %v110, 15
    %vm119 = vcmp.eq.s32.totalorder %v111, 15
    %vm120 = vcmp.eq.s32.totalorder %v112, 15
    %vm121 = vcmp.eq.s32.totalorder %v113, 15
    %v122 = vld [vmem:[%s0] sm:$0xf]
    %v123 = vld [vmem:[%s0 + $0x4] sm:$0xf]
    %v124 = vld [vmem:[%s0 + $0x8] sm:$0xf]
    %v125 = vld [vmem:[%s0 + $0xc] sm:$0xf]
    %v126 = vld [vmem:[%s1] sm:$0xf]
    %v127 = vld [vmem:[%s1 + $0x4] sm:$0xf]
    %v128 = vld [vmem:[%s1 + $0x8] sm:$0xf]
    %v129 = vld [vmem:[%s1 + $0xc] sm:$0xf]
    %v130 = vld [vmem:[%s1 + $0x10] sm:$0xf]
    %v131 = vld [vmem:[%s1 + $0x14] sm:$0xf]
    %v132 = vld [vmem:[%s1 + $0x18] sm:$0xf]
    %v133 = vld [vmem:[%s1 + $0x1c] sm:$0xf]
    %v138 = vunpack.c.l.b16 %v122
    %v139 = vunpack.c.l.b16 %v123
    %v140 = vunpack.c.l.b16 %v124
    %v141 = vunpack.c.l.b16 %v125
    %v142 = vpack.c.b16 %v139, %v138
    %v143 = vpack.c.b16 %v141, %v140
    %v152 = vunpack.c.l.b16 %v126
    %v153 = vunpack.c.l.b16 %v127
    %v154 = vunpack.c.l.b16 %v128
    %v155 = vunpack.c.l.b16 %v129
    %v156 = vunpack.c.l.b16 %v130
    %v157 = vunpack.c.l.b16 %v131
    %v158 = vunpack.c.l.b16 %v132
    %v159 = vunpack.c.l.b16 %v133
    %v160 = vpack.c.b16 %v153, %v152
    %v161 = vpack.c.b16 %v155, %v154
    %v162 = vpack.c.b16 %v157, %v156
    %v163 = vpack.c.b16 %v159, %v158
    %vm168 = vcmask 523264
    %v170 = vsel %vm168, %v142, 0
    %v173 = vsel %vm168, %v143, 0
    %175 = vmatpush.bf16.msra.mxu0 0
    %176 = vmatpush.bf16.msra.mxu0 0
    %177 = vmatpush.bf16.msra.mxu0 0
    %178 = vmatpush.bf16.msra.mxu0 0
    %179 = vmatpush.bf16.msra.mxu0 %v163
    %180 = vmatpush.bf16.msra.mxu0 %v162
    %181 = vmatpush.bf16.msra.mxu0 %v161
    %182 = vmatpush.bf16.msra.mxu0 %v160
    %183 = vmatmul.bf16.gmra.mxu0 %v170
    %v184 = vpop.f32.mrf.mxu0
    %v185 = vadd.f32 0.0, %v184
    %v186 = vpop.f32.mrf.mxu0
    %v187 = vadd.f32 0.0, %v186
    %188 = vmatmul.bf16.gmra.mxu0 %v173
    %v189 = vpop.f32.mrf.mxu0
    %v190 = vadd.f32 0.0, %v189
    %v191 = vpop.f32.mrf.mxu0
    %v192 = vadd.f32 0.0, %v191
    %193 = vdwg.mxu0
    %s194 = scalar_lea.vmem %s1, 32
    %v195 = vld [vmem:[%s194] sm:$0xf]
    %v196 = vld [vmem:[%s194 + $0x4] sm:$0xf]
    %v197 = vld [vmem:[%s194 + $0x8] sm:$0xf]
    %v198 = vld [vmem:[%s194 + $0xc] sm:$0xf]
    %v199 = vld [vmem:[%s194 + $0x10] sm:$0xf]
    %v200 = vld [vmem:[%s194 + $0x14] sm:$0xf]
    %v201 = vld [vmem:[%s194 + $0x18] sm:$0xf]
    %v202 = vld [vmem:[%s194 + $0x1c] sm:$0xf]
    %s203 = scalar_lea.vmem %s1, 64
    %v204 = vld [vmem:[%s203] sm:$0xf]
    %v205 = vld [vmem:[%s203 + $0x4] sm:$0xf]
    %v206 = vld [vmem:[%s203 + $0x8] sm:$0xf]
    %v207 = vld [vmem:[%s203 + $0xc] sm:$0xf]
    %v208 = vld [vmem:[%s203 + $0x10] sm:$0xf]
    %v209 = vld [vmem:[%s203 + $0x14] sm:$0xf]
    %v210 = vld [vmem:[%s203 + $0x18] sm:$0xf]
    %v211 = vld [vmem:[%s203 + $0x1c] sm:$0xf]
    %v220 = vunpack.c.l.b16 %v204
    %v221 = vunpack.c.l.b16 %v205
    %v222 = vunpack.c.l.b16 %v206
    %v223 = vunpack.c.l.b16 %v207
    %v224 = vunpack.c.l.b16 %v208
    %v225 = vunpack.c.l.b16 %v209
    %v226 = vunpack.c.l.b16 %v210
    %v227 = vunpack.c.l.b16 %v211
    %v228 = vpack.c.b16 %v221, %v220
    %v229 = vpack.c.b16 %v223, %v222
    %v230 = vpack.c.b16 %v225, %v224
    %v231 = vpack.c.b16 %v227, %v226
    %236 = vmatpush.bf16.msra.mxu0 0
    %237 = vmatpush.bf16.msra.mxu0 0
    %238 = vmatpush.bf16.msra.mxu0 0
    %239 = vmatpush.bf16.msra.mxu0 0
    %240 = vmatpush.bf16.msra.mxu0 %v231
    %241 = vmatpush.bf16.msra.mxu0 %v230
    %242 = vmatpush.bf16.msra.mxu0 %v229
    %243 = vmatpush.bf16.msra.mxu0 %v228
    %244 = vmatmul.bf16.gmra.mxu0 %v170
    %v245 = vpop.f32.mrf.mxu0
    %v246 = vadd.f32 0.0, %v245
    %v247 = vpop.f32.mrf.mxu0
    %v248 = vadd.f32 0.0, %v247
    %249 = vmatmul.bf16.gmra.mxu0 %v173
    %v250 = vpop.f32.mrf.mxu0
    %v251 = vadd.f32 0.0, %v250
    %v252 = vpop.f32.mrf.mxu0
    %v253 = vadd.f32 0.0, %v252
    %254 = vdwg.mxu0
    %vm259 = vcmask 1040384
    %v260 = vrot.slane %v185, 7
    %v261 = vrot.slane %v187, 7
    %v262 = vsel %vm259, %v260, %v261
    %v263 = vrot.slane %v190, 7
    %v264 = vsel %vm259, %v261, %v263
    %v265 = vrot.slane %v192, 7
    %v266 = vsel %vm259, %v263, %v265
    %v271 = vsel %vm259, 0.0, %v260
    %v272 = vsel %vm114, 1, 0
    %v273 = vsel %vm115, 1, 0
    %v274 = vsel %vm116, 1, 0
    %v275 = vsel %vm117, 1, 0
    %vm276 = vcmp.eq.s32.totalorder %v272, 1
    %vm277 = vcmp.eq.s32.totalorder %v273, 1
    %vm278 = vcmp.eq.s32.totalorder %v274, 1
    %vm279 = vcmp.eq.s32.totalorder %v275, 1
    %v280 = vsel %vm276, 0.0, %v271
    %v281 = vsel %vm277, 0.0, %v262
    %v282 = vsel %vm278, 0.0, %v264
    %v283 = vsel %vm279, 0.0, %v266
    %v292 = vunpack.c.l.b16 %v195
    %v293 = vunpack.c.l.b16 %v196
    %v294 = vunpack.c.l.b16 %v197
    %v295 = vunpack.c.l.b16 %v198
    %v296 = vunpack.c.l.b16 %v199
    %v297 = vunpack.c.l.b16 %v200
    %v298 = vunpack.c.l.b16 %v201
    %v299 = vunpack.c.l.b16 %v202
    %v300 = vpack.c.b16 %v293, %v292
    %v301 = vpack.c.b16 %v295, %v294
    %v302 = vpack.c.b16 %v297, %v296
    %v303 = vpack.c.b16 %v299, %v298
    %308 = vmatpush.bf16.msra.mxu0 0
    %309 = vmatpush.bf16.msra.mxu0 0
    %310 = vmatpush.bf16.msra.mxu0 0
    %311 = vmatpush.bf16.msra.mxu0 0
    %312 = vmatpush.bf16.msra.mxu0 %v303
    %313 = vmatpush.bf16.msra.mxu0 %v302
    %314 = vmatpush.bf16.msra.mxu0 %v301
    %315 = vmatpush.bf16.msra.mxu0 %v300
    %316 = vmatmul.bf16.gmra.mxu0 %v170
    %v317 = vpop.f32.mrf.mxu0
    %v318 = vadd.f32 %v280, %v317
    %v319 = vpop.f32.mrf.mxu0
    %v320 = vadd.f32 %v281, %v319
    %321 = vmatmul.bf16.gmra.mxu0 %v173
    %v322 = vpop.f32.mrf.mxu0
    %v323 = vadd.f32 %v282, %v322
    %v324 = vpop.f32.mrf.mxu0
    %v325 = vadd.f32 %v283, %v324
    %326 = vdwg.mxu0
    %vm331 = vcmask 1046528
    %v332 = vrot.slane %v246, 1
    %v333 = vrot.slane %v248, 1
    %v334 = vsel %vm331, %v332, %v333
    %v335 = vrot.slane %v251, 1
    %v336 = vsel %vm331, %v333, %v335
    %v337 = vrot.slane %v253, 1
    %v338 = vsel %vm331, %v335, %v337
    %v343 = vsel %vm331, %v337, 0.0
    %v344 = vsel %vm118, 1, 0
    %v345 = vsel %vm119, 1, 0
    %v346 = vsel %vm120, 1, 0
    %v347 = vsel %vm121, 1, 0
    %vm348 = vcmp.eq.s32.totalorder %v344, 1
    %vm349 = vcmp.eq.s32.totalorder %v345, 1
    %vm350 = vcmp.eq.s32.totalorder %v346, 1
    %vm351 = vcmp.eq.s32.totalorder %v347, 1
    %v352 = vsel %vm348, 0.0, %v334
    %v353 = vsel %vm349, 0.0, %v336
    %v354 = vsel %vm350, 0.0, %v338
    %v355 = vsel %vm351, 0.0, %v343
    %v356 = vadd.f32 %v318, %v352
    %v357 = vadd.f32 %v320, %v353
    %v358 = vadd.f32 %v323, %v354
    %v359 = vadd.f32 %v325, %v355
    %v360 = vadd.f32 %v356, %v357
    %v361 = vadd.f32 %v360, %v358
    %v362 = vadd.f32 %v361, %v359
    %v363 = vrot.slane %v362, 4
    %v364 = vadd.f32 %v362, %v363
    %v365 = vrot.slane %v364, 2
    %v366 = vadd.f32 %v364, %v365
    %v367 = vrot.slane %v366, 1
    %v368 = vadd.f32 %v366, %v367
    %370 = vrot.lane.b32.xlu0 %v368, 120
    %v371 = vpop.permute.xlu0 %370
    %vm373 = vcmask 982016
    %v374 = vadd.f32 %v368, %v371
    %376 = vrot.lane.b32.xlu0 %v374, 112
    %v377 = vpop.permute.xlu0 %376
    %v379 = vadd.f32 %v374, %v377
    %381 = vrot.lane.b32.xlu0 %v379, 96
    %v382 = vpop.permute.xlu0 %381
    %v384 = vadd.f32 %v379, %v382
    %386 = vrot.lane.b32.xlu0 %v384, 64
    %v387 = vpop.permute.xlu0 %386
    %v389 = vadd.f32 %v384, %v387
    %v390 = vmul.f32 %v389, 0.001953125
    %v391 = vperm.slane %v390, 0
    %v392 = vsub.f32 %v356, %v391
    %v393 = vsub.f32 %v357, %v391
    %v394 = vsub.f32 %v358, %v391
    %v395 = vsub.f32 %v359, %v391
    %v396 = vmul.f32 %v392, %v392
    %v397 = vmul.f32 %v393, %v393
    %v398 = vmul.f32 %v394, %v394
    %v399 = vmul.f32 %v395, %v395
    %v400 = vadd.f32 %v396, %v397
    %v401 = vadd.f32 %v400, %v398
    %v402 = vadd.f32 %v401, %v399
    %v403 = vrot.slane %v402, 4
    %v404 = vadd.f32 %v402, %v403
    %v405 = vrot.slane %v404, 2
    %v406 = vadd.f32 %v404, %v405
    %v407 = vrot.slane %v406, 1
    %v408 = vadd.f32 %v406, %v407
    %410 = vrot.lane.b32.xlu0 %v408, 120
    %v411 = vpop.permute.xlu0 %410
    %v413 = vadd.f32 %v408, %v411
    %415 = vrot.lane.b32.xlu0 %v413, 112
    %v416 = vpop.permute.xlu0 %415
    %v418 = vadd.f32 %v413, %v416
    %420 = vrot.lane.b32.xlu0 %v418, 96
    %v421 = vpop.permute.xlu0 %420
    %v423 = vadd.f32 %v418, %v421
    %425 = vrot.lane.b32.xlu0 %v423, 64
    %v426 = vpop.permute.xlu0 %425
    %v428 = vadd.f32 %v423, %v426
    %v429 = vmul.f32 %v428, 0.001953125
    %v430 = vadd.f32 %v429, 1e-05
    %v431 = vrsqrt.pop %v430
    %v432 = vmul.f32 %v431, %v430
    %v433 = vmul.f32 %v432, %v431
    %v434 = vmul.f32 0.5, %v433
    %v435 = vsub.f32 1.5, %v434
    %v436 = vmul.f32 %v431, %v435
    %vm437 = vweird.f32 %v430
    %vm438 = vweird.f32 %v431
    %vm439 = vmor %vm437, %vm438
    %v440 = vsel %vm439, %v431, %v436
    %v441 = vperm.slane %v440, 0
    %v442 = vmul.f32 %v392, %v441
    %v443 = vmul.f32 %v393, %v441
    %v444 = vmul.f32 %v394, %v441
    %v445 = vmul.f32 %v395, %v441
    %v446 = vld [vmem:[%s10] sm:$0xff]
    %v447 = vld [vmem:[%s10 + $0x8] sm:$0xff]
    %v448 = vld [vmem:[%s10 + $0x10] sm:$0xff]
    %v449 = vld [vmem:[%s10 + $0x18] sm:$0xff]
    %v450 = vadd.f32 %v442, %v446
    %v451 = vadd.f32 %v443, %v447
    %v452 = vadd.f32 %v444, %v448
    %v453 = vadd.f32 %v445, %v449
    %v454 = vpack.c.bf16 %v451, %v450
    %v455 = vpack.c.bf16 %v453, %v452
    %v456 = vld [vmem:[%s2] sm:$0xf]
    %v457 = vld [vmem:[%s2 + $0x4] sm:$0xf]
    %v458 = vld [vmem:[%s2 + $0x8] sm:$0xf]
    %v459 = vld [vmem:[%s2 + $0xc] sm:$0xf]
    %v460 = vld [vmem:[%s2 + $0x10] sm:$0xf]
    %v461 = vld [vmem:[%s2 + $0x14] sm:$0xf]
    %v462 = vld [vmem:[%s2 + $0x18] sm:$0xf]
    %v463 = vld [vmem:[%s2 + $0x1c] sm:$0xf]
    %v464 = vld [vmem:[%s2 + $0x20] sm:$0xf]
    %v465 = vld [vmem:[%s2 + $0x24] sm:$0xf]
    %v466 = vld [vmem:[%s2 + $0x28] sm:$0xf]
    %v467 = vld [vmem:[%s2 + $0x2c] sm:$0xf]
    %v468 = vld [vmem:[%s2 + $0x30] sm:$0xf]
    %v469 = vld [vmem:[%s2 + $0x34] sm:$0xf]
    %v470 = vld [vmem:[%s2 + $0x38] sm:$0xf]
    %v471 = vld [vmem:[%s2 + $0x3c] sm:$0xf]
    %v488 = vunpack.c.l.b16 %v456
    %v489 = vunpack.c.l.b16 %v457
    %v490 = vunpack.c.l.b16 %v458
    %v491 = vunpack.c.l.b16 %v459
    %v492 = vunpack.c.l.b16 %v460
    %v493 = vunpack.c.l.b16 %v461
    %v494 = vunpack.c.l.b16 %v462
    %v495 = vunpack.c.l.b16 %v463
    %v496 = vunpack.c.l.b16 %v464
    %v497 = vunpack.c.l.b16 %v465
    %v498 = vunpack.c.l.b16 %v466
    %v499 = vunpack.c.l.b16 %v467
    %v500 = vunpack.c.l.b16 %v468
    %v501 = vunpack.c.l.b16 %v469
    %v502 = vunpack.c.l.b16 %v470
    %v503 = vunpack.c.l.b16 %v471
    %v504 = vpack.c.b16 %v489, %v488
    %v505 = vpack.c.b16 %v491, %v490
    %v506 = vpack.c.b16 %v493, %v492
    %v507 = vpack.c.b16 %v495, %v494
    %v508 = vpack.c.b16 %v497, %v496
    %v509 = vpack.c.b16 %v499, %v498
    %v510 = vpack.c.b16 %v501, %v500
    %v511 = vpack.c.b16 %v503, %v502
    %520 = vmatpush.bf16.msra.mxu0 %v511
    %521 = vmatpush.bf16.msra.mxu0 %v510
    %522 = vmatpush.bf16.msra.mxu0 %v509
    %523 = vmatpush.bf16.msra.mxu0 %v508
    %524 = vmatpush.bf16.msra.mxu0 %v507
    %525 = vmatpush.bf16.msra.mxu0 %v506
    %526 = vmatpush.bf16.msra.mxu0 %v505
    %527 = vmatpush.bf16.msra.mxu0 %v504
    %528 = vmatmul.bf16.gmra.mxu0 %v454
    %v529 = vpop.f32.mrf.mxu0
    %v530 = vadd.f32 0.0, %v529
    %v531 = vpop.f32.mrf.mxu0
    %v532 = vadd.f32 0.0, %v531
    %533 = vmatmul.bf16.gmra.mxu0 %v455
    %v534 = vpop.f32.mrf.mxu0
    %v535 = vadd.f32 0.0, %v534
    %v536 = vpop.f32.mrf.mxu0
    %v537 = vadd.f32 0.0, %v536
    %538 = vdwg.mxu0
    %s539 = scalar_lea.vmem %s2, 64
    %v540 = vld [vmem:[%s539] sm:$0xf]
    %v541 = vld [vmem:[%s539 + $0x4] sm:$0xf]
    %v542 = vld [vmem:[%s539 + $0x8] sm:$0xf]
    %v543 = vld [vmem:[%s539 + $0xc] sm:$0xf]
    %v544 = vld [vmem:[%s539 + $0x10] sm:$0xf]
    %v545 = vld [vmem:[%s539 + $0x14] sm:$0xf]
    %v546 = vld [vmem:[%s539 + $0x18] sm:$0xf]
    %v547 = vld [vmem:[%s539 + $0x1c] sm:$0xf]
    %v548 = vld [vmem:[%s539 + $0x20] sm:$0xf]
    %v549 = vld [vmem:[%s539 + $0x24] sm:$0xf]
    %v550 = vld [vmem:[%s539 + $0x28] sm:$0xf]
    %v551 = vld [vmem:[%s539 + $0x2c] sm:$0xf]
    %v552 = vld [vmem:[%s539 + $0x30] sm:$0xf]
    %v553 = vld [vmem:[%s539 + $0x34] sm:$0xf]
    %v554 = vld [vmem:[%s539 + $0x38] sm:$0xf]
    %v555 = vld [vmem:[%s539 + $0x3c] sm:$0xf]
    %s556 = scalar_lea.vmem %s2, 128
    %v557 = vld [vmem:[%s556] sm:$0xf]
    %v558 = vld [vmem:[%s556 + $0x4] sm:$0xf]
    %v559 = vld [vmem:[%s556 + $0x8] sm:$0xf]
    %v560 = vld [vmem:[%s556 + $0xc] sm:$0xf]
    %v561 = vld [vmem:[%s556 + $0x10] sm:$0xf]
    %v562 = vld [vmem:[%s556 + $0x14] sm:$0xf]
    %v563 = vld [vmem:[%s556 + $0x18] sm:$0xf]
    %v564 = vld [vmem:[%s556 + $0x1c] sm:$0xf]
    %v565 = vld [vmem:[%s556 + $0x20] sm:$0xf]
    %v566 = vld [vmem:[%s556 + $0x24] sm:$0xf]
    %v567 = vld [vmem:[%s556 + $0x28] sm:$0xf]
    %v568 = vld [vmem:[%s556 + $0x2c] sm:$0xf]
    %v569 = vld [vmem:[%s556 + $0x30] sm:$0xf]
    %v570 = vld [vmem:[%s556 + $0x34] sm:$0xf]
    %v571 = vld [vmem:[%s556 + $0x38] sm:$0xf]
    %v572 = vld [vmem:[%s556 + $0x3c] sm:$0xf]
    %v589 = vunpack.c.l.b16 %v557
    %v590 = vunpack.c.l.b16 %v558
    %v591 = vunpack.c.l.b16 %v559
    %v592 = vunpack.c.l.b16 %v560
    %v593 = vunpack.c.l.b16 %v561
    %v594 = vunpack.c.l.b16 %v562
    %v595 = vunpack.c.l.b16 %v563
    %v596 = vunpack.c.l.b16 %v564
    %v597 = vunpack.c.l.b16 %v565
    %v598 = vunpack.c.l.b16 %v566
    %v599 = vunpack.c.l.b16 %v567
    %v600 = vunpack.c.l.b16 %v568
    %v601 = vunpack.c.l.b16 %v569
    %v602 = vunpack.c.l.b16 %v570
    %v603 = vunpack.c.l.b16 %v571
    %v604 = vunpack.c.l.b16 %v572
    %v605 = vpack.c.b16 %v590, %v589
    %v606 = vpack.c.b16 %v592, %v591
    %v607 = vpack.c.b16 %v594, %v593
    %v608 = vpack.c.b16 %v596, %v595
    %v609 = vpack.c.b16 %v598, %v597
    %v610 = vpack.c.b16 %v600, %v599
    %v611 = vpack.c.b16 %v602, %v601
    %v612 = vpack.c.b16 %v604, %v603
    %621 = vmatpush.bf16.msra.mxu0 %v612
    %622 = vmatpush.bf16.msra.mxu0 %v611
    %623 = vmatpush.bf16.msra.mxu0 %v610
    %624 = vmatpush.bf16.msra.mxu0 %v609
    %625 = vmatpush.bf16.msra.mxu0 %v608
    %626 = vmatpush.bf16.msra.mxu0 %v607
    %627 = vmatpush.bf16.msra.mxu0 %v606
    %628 = vmatpush.bf16.msra.mxu0 %v605
    %629 = vmatmul.bf16.gmra.mxu0 %v454
    %v630 = vpop.f32.mrf.mxu0
    %v631 = vadd.f32 0.0, %v630
    %v632 = vpop.f32.mrf.mxu0
    %v633 = vadd.f32 0.0, %v632
    %634 = vmatmul.bf16.gmra.mxu0 %v455
    %v635 = vpop.f32.mrf.mxu0
    %v636 = vadd.f32 0.0, %v635
    %v637 = vpop.f32.mrf.mxu0
    %v638 = vadd.f32 0.0, %v637
    %639 = vdwg.mxu0
    %v644 = vrot.slane %v530, 7
    %v645 = vrot.slane %v532, 7
    %v646 = vsel %vm259, %v644, %v645
    %v647 = vrot.slane %v535, 7
    %v648 = vsel %vm259, %v645, %v647
    %v649 = vrot.slane %v537, 7
    %v650 = vsel %vm259, %v647, %v649
    %v655 = vsel %vm259, 0.0, %v644
    %v656 = vsel %vm276, 0.0, %v655
    %v657 = vsel %vm277, 0.0, %v646
    %v658 = vsel %vm278, 0.0, %v648
    %v659 = vsel %vm279, 0.0, %v650
    %v676 = vunpack.c.l.b16 %v540
    %v677 = vunpack.c.l.b16 %v541
    %v678 = vunpack.c.l.b16 %v542
    %v679 = vunpack.c.l.b16 %v543
    %v680 = vunpack.c.l.b16 %v544
    %v681 = vunpack.c.l.b16 %v545
    %v682 = vunpack.c.l.b16 %v546
    %v683 = vunpack.c.l.b16 %v547
    %v684 = vunpack.c.l.b16 %v548
    %v685 = vunpack.c.l.b16 %v549
    %v686 = vunpack.c.l.b16 %v550
    %v687 = vunpack.c.l.b16 %v551
    %v688 = vunpack.c.l.b16 %v552
    %v689 = vunpack.c.l.b16 %v553
    %v690 = vunpack.c.l.b16 %v554
    %v691 = vunpack.c.l.b16 %v555
    %v692 = vpack.c.b16 %v677, %v676
    %v693 = vpack.c.b16 %v679, %v678
    %v694 = vpack.c.b16 %v681, %v680
    %v695 = vpack.c.b16 %v683, %v682
    %v696 = vpack.c.b16 %v685, %v684
    %v697 = vpack.c.b16 %v687, %v686
    %v698 = vpack.c.b16 %v689, %v688
    %v699 = vpack.c.b16 %v691, %v690
    %708 = vmatpush.bf16.msra.mxu0 %v699
    %709 = vmatpush.bf16.msra.mxu0 %v698
    %710 = vmatpush.bf16.msra.mxu0 %v697
    %711 = vmatpush.bf16.msra.mxu0 %v696
    %712 = vmatpush.bf16.msra.mxu0 %v695
    %713 = vmatpush.bf16.msra.mxu0 %v694
    %714 = vmatpush.bf16.msra.mxu0 %v693
    %715 = vmatpush.bf16.msra.mxu0 %v692
    %716 = vmatmul.bf16.gmra.mxu0 %v454
    %v717 = vpop.f32.mrf.mxu0
    %v718 = vadd.f32 %v656, %v717
    %v719 = vpop.f32.mrf.mxu0
    %v720 = vadd.f32 %v657, %v719
    %721 = vmatmul.bf16.gmra.mxu0 %v455
    %v722 = vpop.f32.mrf.mxu0
    %v723 = vadd.f32 %v658, %v722
    %v724 = vpop.f32.mrf.mxu0
    %v725 = vadd.f32 %v659, %v724
    %726 = vdwg.mxu0
    %v731 = vrot.slane %v631, 1
    %v732 = vrot.slane %v633, 1
    %v733 = vsel %vm331, %v731, %v732
    %v734 = vrot.slane %v636, 1
    %v735 = vsel %vm331, %v732, %v734
    %v736 = vrot.slane %v638, 1
    %v737 = vsel %vm331, %v734, %v736
    %v742 = vsel %vm331, %v736, 0.0
    %v743 = vsel %vm348, 0.0, %v733
    %v744 = vsel %vm349, 0.0, %v735
    %v745 = vsel %vm350, 0.0, %v737
    %v746 = vsel %vm351, 0.0, %v742
    %v747 = vadd.f32 %v718, %v743
    %v748 = vadd.f32 %v720, %v744
    %v749 = vadd.f32 %v723, %v745
    %v750 = vadd.f32 %v725, %v746
    %v751 = vadd.f32 %v747, %v748
    %v752 = vadd.f32 %v751, %v749
    %v753 = vadd.f32 %v752, %v750
    %v754 = vrot.slane %v753, 4
    %v755 = vadd.f32 %v753, %v754
    %v756 = vrot.slane %v755, 2
    %v757 = vadd.f32 %v755, %v756
    %v758 = vrot.slane %v757, 1
    %v759 = vadd.f32 %v757, %v758
    %761 = vrot.lane.b32.xlu0 %v759, 120
    %v762 = vpop.permute.xlu0 %761
    %v764 = vadd.f32 %v759, %v762
    %766 = vrot.lane.b32.xlu0 %v764, 112
    %v767 = vpop.permute.xlu0 %766
    %v769 = vadd.f32 %v764, %v767
    %771 = vrot.lane.b32.xlu0 %v769, 96
    %v772 = vpop.permute.xlu0 %771
    %v774 = vadd.f32 %v769, %v772
    %776 = vrot.lane.b32.xlu0 %v774, 64
    %v777 = vpop.permute.xlu0 %776
    %v779 = vadd.f32 %v774, %v777
    %v780 = vmul.f32 %v779, 0.001953125
    %v781 = vperm.slane %v780, 0
    %v782 = vsub.f32 %v747, %v781
    %v783 = vsub.f32 %v748, %v781
    %v784 = vsub.f32 %v749, %v781
    %v785 = vsub.f32 %v750, %v781
    %v786 = vmul.f32 %v782, %v782
    %v787 = vmul.f32 %v783, %v783
    %v788 = vmul.f32 %v784, %v784
    %v789 = vmul.f32 %v785, %v785
    %v790 = vadd.f32 %v786, %v787
    %v791 = vadd.f32 %v790, %v788
    %v792 = vadd.f32 %v791, %v789
    %v793 = vrot.slane %v792, 4
    %v794 = vadd.f32 %v792, %v793
    %v795 = vrot.slane %v794, 2
    %v796 = vadd.f32 %v794, %v795
    %v797 = vrot.slane %v796, 1
    %v798 = vadd.f32 %v796, %v797
    %800 = vrot.lane.b32.xlu0 %v798, 120
    %v801 = vpop.permute.xlu0 %800
    %v803 = vadd.f32 %v798, %v801
    %805 = vrot.lane.b32.xlu0 %v803, 112
    %v806 = vpop.permute.xlu0 %805
    %v808 = vadd.f32 %v803, %v806
    %810 = vrot.lane.b32.xlu0 %v808, 96
    %v811 = vpop.permute.xlu0 %810
    %v813 = vadd.f32 %v808, %v811
    %815 = vrot.lane.b32.xlu0 %v813, 64
    %v816 = vpop.permute.xlu0 %815
    %v818 = vadd.f32 %v813, %v816
    %v819 = vmul.f32 %v818, 0.001953125
    %v820 = vadd.f32 %v819, 1e-05
    %v821 = vrsqrt.pop %v820
    %v822 = vmul.f32 %v821, %v820
    %v823 = vmul.f32 %v822, %v821
    %v824 = vmul.f32 0.5, %v823
    %v825 = vsub.f32 1.5, %v824
    %v826 = vmul.f32 %v821, %v825
    %vm827 = vweird.f32 %v820
    %vm828 = vweird.f32 %v821
    %vm829 = vmor %vm827, %vm828
    %v830 = vsel %vm829, %v821, %v826
    %v831 = vperm.slane %v830, 0
    %v832 = vmul.f32 %v782, %v831
    %v833 = vmul.f32 %v783, %v831
    %v834 = vmul.f32 %v784, %v831
    %v835 = vmul.f32 %v785, %v831
    %v836 = vxor.u32 %v832, 2147483648
    %v837 = vxor.u32 %v833, 2147483648
    %v838 = vxor.u32 %v834, 2147483648
    %v839 = vxor.u32 %v835, 2147483648
    %v840 = vmul.f32 %v836, 1.442695
    %v841 = vpow.pop %v840
    %v842 = vmul.f32 %v837, 1.442695
    %v843 = vpow.pop %v842
    %v844 = vmul.f32 %v838, 1.442695
    %v845 = vpow.pop %v844
    %v846 = vmul.f32 %v839, 1.442695
    %v847 = vpow.pop %v846
    %v848 = vadd.f32 %v841, 1.0
    %v849 = vadd.f32 %v843, 1.0
    %v850 = vadd.f32 %v845, 1.0
    %v851 = vadd.f32 %v847, 1.0
    %v852 = vrcp.pop %v848
    %v853 = vmul.f32 %v848, %v852
    %v854 = vsub.f32 1.0, %v853
    %v855 = vmul.f32 %v852, %v854
    %v856 = vadd.f32 %v852, %v855
    %vm857 = vweird.f32 %v848
    %vm858 = vweird.f32 %v852
    %vm859 = vmor %vm857, %vm858
    %v860 = vsel %vm859, %v852, %v856
    %v861 = vand.u32 2147483647, %v848
    %vm862 = vcmp.eq.f32.partialorder %v861, 8.507059e+37
    %v863 = vand.u32 %v848, 2147483648
    %v864 = vor.u32 1.1754944e-38, %v863
    %v865 = vsel %vm862, %v864, %v860
    %v866 = vmul.f32 1.0, %v865
    %v867 = vrcp.pop %v849
    %v868 = vmul.f32 %v849, %v867
    %v869 = vsub.f32 1.0, %v868
    %v870 = vmul.f32 %v867, %v869
    %v871 = vadd.f32 %v867, %v870
    %vm872 = vweird.f32 %v849
    %vm873 = vweird.f32 %v867
    %vm874 = vmor %vm872, %vm873
    %v875 = vsel %vm874, %v867, %v871
    %v876 = vand.u32 2147483647, %v849
    %vm877 = vcmp.eq.f32.partialorder %v876, 8.507059e+37
    %v878 = vand.u32 %v849, 2147483648
    %v879 = vor.u32 1.1754944e-38, %v878
    %v880 = vsel %vm877, %v879, %v875
    %v881 = vmul.f32 1.0, %v880
    %v882 = vrcp.pop %v850
    %v883 = vmul.f32 %v850, %v882
    %v884 = vsub.f32 1.0, %v883
    %v885 = vmul.f32 %v882, %v884
    %v886 = vadd.f32 %v882, %v885
    %vm887 = vweird.f32 %v850
    %vm888 = vweird.f32 %v882
    %vm889 = vmor %vm887, %vm888
    %v890 = vsel %vm889, %v882, %v886
    %v891 = vand.u32 2147483647, %v850
    %vm892 = vcmp.eq.f32.partialorder %v891, 8.507059e+37
    %v893 = vand.u32 %v850, 2147483648
    %v894 = vor.u32 1.1754944e-38, %v893
    %v895 = vsel %vm892, %v894, %v890
    %v896 = vmul.f32 1.0, %v895
    %v897 = vrcp.pop %v851
    %v898 = vmul.f32 %v851, %v897
    %v899 = vsub.f32 1.0, %v898
    %v900 = vmul.f32 %v897, %v899
    %v901 = vadd.f32 %v897, %v900
    %vm902 = vweird.f32 %v851
    %vm903 = vweird.f32 %v897
    %vm904 = vmor %vm902, %vm903
    %v905 = vsel %vm904, %v897, %v901
    %v906 = vand.u32 2147483647, %v851
    %vm907 = vcmp.eq.f32.partialorder %v906, 8.507059e+37
    %v908 = vand.u32 %v851, 2147483648
    %v909 = vor.u32 1.1754944e-38, %v908
    %v910 = vsel %vm907, %v909, %v905
    %v911 = vmul.f32 1.0, %v910
    %v912 = vsub.f32 %v442, %v446
    %v913 = vsub.f32 %v443, %v447
    %v914 = vsub.f32 %v444, %v448
    %v915 = vsub.f32 %v445, %v449
    %v916 = vmul.f32 %v912, %v866
    %v917 = vmul.f32 %v913, %v881
    %v918 = vmul.f32 %v914, %v896
    %v919 = vmul.f32 %v915, %v911
    %v920 = vadd.f32 %v446, %v916
    %v921 = vadd.f32 %v447, %v917
    %v922 = vadd.f32 %v448, %v918
    %v923 = vadd.f32 %v449, %v919
    %vm924 = vcmp.gt.f32.partialorder %v920, 1.0
    %vm925 = vcmp.gt.f32.partialorder %v921, 1.0
    %vm926 = vcmp.gt.f32.partialorder %v922, 1.0
    %vm927 = vcmp.gt.f32.partialorder %v923, 1.0
    %v928 = vsel %vm924, 1, 0
    %v929 = vsel %vm925, 1, 0
    %v930 = vsel %vm926, 1, 0
    %v931 = vsel %vm927, 1, 0
    %v932 = vcvt.s32.f32 %v928
    %v933 = vcvt.s32.f32 %v929
    %v934 = vcvt.s32.f32 %v930
    %v935 = vcvt.s32.f32 %v931
    %v936 = vsub.f32 1.0, %v932
    %v937 = vsub.f32 1.0, %v933
    %v938 = vsub.f32 1.0, %v934
    %v939 = vsub.f32 1.0, %v935
    %v940 = vmul.f32 %v936, %v920
    %v941 = vmul.f32 %v937, %v921
    %v942 = vmul.f32 %v938, %v922
    %v943 = vmul.f32 %v939, %v923
    %944 = vst [vmem:[%s14] sm:$0xff] %v940
    %945 = vst [vmem:[%s14 + $0x8] sm:$0xff] %v941
    %946 = vst [vmem:[%s14 + $0x10] sm:$0xff] %v942
    %947 = vst [vmem:[%s14 + $0x18] sm:$0xff] %v943
    %v948 = vpack.c.bf16 %v932, %v932
    %v949 = vpack.c.bf16 %v933, %v933
    %v950 = vpack.c.bf16 %v934, %v934
    %v951 = vpack.c.bf16 %v935, %v935
    %952 = vst [vmem:[%s18] sm:$0xf] %v948
    %953 = vst [vmem:[%s18 + $0x4] sm:$0xf] %v949
    %954 = vst [vmem:[%s18 + $0x8] sm:$0xf] %v950
    %955 = vst [vmem:[%s18 + $0xc] sm:$0xf] %v951
    %v956 = vadd.f32 %v932, %v933
    %v957 = vadd.f32 %v956, %v934
    %v958 = vadd.f32 %v957, %v935
    %v959 = vrot.slane %v958, 4
    %v960 = vadd.f32 %v958, %v959
    %v961 = vrot.slane %v960, 2
    %v962 = vadd.f32 %v960, %v961
    %v963 = vrot.slane %v962, 1
    %v964 = vadd.f32 %v962, %v963
    %965 = vadd.xlane.f32.xlu0 %v964
    %v966 = vpop.xlane.xlu0 %965
    %v967 = vld [vmem:[%s3] sm:$0xf]
    %v968 = vld [vmem:[%s3 + $0x4] sm:$0xf]
    %v969 = vld [vmem:[%s3 + $0x8] sm:$0xf]
    %v970 = vld [vmem:[%s3 + $0xc] sm:$0xf]
    %v971 = vld [vmem:[%s3 + $0x10] sm:$0xf]
    %v972 = vld [vmem:[%s3 + $0x14] sm:$0xf]
    %v973 = vld [vmem:[%s3 + $0x18] sm:$0xf]
    %v974 = vld [vmem:[%s3 + $0x1c] sm:$0xf]
    %v975 = vld [vmem:[%s3 + $0x20] sm:$0xf]
    %v976 = vld [vmem:[%s3 + $0x24] sm:$0xf]
    %v977 = vld [vmem:[%s3 + $0x28] sm:$0xf]
    %v978 = vld [vmem:[%s3 + $0x2c] sm:$0xf]
    %v979 = vld [vmem:[%s3 + $0x30] sm:$0xf]
    %v980 = vld [vmem:[%s3 + $0x34] sm:$0xf]
    %v981 = vld [vmem:[%s3 + $0x38] sm:$0xf]
    %v982 = vld [vmem:[%s3 + $0x3c] sm:$0xf]
    %v987 = vunpack.c.l.b16 %v948
    %v988 = vunpack.c.l.b16 %v949
    %v989 = vunpack.c.l.b16 %v950
    %v990 = vunpack.c.l.b16 %v951
    %v991 = vpack.c.b16 %v988, %v987
    %v992 = vpack.c.b16 %v990, %v989
    %v1011 = vunpack.c.l.b16 %v967
    %v1012 = vunpack.c.l.b16 %v968
    %v1013 = vunpack.c.l.b16 %v969
    %v1014 = vunpack.c.l.b16 %v970
    %v1015 = vunpack.c.l.b16 %v971
    %v1016 = vunpack.c.l.b16 %v972
    %v1017 = vunpack.c.l.b16 %v973
    %v1018 = vunpack.c.l.b16 %v974
    %v1019 = vunpack.c.l.b16 %v975
    %v1020 = vunpack.c.l.b16 %v976
    %v1021 = vunpack.c.l.b16 %v977
    %v1022 = vunpack.c.l.b16 %v978
    %v1023 = vunpack.c.l.b16 %v979
    %v1024 = vunpack.c.l.b16 %v980
    %v1025 = vunpack.c.l.b16 %v981
    %v1026 = vunpack.c.l.b16 %v982
    %v1027 = vpack.c.b16 %v1012, %v1011
    %v1028 = vpack.c.b16 %v1014, %v1013
    %v1029 = vpack.c.b16 %v1016, %v1015
    %v1030 = vpack.c.b16 %v1018, %v1017
    %v1031 = vpack.c.b16 %v1020, %v1019
    %v1032 = vpack.c.b16 %v1022, %v1021
    %v1033 = vpack.c.b16 %v1024, %v1023
    %v1034 = vpack.c.b16 %v1026, %v1025
    %1043 = vmatpush.bf16.msra.mxu0 %v1034
    %1044 = vmatpush.bf16.msra.mxu0 %v1033
    %1045 = vmatpush.bf16.msra.mxu0 %v1032
    %1046 = vmatpush.bf16.msra.mxu0 %v1031
    %1047 = vmatpush.bf16.msra.mxu0 %v1030
    %1048 = vmatpush.bf16.msra.mxu0 %v1029
    %1049 = vmatpush.bf16.msra.mxu0 %v1028
    %1050 = vmatpush.bf16.msra.mxu0 %v1027
    %1051 = vmatmul.bf16.gmra.mxu0 %v991
    %v1052 = vpop.f32.mrf.mxu0
    %v1053 = vadd.f32 0.0, %v1052
    %v1054 = vpop.f32.mrf.mxu0
    %v1055 = vadd.f32 0.0, %v1054
    %1056 = vmatmul.bf16.gmra.mxu0 %v992
    %v1057 = vpop.f32.mrf.mxu0
    %v1058 = vadd.f32 0.0, %v1057
    %v1059 = vpop.f32.mrf.mxu0
    %v1060 = vadd.f32 0.0, %v1059
    %1061 = vdwg.mxu0
    %s1062 = scalar_lea.vmem %s3, 64
    %v1063 = vld [vmem:[%s1062] sm:$0xf]
    %v1064 = vld [vmem:[%s1062 + $0x4] sm:$0xf]
    %v1065 = vld [vmem:[%s1062 + $0x8] sm:$0xf]
    %v1066 = vld [vmem:[%s1062 + $0xc] sm:$0xf]
    %v1067 = vld [vmem:[%s1062 + $0x10] sm:$0xf]
    %v1068 = vld [vmem:[%s1062 + $0x14] sm:$0xf]
    %v1069 = vld [vmem:[%s1062 + $0x18] sm:$0xf]
    %v1070 = vld [vmem:[%s1062 + $0x1c] sm:$0xf]
    %v1071 = vld [vmem:[%s1062 + $0x20] sm:$0xf]
    %v1072 = vld [vmem:[%s1062 + $0x24] sm:$0xf]
    %v1073 = vld [vmem:[%s1062 + $0x28] sm:$0xf]
    %v1074 = vld [vmem:[%s1062 + $0x2c] sm:$0xf]
    %v1075 = vld [vmem:[%s1062 + $0x30] sm:$0xf]
    %v1076 = vld [vmem:[%s1062 + $0x34] sm:$0xf]
    %v1077 = vld [vmem:[%s1062 + $0x38] sm:$0xf]
    %v1078 = vld [vmem:[%s1062 + $0x3c] sm:$0xf]
    %s1079 = scalar_lea.vmem %s3, 128
    %v1080 = vld [vmem:[%s1079] sm:$0xf]
    %v1081 = vld [vmem:[%s1079 + $0x4] sm:$0xf]
    %v1082 = vld [vmem:[%s1079 + $0x8] sm:$0xf]
    %v1083 = vld [vmem:[%s1079 + $0xc] sm:$0xf]
    %v1084 = vld [vmem:[%s1079 + $0x10] sm:$0xf]
    %v1085 = vld [vmem:[%s1079 + $0x14] sm:$0xf]
    %v1086 = vld [vmem:[%s1079 + $0x18] sm:$0xf]
    %v1087 = vld [vmem:[%s1079 + $0x1c] sm:$0xf]
    %v1088 = vld [vmem:[%s1079 + $0x20] sm:$0xf]
    %v1089 = vld [vmem:[%s1079 + $0x24] sm:$0xf]
    %v1090 = vld [vmem:[%s1079 + $0x28] sm:$0xf]
    %v1091 = vld [vmem:[%s1079 + $0x2c] sm:$0xf]
    %v1092 = vld [vmem:[%s1079 + $0x30] sm:$0xf]
    %v1093 = vld [vmem:[%s1079 + $0x34] sm:$0xf]
    %v1094 = vld [vmem:[%s1079 + $0x38] sm:$0xf]
    %v1095 = vld [vmem:[%s1079 + $0x3c] sm:$0xf]
    %v1112 = vunpack.c.l.b16 %v1080
    %v1113 = vunpack.c.l.b16 %v1081
    %v1114 = vunpack.c.l.b16 %v1082
    %v1115 = vunpack.c.l.b16 %v1083
    %v1116 = vunpack.c.l.b16 %v1084
    %v1117 = vunpack.c.l.b16 %v1085
    %v1118 = vunpack.c.l.b16 %v1086
    %v1119 = vunpack.c.l.b16 %v1087
    %v1120 = vunpack.c.l.b16 %v1088
    %v1121 = vunpack.c.l.b16 %v1089
    %v1122 = vunpack.c.l.b16 %v1090
    %v1123 = vunpack.c.l.b16 %v1091
    %v1124 = vunpack.c.l.b16 %v1092
    %v1125 = vunpack.c.l.b16 %v1093
    %v1126 = vunpack.c.l.b16 %v1094
    %v1127 = vunpack.c.l.b16 %v1095
    %v1128 = vpack.c.b16 %v1113, %v1112
    %v1129 = vpack.c.b16 %v1115, %v1114
    %v1130 = vpack.c.b16 %v1117, %v1116
    %v1131 = vpack.c.b16 %v1119, %v1118
    %v1132 = vpack.c.b16 %v1121, %v1120
    %v1133 = vpack.c.b16 %v1123, %v1122
    %v1134 = vpack.c.b16 %v1125, %v1124
    %v1135 = vpack.c.b16 %v1127, %v1126
    %1144 = vmatpush.bf16.msra.mxu0 %v1135
    %1145 = vmatpush.bf16.msra.mxu0 %v1134
    %1146 = vmatpush.bf16.msra.mxu0 %v1133
    %1147 = vmatpush.bf16.msra.mxu0 %v1132
    %1148 = vmatpush.bf16.msra.mxu0 %v1131
    %1149 = vmatpush.bf16.msra.mxu0 %v1130
    %1150 = vmatpush.bf16.msra.mxu0 %v1129
    %1151 = vmatpush.bf16.msra.mxu0 %v1128
    %1152 = vmatmul.bf16.gmra.mxu0 %v991
    %v1153 = vpop.f32.mrf.mxu0
    %v1154 = vadd.f32 0.0, %v1153
    %v1155 = vpop.f32.mrf.mxu0
    %v1156 = vadd.f32 0.0, %v1155
    %1157 = vmatmul.bf16.gmra.mxu0 %v992
    %v1158 = vpop.f32.mrf.mxu0
    %v1159 = vadd.f32 0.0, %v1158
    %v1160 = vpop.f32.mrf.mxu0
    %v1161 = vadd.f32 0.0, %v1160
    %1162 = vdwg.mxu0
    %v1167 = vrot.slane %v1053, 7
    %v1168 = vrot.slane %v1055, 7
    %v1169 = vsel %vm259, %v1167, %v1168
    %v1170 = vrot.slane %v1058, 7
    %v1171 = vsel %vm259, %v1168, %v1170
    %v1172 = vrot.slane %v1060, 7
    %v1173 = vsel %vm259, %v1170, %v1172
    %v1178 = vsel %vm259, 0.0, %v1167
    %v1179 = vsel %vm276, 0.0, %v1178
    %v1180 = vsel %vm277, 0.0, %v1169
    %v1181 = vsel %vm278, 0.0, %v1171
    %v1182 = vsel %vm279, 0.0, %v1173
    %v1199 = vunpack.c.l.b16 %v1063
    %v1200 = vunpack.c.l.b16 %v1064
    %v1201 = vunpack.c.l.b16 %v1065
    %v1202 = vunpack.c.l.b16 %v1066
    %v1203 = vunpack.c.l.b16 %v1067
    %v1204 = vunpack.c.l.b16 %v1068
    %v1205 = vunpack.c.l.b16 %v1069
    %v1206 = vunpack.c.l.b16 %v1070
    %v1207 = vunpack.c.l.b16 %v1071
    %v1208 = vunpack.c.l.b16 %v1072
    %v1209 = vunpack.c.l.b16 %v1073
    %v1210 = vunpack.c.l.b16 %v1074
    %v1211 = vunpack.c.l.b16 %v1075
    %v1212 = vunpack.c.l.b16 %v1076
    %v1213 = vunpack.c.l.b16 %v1077
    %v1214 = vunpack.c.l.b16 %v1078
    %v1215 = vpack.c.b16 %v1200, %v1199
    %v1216 = vpack.c.b16 %v1202, %v1201
    %v1217 = vpack.c.b16 %v1204, %v1203
    %v1218 = vpack.c.b16 %v1206, %v1205
    %v1219 = vpack.c.b16 %v1208, %v1207
    %v1220 = vpack.c.b16 %v1210, %v1209
    %v1221 = vpack.c.b16 %v1212, %v1211
    %v1222 = vpack.c.b16 %v1214, %v1213
    %1231 = vmatpush.bf16.msra.mxu0 %v1222
    %1232 = vmatpush.bf16.msra.mxu0 %v1221
    %1233 = vmatpush.bf16.msra.mxu0 %v1220
    %1234 = vmatpush.bf16.msra.mxu0 %v1219
    %1235 = vmatpush.bf16.msra.mxu0 %v1218
    %1236 = vmatpush.bf16.msra.mxu0 %v1217
    %1237 = vmatpush.bf16.msra.mxu0 %v1216
    %1238 = vmatpush.bf16.msra.mxu0 %v1215
    %1239 = vmatmul.bf16.gmra.mxu0 %v991
    %v1240 = vpop.f32.mrf.mxu0
    %v1241 = vadd.f32 %v1179, %v1240
    %v1242 = vpop.f32.mrf.mxu0
    %v1243 = vadd.f32 %v1180, %v1242
    %1244 = vmatmul.bf16.gmra.mxu0 %v992
    %v1245 = vpop.f32.mrf.mxu0
    %v1246 = vadd.f32 %v1181, %v1245
    %v1247 = vpop.f32.mrf.mxu0
    %v1248 = vadd.f32 %v1182, %v1247
    %1249 = vdwg.mxu0
    %v1254 = vrot.slane %v1154, 1
    %v1255 = vrot.slane %v1156, 1
    %v1256 = vsel %vm331, %v1254, %v1255
    %v1257 = vrot.slane %v1159, 1
    %v1258 = vsel %vm331, %v1255, %v1257
    %v1259 = vrot.slane %v1161, 1
    %v1260 = vsel %vm331, %v1257, %v1259
    %v1265 = vsel %vm331, %v1259, 0.0
    %v1266 = vsel %vm348, 0.0, %v1256
    %v1267 = vsel %vm349, 0.0, %v1258
    %v1268 = vsel %vm350, 0.0, %v1260
    %v1269 = vsel %vm351, 0.0, %v1265
    %v1270 = vadd.f32 %v1241, %v1266
    %v1271 = vadd.f32 %v1243, %v1267
    %v1272 = vadd.f32 %v1246, %v1268
    %v1273 = vadd.f32 %v1248, %v1269
    %v1274 = vsel %vm168, %v1270, 0.0
    %v1275 = vsel %vm168, %v1271, 0.0
    %v1276 = vadd.f32 %v1274, %v1275
    %v1277 = vsel %vm168, %v1272, 0.0
    %v1278 = vadd.f32 %v1276, %v1277
    %v1279 = vsel %vm168, %v1273, 0.0
    %v1280 = vadd.f32 %v1278, %v1279
    %v1281 = vrot.slane %v1280, 4
    %v1282 = vadd.f32 %v1280, %v1281
    %v1283 = vrot.slane %v1282, 2
    %v1284 = vadd.f32 %v1282, %v1283
    %v1285 = vrot.slane %v1284, 1
    %v1286 = vadd.f32 %v1284, %v1285
    %1288 = vrot.lane.b32.xlu0 %v1286, 124
    %v1289 = vpop.permute.xlu0 %1288
    %1291 = vrot.lane.b32.xlu0 %v1286, 60
    %v1292 = vpop.permute.xlu0 %1291
    %vm1294 = vcmask 490496
    %v1295 = vsel %vm1294, %v1289, %v1292
    %v1296 = vadd.f32 %v1286, %v1295
    %1298 = vrot.lane.b32.xlu0 %v1296, 120
    %v1299 = vpop.permute.xlu0 %1298
    %1301 = vrot.lane.b32.xlu0 %v1296, 56
    %v1302 = vpop.permute.xlu0 %1301
    %vm1304 = vcmask 457728
    %v1305 = vsel %vm1304, %v1299, %v1302
    %v1306 = vadd.f32 %v1296, %v1305
    %1308 = vrot.lane.b32.xlu0 %v1306, 112
    %v1309 = vpop.permute.xlu0 %1308
    %1311 = vrot.lane.b32.xlu0 %v1306, 48
    %v1312 = vpop.permute.xlu0 %1311
    %vm1314 = vcmask 392192
    %v1315 = vsel %vm1314, %v1309, %v1312
    %v1316 = vadd.f32 %v1306, %v1315
    %1318 = vrot.lane.b32.xlu0 %v1316, 96
    %v1319 = vpop.permute.xlu0 %1318
    %1321 = vrot.lane.b32.xlu0 %v1316, 32
    %v1322 = vpop.permute.xlu0 %1321
    %vm1324 = vcmask 261120
    %v1325 = vsel %vm1324, %v1319, %v1322
    %v1326 = vadd.f32 %v1316, %v1325
    %v1327 = vmul.f32 %v1326, 0.001953125
    %v1328 = vperm.slane %v1327, 0
    %v1329 = vsub.f32 %v1270, %v1328
    %v1330 = vsub.f32 %v1271, %v1328
    %v1331 = vsub.f32 %v1272, %v1328
    %v1332 = vsub.f32 %v1273, %v1328
    %v1333 = vmul.f32 %v1329, %v1329
    %v1334 = vmul.f32 %v1330, %v1330
    %v1335 = vmul.f32 %v1331, %v1331
    %v1336 = vmul.f32 %v1332, %v1332
    %v1337 = vsel %vm168, %v1333, 0.0
    %v1338 = vsel %vm168, %v1334, 0.0
    %v1339 = vadd.f32 %v1337, %v1338
    %v1340 = vsel %vm168, %v1335, 0.0
    %v1341 = vadd.f32 %v1339, %v1340
    %v1342 = vsel %vm168, %v1336, 0.0
    %v1343 = vadd.f32 %v1341, %v1342
    %v1344 = vrot.slane %v1343, 4
    %v1345 = vadd.f32 %v1343, %v1344
    %v1346 = vrot.slane %v1345, 2
    %v1347 = vadd.f32 %v1345, %v1346
    %v1348 = vrot.slane %v1347, 1
    %v1349 = vadd.f32 %v1347, %v1348
    %1351 = vrot.lane.b32.xlu0 %v1349, 124
    %v1352 = vpop.permute.xlu0 %1351
    %1354 = vrot.lane.b32.xlu0 %v1349, 60
    %v1355 = vpop.permute.xlu0 %1354
    %v1357 = vsel %vm1294, %v1352, %v1355
    %v1358 = vadd.f32 %v1349, %v1357
    %1360 = vrot.lane.b32.xlu0 %v1358, 120
    %v1361 = vpop.permute.xlu0 %1360
    %1363 = vrot.lane.b32.xlu0 %v1358, 56
    %v1364 = vpop.permute.xlu0 %1363
    %v1366 = vsel %vm1304, %v1361, %v1364
    %v1367 = vadd.f32 %v1358, %v1366
    %1369 = vrot.lane.b32.xlu0 %v1367, 112
    %v1370 = vpop.permute.xlu0 %1369
    %1372 = vrot.lane.b32.xlu0 %v1367, 48
    %v1373 = vpop.permute.xlu0 %1372
    %v1375 = vsel %vm1314, %v1370, %v1373
    %v1376 = vadd.f32 %v1367, %v1375
    %1378 = vrot.lane.b32.xlu0 %v1376, 96
    %v1379 = vpop.permute.xlu0 %1378
    %1381 = vrot.lane.b32.xlu0 %v1376, 32
    %v1382 = vpop.permute.xlu0 %1381
    %v1384 = vsel %vm1324, %v1379, %v1382
    %v1385 = vadd.f32 %v1376, %v1384
    %v1386 = vmul.f32 %v1385, 0.001953125
    %v1387 = vadd.f32 %v1386, 1e-05
    %v1388 = vrsqrt.pop %v1387
    %v1389 = vmul.f32 %v1388, %v1387
    %v1390 = vmul.f32 %v1389, %v1388
    %v1391 = vmul.f32 0.5, %v1390
    %v1392 = vsub.f32 1.5, %v1391
    %v1393 = vmul.f32 %v1388, %v1392
    %vm1394 = vweird.f32 %v1387
    %vm1395 = vweird.f32 %v1388
    %vm1396 = vmor %vm1394, %vm1395
    %v1397 = vsel %vm1396, %v1388, %v1393
    %v1398 = vperm.slane %v1397, 0
    %v1399 = vmul.f32 %v1329, %v1398
    %v1400 = vmul.f32 %v1330, %v1398
    %v1401 = vmul.f32 %v1331, %v1398
    %v1402 = vmul.f32 %v1332, %v1398
    %v1403 = vld [vmem:[%s11] sm:$0xff]
    %v1404 = vld [vmem:[%s11 + $0x8] sm:$0xff]
    %v1405 = vld [vmem:[%s11 + $0x10] sm:$0xff]
    %v1406 = vld [vmem:[%s11 + $0x18] sm:$0xff]
    %v1407 = vadd.f32 %v1399, %v1403
    %v1408 = vadd.f32 %v1400, %v1404
    %v1409 = vadd.f32 %v1401, %v1405
    %v1410 = vadd.f32 %v1402, %v1406
    %v1411 = vpack.c.bf16 %v1408, %v1407
    %v1412 = vpack.c.bf16 %v1410, %v1409
    %v1413 = vld [vmem:[%s4] sm:$0xf]
    %v1414 = vld [vmem:[%s4 + $0x4] sm:$0xf]
    %v1415 = vld [vmem:[%s4 + $0x8] sm:$0xf]
    %v1416 = vld [vmem:[%s4 + $0xc] sm:$0xf]
    %v1417 = vld [vmem:[%s4 + $0x10] sm:$0xf]
    %v1418 = vld [vmem:[%s4 + $0x14] sm:$0xf]
    %v1419 = vld [vmem:[%s4 + $0x18] sm:$0xf]
    %v1420 = vld [vmem:[%s4 + $0x1c] sm:$0xf]
    %v1429 = vunpack.c.l.b16 %v1413
    %v1430 = vunpack.c.l.b16 %v1414
    %v1431 = vunpack.c.l.b16 %v1415
    %v1432 = vunpack.c.l.b16 %v1416
    %v1433 = vunpack.c.l.b16 %v1417
    %v1434 = vunpack.c.l.b16 %v1418
    %v1435 = vunpack.c.l.b16 %v1419
    %v1436 = vunpack.c.l.b16 %v1420
    %v1437 = vpack.c.b16 %v1430, %v1429
    %v1438 = vpack.c.b16 %v1432, %v1431
    %v1439 = vpack.c.b16 %v1434, %v1433
    %v1440 = vpack.c.b16 %v1436, %v1435
    %v1446 = vsel %vm168, %v1411, 0
    %v1449 = vsel %vm168, %v1412, 0
    %1451 = vmatpush.bf16.msra.mxu0 0
    %1452 = vmatpush.bf16.msra.mxu0 0
    %1453 = vmatpush.bf16.msra.mxu0 0
    %1454 = vmatpush.bf16.msra.mxu0 0
    %1455 = vmatpush.bf16.msra.mxu0 %v1440
    %1456 = vmatpush.bf16.msra.mxu0 %v1439
    %1457 = vmatpush.bf16.msra.mxu0 %v1438
    %1458 = vmatpush.bf16.msra.mxu0 %v1437
    %1459 = vmatmul.bf16.gmra.mxu0 %v1446
    %v1460 = vpop.f32.mrf.mxu0
    %v1461 = vadd.f32 0.0, %v1460
    %v1462 = vpop.f32.mrf.mxu0
    %v1463 = vadd.f32 0.0, %v1462
    %1464 = vmatmul.bf16.gmra.mxu0 %v1449
    %v1465 = vpop.f32.mrf.mxu0
    %v1466 = vadd.f32 0.0, %v1465
    %v1467 = vpop.f32.mrf.mxu0
    %v1468 = vadd.f32 0.0, %v1467
    %1469 = vdwg.mxu0
    %s1470 = scalar_lea.vmem %s4, 32
    %v1471 = vld [vmem:[%s1470] sm:$0xf]
    %v1472 = vld [vmem:[%s1470 + $0x4] sm:$0xf]
    %v1473 = vld [vmem:[%s1470 + $0x8] sm:$0xf]
    %v1474 = vld [vmem:[%s1470 + $0xc] sm:$0xf]
    %v1475 = vld [vmem:[%s1470 + $0x10] sm:$0xf]
    %v1476 = vld [vmem:[%s1470 + $0x14] sm:$0xf]
    %v1477 = vld [vmem:[%s1470 + $0x18] sm:$0xf]
    %v1478 = vld [vmem:[%s1470 + $0x1c] sm:$0xf]
    %s1479 = scalar_lea.vmem %s4, 64
    %v1480 = vld [vmem:[%s1479] sm:$0xf]
    %v1481 = vld [vmem:[%s1479 + $0x4] sm:$0xf]
    %v1482 = vld [vmem:[%s1479 + $0x8] sm:$0xf]
    %v1483 = vld [vmem:[%s1479 + $0xc] sm:$0xf]
    %v1484 = vld [vmem:[%s1479 + $0x10] sm:$0xf]
    %v1485 = vld [vmem:[%s1479 + $0x14] sm:$0xf]
    %v1486 = vld [vmem:[%s1479 + $0x18] sm:$0xf]
    %v1487 = vld [vmem:[%s1479 + $0x1c] sm:$0xf]
    %v1496 = vunpack.c.l.b16 %v1480
    %v1497 = vunpack.c.l.b16 %v1481
    %v1498 = vunpack.c.l.b16 %v1482
    %v1499 = vunpack.c.l.b16 %v1483
    %v1500 = vunpack.c.l.b16 %v1484
    %v1501 = vunpack.c.l.b16 %v1485
    %v1502 = vunpack.c.l.b16 %v1486
    %v1503 = vunpack.c.l.b16 %v1487
    %v1504 = vpack.c.b16 %v1497, %v1496
    %v1505 = vpack.c.b16 %v1499, %v1498
    %v1506 = vpack.c.b16 %v1501, %v1500
    %v1507 = vpack.c.b16 %v1503, %v1502
    %1512 = vmatpush.bf16.msra.mxu0 0
    %1513 = vmatpush.bf16.msra.mxu0 0
    %1514 = vmatpush.bf16.msra.mxu0 0
    %1515 = vmatpush.bf16.msra.mxu0 0
    %1516 = vmatpush.bf16.msra.mxu0 %v1507
    %1517 = vmatpush.bf16.msra.mxu0 %v1506
    %1518 = vmatpush.bf16.msra.mxu0 %v1505
    %1519 = vmatpush.bf16.msra.mxu0 %v1504
    %1520 = vmatmul.bf16.gmra.mxu0 %v1446
    %v1521 = vpop.f32.mrf.mxu0
    %v1522 = vadd.f32 0.0, %v1521
    %v1523 = vpop.f32.mrf.mxu0
    %v1524 = vadd.f32 0.0, %v1523
    %1525 = vmatmul.bf16.gmra.mxu0 %v1449
    %v1526 = vpop.f32.mrf.mxu0
    %v1527 = vadd.f32 0.0, %v1526
    %v1528 = vpop.f32.mrf.mxu0
    %v1529 = vadd.f32 0.0, %v1528
    %1530 = vdwg.mxu0
    %v1535 = vrot.slane %v1461, 7
    %v1536 = vrot.slane %v1463, 7
    %v1537 = vsel %vm259, %v1535, %v1536
    %v1538 = vrot.slane %v1466, 7
    %v1539 = vsel %vm259, %v1536, %v1538
    %v1540 = vrot.slane %v1468, 7
    %v1541 = vsel %vm259, %v1538, %v1540
    %v1546 = vsel %vm259, 0.0, %v1535
    %v1547 = vsel %vm276, 0.0, %v1546
    %v1548 = vsel %vm277, 0.0, %v1537
    %v1549 = vsel %vm278, 0.0, %v1539
    %v1550 = vsel %vm279, 0.0, %v1541
    %v1559 = vunpack.c.l.b16 %v1471
    %v1560 = vunpack.c.l.b16 %v1472
    %v1561 = vunpack.c.l.b16 %v1473
    %v1562 = vunpack.c.l.b16 %v1474
    %v1563 = vunpack.c.l.b16 %v1475
    %v1564 = vunpack.c.l.b16 %v1476
    %v1565 = vunpack.c.l.b16 %v1477
    %v1566 = vunpack.c.l.b16 %v1478
    %v1567 = vpack.c.b16 %v1560, %v1559
    %v1568 = vpack.c.b16 %v1562, %v1561
    %v1569 = vpack.c.b16 %v1564, %v1563
    %v1570 = vpack.c.b16 %v1566, %v1565
    %1575 = vmatpush.bf16.msra.mxu0 0
    %1576 = vmatpush.bf16.msra.mxu0 0
    %1577 = vmatpush.bf16.msra.mxu0 0
    %1578 = vmatpush.bf16.msra.mxu0 0
    %1579 = vmatpush.bf16.msra.mxu0 %v1570
    %1580 = vmatpush.bf16.msra.mxu0 %v1569
    %1581 = vmatpush.bf16.msra.mxu0 %v1568
    %1582 = vmatpush.bf16.msra.mxu0 %v1567
    %1583 = vmatmul.bf16.gmra.mxu0 %v1446
    %v1584 = vpop.f32.mrf.mxu0
    %v1585 = vadd.f32 %v1547, %v1584
    %v1586 = vpop.f32.mrf.mxu0
    %v1587 = vadd.f32 %v1548, %v1586
    %1588 = vmatmul.bf16.gmra.mxu0 %v1449
    %v1589 = vpop.f32.mrf.mxu0
    %v1590 = vadd.f32 %v1549, %v1589
    %v1591 = vpop.f32.mrf.mxu0
    %v1592 = vadd.f32 %v1550, %v1591
    %1593 = vdwg.mxu0
    %v1598 = vrot.slane %v1522, 1
    %v1599 = vrot.slane %v1524, 1
    %v1600 = vsel %vm331, %v1598, %v1599
    %v1601 = vrot.slane %v1527, 1
    %v1602 = vsel %vm331, %v1599, %v1601
    %v1603 = vrot.slane %v1529, 1
    %v1604 = vsel %vm331, %v1601, %v1603
    %v1609 = vsel %vm331, %v1603, 0.0
    %v1610 = vsel %vm348, 0.0, %v1600
    %v1611 = vsel %vm349, 0.0, %v1602
    %v1612 = vsel %vm350, 0.0, %v1604
    %v1613 = vsel %vm351, 0.0, %v1609
    %v1614 = vadd.f32 %v1585, %v1610
    %v1615 = vadd.f32 %v1587, %v1611
    %v1616 = vadd.f32 %v1590, %v1612
    %v1617 = vadd.f32 %v1592, %v1613
    %v1618 = vsel %vm168, %v1614, 0.0
    %v1619 = vsel %vm168, %v1615, 0.0
    %v1620 = vadd.f32 %v1618, %v1619
    %v1621 = vsel %vm168, %v1616, 0.0
    %v1622 = vadd.f32 %v1620, %v1621
    %v1623 = vsel %vm168, %v1617, 0.0
    %v1624 = vadd.f32 %v1622, %v1623
    %v1625 = vrot.slane %v1624, 4
    %v1626 = vadd.f32 %v1624, %v1625
    %v1627 = vrot.slane %v1626, 2
    %v1628 = vadd.f32 %v1626, %v1627
    %v1629 = vrot.slane %v1628, 1
    %v1630 = vadd.f32 %v1628, %v1629
    %1632 = vrot.lane.b32.xlu0 %v1630, 124
    %v1633 = vpop.permute.xlu0 %1632
    %1635 = vrot.lane.b32.xlu0 %v1630, 60
    %v1636 = vpop.permute.xlu0 %1635
    %v1638 = vsel %vm1294, %v1633, %v1636
    %v1639 = vadd.f32 %v1630, %v1638
    %1641 = vrot.lane.b32.xlu0 %v1639, 120
    %v1642 = vpop.permute.xlu0 %1641
    %1644 = vrot.lane.b32.xlu0 %v1639, 56
    %v1645 = vpop.permute.xlu0 %1644
    %v1647 = vsel %vm1304, %v1642, %v1645
    %v1648 = vadd.f32 %v1639, %v1647
    %1650 = vrot.lane.b32.xlu0 %v1648, 112
    %v1651 = vpop.permute.xlu0 %1650
    %1653 = vrot.lane.b32.xlu0 %v1648, 48
    %v1654 = vpop.permute.xlu0 %1653
    %v1656 = vsel %vm1314, %v1651, %v1654
    %v1657 = vadd.f32 %v1648, %v1656
    %1659 = vrot.lane.b32.xlu0 %v1657, 96
    %v1660 = vpop.permute.xlu0 %1659
    %1662 = vrot.lane.b32.xlu0 %v1657, 32
    %v1663 = vpop.permute.xlu0 %1662
    %v1665 = vsel %vm1324, %v1660, %v1663
    %v1666 = vadd.f32 %v1657, %v1665
    %v1667 = vmul.f32 %v1666, 0.001953125
    %v1668 = vperm.slane %v1667, 0
    %v1669 = vsub.f32 %v1614, %v1668
    %v1670 = vsub.f32 %v1615, %v1668
    %v1671 = vsub.f32 %v1616, %v1668
    %v1672 = vsub.f32 %v1617, %v1668
    %v1673 = vmul.f32 %v1669, %v1669
    %v1674 = vmul.f32 %v1670, %v1670
    %v1675 = vmul.f32 %v1671, %v1671
    %v1676 = vmul.f32 %v1672, %v1672
    %v1677 = vsel %vm168, %v1673, 0.0
    %v1678 = vsel %vm168, %v1674, 0.0
    %v1679 = vadd.f32 %v1677, %v1678
    %v1680 = vsel %vm168, %v1675, 0.0
    %v1681 = vadd.f32 %v1679, %v1680
    %v1682 = vsel %vm168, %v1676, 0.0
    %v1683 = vadd.f32 %v1681, %v1682
    %v1684 = vrot.slane %v1683, 4
    %v1685 = vadd.f32 %v1683, %v1684
    %v1686 = vrot.slane %v1685, 2
    %v1687 = vadd.f32 %v1685, %v1686
    %v1688 = vrot.slane %v1687, 1
    %v1689 = vadd.f32 %v1687, %v1688
    %1691 = vrot.lane.b32.xlu0 %v1689, 124
    %v1692 = vpop.permute.xlu0 %1691
    %1694 = vrot.lane.b32.xlu0 %v1689, 60
    %v1695 = vpop.permute.xlu0 %1694
    %v1697 = vsel %vm1294, %v1692, %v1695
    %v1698 = vadd.f32 %v1689, %v1697
    %1700 = vrot.lane.b32.xlu0 %v1698, 120
    %v1701 = vpop.permute.xlu0 %1700
    %1703 = vrot.lane.b32.xlu0 %v1698, 56
    %v1704 = vpop.permute.xlu0 %1703
    %v1706 = vsel %vm1304, %v1701, %v1704
    %v1707 = vadd.f32 %v1698, %v1706
    %1709 = vrot.lane.b32.xlu0 %v1707, 112
    %v1710 = vpop.permute.xlu0 %1709
    %1712 = vrot.lane.b32.xlu0 %v1707, 48
    %v1713 = vpop.permute.xlu0 %1712
    %v1715 = vsel %vm1314, %v1710, %v1713
    %v1716 = vadd.f32 %v1707, %v1715
    %1718 = vrot.lane.b32.xlu0 %v1716, 96
    %v1719 = vpop.permute.xlu0 %1718
    %1721 = vrot.lane.b32.xlu0 %v1716, 32
    %v1722 = vpop.permute.xlu0 %1721
    %v1724 = vsel %vm1324, %v1719, %v1722
    %v1725 = vadd.f32 %v1716, %v1724
    %v1726 = vmul.f32 %v1725, 0.001953125
    %v1727 = vadd.f32 %v1726, 1e-05
    %v1728 = vrsqrt.pop %v1727
    %v1729 = vmul.f32 %v1728, %v1727
    %v1730 = vmul.f32 %v1729, %v1728
    %v1731 = vmul.f32 0.5, %v1730
    %v1732 = vsub.f32 1.5, %v1731
    %v1733 = vmul.f32 %v1728, %v1732
    %vm1734 = vweird.f32 %v1727
    %vm1735 = vweird.f32 %v1728
    %vm1736 = vmor %vm1734, %vm1735
    %v1737 = vsel %vm1736, %v1728, %v1733
    %v1738 = vperm.slane %v1737, 0
    %v1739 = vmul.f32 %v1669, %v1738
    %v1740 = vmul.f32 %v1670, %v1738
    %v1741 = vmul.f32 %v1671, %v1738
    %v1742 = vmul.f32 %v1672, %v1738
    %v1743 = vxor.u32 %v1739, 2147483648
    %v1744 = vxor.u32 %v1740, 2147483648
    %v1745 = vxor.u32 %v1741, 2147483648
    %v1746 = vxor.u32 %v1742, 2147483648
    %v1747 = vmul.f32 %v1743, 1.442695
    %v1748 = vpow.pop %v1747
    %v1749 = vmul.f32 %v1744, 1.442695
    %v1750 = vpow.pop %v1749
    %v1751 = vmul.f32 %v1745, 1.442695
    %v1752 = vpow.pop %v1751
    %v1753 = vmul.f32 %v1746, 1.442695
    %v1754 = vpow.pop %v1753
    %v1755 = vadd.f32 %v1748, 1.0
    %v1756 = vadd.f32 %v1750, 1.0
    %v1757 = vadd.f32 %v1752, 1.0
    %v1758 = vadd.f32 %v1754, 1.0
    %v1759 = vrcp.pop %v1755
    %v1760 = vmul.f32 %v1755, %v1759
    %v1761 = vsub.f32 1.0, %v1760
    %v1762 = vmul.f32 %v1759, %v1761
    %v1763 = vadd.f32 %v1759, %v1762
    %vm1764 = vweird.f32 %v1755
    %vm1765 = vweird.f32 %v1759
    %vm1766 = vmor %vm1764, %vm1765
    %v1767 = vsel %vm1766, %v1759, %v1763
    %v1768 = vand.u32 2147483647, %v1755
    %vm1769 = vcmp.eq.f32.partialorder %v1768, 8.507059e+37
    %v1770 = vand.u32 %v1755, 2147483648
    %v1771 = vor.u32 1.1754944e-38, %v1770
    %v1772 = vsel %vm1769, %v1771, %v1767
    %v1773 = vmul.f32 1.0, %v1772
    %v1774 = vrcp.pop %v1756
    %v1775 = vmul.f32 %v1756, %v1774
    %v1776 = vsub.f32 1.0, %v1775
    %v1777 = vmul.f32 %v1774, %v1776
    %v1778 = vadd.f32 %v1774, %v1777
    %vm1779 = vweird.f32 %v1756
    %vm1780 = vweird.f32 %v1774
    %vm1781 = vmor %vm1779, %vm1780
    %v1782 = vsel %vm1781, %v1774, %v1778
    %v1783 = vand.u32 2147483647, %v1756
    %vm1784 = vcmp.eq.f32.partialorder %v1783, 8.507059e+37
    %v1785 = vand.u32 %v1756, 2147483648
    %v1786 = vor.u32 1.1754944e-38, %v1785
    %v1787 = vsel %vm1784, %v1786, %v1782
    %v1788 = vmul.f32 1.0, %v1787
    %v1789 = vrcp.pop %v1757
    %v1790 = vmul.f32 %v1757, %v1789
    %v1791 = vsub.f32 1.0, %v1790
    %v1792 = vmul.f32 %v1789, %v1791
    %v1793 = vadd.f32 %v1789, %v1792
    %vm1794 = vweird.f32 %v1757
    %vm1795 = vweird.f32 %v1789
    %vm1796 = vmor %vm1794, %vm1795
    %v1797 = vsel %vm1796, %v1789, %v1793
    %v1798 = vand.u32 2147483647, %v1757
    %vm1799 = vcmp.eq.f32.partialorder %v1798, 8.507059e+37
    %v1800 = vand.u32 %v1757, 2147483648
    %v1801 = vor.u32 1.1754944e-38, %v1800
    %v1802 = vsel %vm1799, %v1801, %v1797
    %v1803 = vmul.f32 1.0, %v1802
    %v1804 = vrcp.pop %v1758
    %v1805 = vmul.f32 %v1758, %v1804
    %v1806 = vsub.f32 1.0, %v1805
    %v1807 = vmul.f32 %v1804, %v1806
    %v1808 = vadd.f32 %v1804, %v1807
    %vm1809 = vweird.f32 %v1758
    %vm1810 = vweird.f32 %v1804
    %vm1811 = vmor %vm1809, %vm1810
    %v1812 = vsel %vm1811, %v1804, %v1808
    %v1813 = vand.u32 2147483647, %v1758
    %vm1814 = vcmp.eq.f32.partialorder %v1813, 8.507059e+37
    %v1815 = vand.u32 %v1758, 2147483648
    %v1816 = vor.u32 1.1754944e-38, %v1815
    %v1817 = vsel %vm1814, %v1816, %v1812
    %v1818 = vmul.f32 1.0, %v1817
    %v1819 = vsub.f32 %v1399, %v1403
    %v1820 = vsub.f32 %v1400, %v1404
    %v1821 = vsub.f32 %v1401, %v1405
    %v1822 = vsub.f32 %v1402, %v1406
    %v1823 = vmul.f32 %v1819, %v1773
    %v1824 = vmul.f32 %v1820, %v1788
    %v1825 = vmul.f32 %v1821, %v1803
    %v1826 = vmul.f32 %v1822, %v1818
    %v1827 = vadd.f32 %v1403, %v1823
    %v1828 = vadd.f32 %v1404, %v1824
    %v1829 = vadd.f32 %v1405, %v1825
    %v1830 = vadd.f32 %v1406, %v1826
    %vm1831 = vcmp.gt.f32.partialorder %v1827, 1.0
    %vm1832 = vcmp.gt.f32.partialorder %v1828, 1.0
    %vm1833 = vcmp.gt.f32.partialorder %v1829, 1.0
    %vm1834 = vcmp.gt.f32.partialorder %v1830, 1.0
    %v1835 = vsel %vm1831, 1, 0
    %v1836 = vsel %vm1832, 1, 0
    %v1837 = vsel %vm1833, 1, 0
    %v1838 = vsel %vm1834, 1, 0
    %v1839 = vcvt.s32.f32 %v1835
    %v1840 = vcvt.s32.f32 %v1836
    %v1841 = vcvt.s32.f32 %v1837
    %v1842 = vcvt.s32.f32 %v1838
    %v1843 = vsub.f32 1.0, %v1839
    %v1844 = vsub.f32 1.0, %v1840
    %v1845 = vsub.f32 1.0, %v1841
    %v1846 = vsub.f32 1.0, %v1842
    %v1847 = vmul.f32 %v1843, %v1827
    %v1848 = vmul.f32 %v1844, %v1828
    %v1849 = vmul.f32 %v1845, %v1829
    %v1850 = vmul.f32 %v1846, %v1830
    %1851 = vst.msk [vmem:[%s15] sm:$0xff] %vm168, %v1847
    %1852 = vst.msk [vmem:[%s15 + $0x8] sm:$0xff] %vm168, %v1848
    %1853 = vst.msk [vmem:[%s15 + $0x10] sm:$0xff] %vm168, %v1849
    %1854 = vst.msk [vmem:[%s15 + $0x18] sm:$0xff] %vm168, %v1850
    %v1855 = vpack.c.bf16 %v1839, %v1839
    %v1856 = vpack.c.bf16 %v1840, %v1840
    %v1857 = vpack.c.bf16 %v1841, %v1841
    %v1858 = vpack.c.bf16 %v1842, %v1842
    %vm1859 = vcmask 519168
    %1860 = vst.msk [vmem:[%s19] sm:$0xf] %vm1859, %v1855
    %1861 = vst.msk [vmem:[%s19 + $0x4] sm:$0xf] %vm1859, %v1856
    %1862 = vst.msk [vmem:[%s19 + $0x8] sm:$0xf] %vm1859, %v1857
    %1863 = vst.msk [vmem:[%s19 + $0xc] sm:$0xf] %vm1859, %v1858
    %v1864 = vsel %vm168, %v1839, 0.0
    %v1865 = vsel %vm168, %v1840, 0.0
    %v1866 = vadd.f32 %v1864, %v1865
    %v1867 = vsel %vm168, %v1841, 0.0
    %v1868 = vadd.f32 %v1866, %v1867
    %v1869 = vsel %vm168, %v1842, 0.0
    %v1870 = vadd.f32 %v1868, %v1869
    %v1871 = vrot.slane %v1870, 4
    %v1872 = vadd.f32 %v1870, %v1871
    %v1873 = vrot.slane %v1872, 2
    %v1874 = vadd.f32 %v1872, %v1873
    %v1875 = vrot.slane %v1874, 1
    %v1876 = vadd.f32 %v1874, %v1875
    %v1877 = vsel %vm168, %v1876, 0.0
    %1878 = vadd.xlane.f32.xlu0 %v1877
    %v1879 = vpop.xlane.xlu0 %1878
    %v1880 = vld [vmem:[%s5] sm:$0xf]
    %v1881 = vld [vmem:[%s5 + $0x4] sm:$0xf]
    %v1882 = vld [vmem:[%s5 + $0x8] sm:$0xf]
    %v1883 = vld [vmem:[%s5 + $0xc] sm:$0xf]
    %v1884 = vld [vmem:[%s5 + $0x10] sm:$0xf]
    %v1885 = vld [vmem:[%s5 + $0x14] sm:$0xf]
    %v1886 = vld [vmem:[%s5 + $0x18] sm:$0xf]
    %v1887 = vld [vmem:[%s5 + $0x1c] sm:$0xf]
    %v1892 = vunpack.c.l.b16 %v1855
    %v1893 = vunpack.c.l.b16 %v1856
    %v1894 = vunpack.c.l.b16 %v1857
    %v1895 = vunpack.c.l.b16 %v1858
    %v1896 = vpack.c.b16 %v1893, %v1892
    %v1897 = vpack.c.b16 %v1895, %v1894
    %v1906 = vunpack.c.l.b16 %v1880
    %v1907 = vunpack.c.l.b16 %v1881
    %v1908 = vunpack.c.l.b16 %v1882
    %v1909 = vunpack.c.l.b16 %v1883
    %v1910 = vunpack.c.l.b16 %v1884
    %v1911 = vunpack.c.l.b16 %v1885
    %v1912 = vunpack.c.l.b16 %v1886
    %v1913 = vunpack.c.l.b16 %v1887
    %v1914 = vpack.c.b16 %v1907, %v1906
    %v1915 = vpack.c.b16 %v1909, %v1908
    %v1916 = vpack.c.b16 %v1911, %v1910
    %v1917 = vpack.c.b16 %v1913, %v1912
    %v1923 = vsel %vm168, %v1896, 0
    %v1926 = vsel %vm168, %v1897, 0
    %1928 = vmatpush.bf16.msra.mxu0 0
    %1929 = vmatpush.bf16.msra.mxu0 0
    %1930 = vmatpush.bf16.msra.mxu0 0
    %1931 = vmatpush.bf16.msra.mxu0 0
    %1932 = vmatpush.bf16.msra.mxu0 %v1917
    %1933 = vmatpush.bf16.msra.mxu0 %v1916
    %1934 = vmatpush.bf16.msra.mxu0 %v1915
    %1935 = vmatpush.bf16.msra.mxu0 %v1914
    %1936 = vmatmul.bf16.gmra.mxu0 %v1923
    %v1937 = vpop.f32.mrf.mxu0
    %v1938 = vadd.f32 0.0, %v1937
    %v1939 = vpop.f32.mrf.mxu0
    %v1940 = vadd.f32 0.0, %v1939
    %1941 = vmatmul.bf16.gmra.mxu0 %v1926
    %v1942 = vpop.f32.mrf.mxu0
    %v1943 = vadd.f32 0.0, %v1942
    %v1944 = vpop.f32.mrf.mxu0
    %v1945 = vadd.f32 0.0, %v1944
    %1946 = vdwg.mxu0
    %s1947 = scalar_lea.vmem %s5, 32
    %v1948 = vld [vmem:[%s1947] sm:$0xf]
    %v1949 = vld [vmem:[%s1947 + $0x4] sm:$0xf]
    %v1950 = vld [vmem:[%s1947 + $0x8] sm:$0xf]
    %v1951 = vld [vmem:[%s1947 + $0xc] sm:$0xf]
    %v1952 = vld [vmem:[%s1947 + $0x10] sm:$0xf]
    %v1953 = vld [vmem:[%s1947 + $0x14] sm:$0xf]
    %v1954 = vld [vmem:[%s1947 + $0x18] sm:$0xf]
    %v1955 = vld [vmem:[%s1947 + $0x1c] sm:$0xf]
    %s1956 = scalar_lea.vmem %s5, 64
    %v1957 = vld [vmem:[%s1956] sm:$0xf]
    %v1958 = vld [vmem:[%s1956 + $0x4] sm:$0xf]
    %v1959 = vld [vmem:[%s1956 + $0x8] sm:$0xf]
    %v1960 = vld [vmem:[%s1956 + $0xc] sm:$0xf]
    %v1961 = vld [vmem:[%s1956 + $0x10] sm:$0xf]
    %v1962 = vld [vmem:[%s1956 + $0x14] sm:$0xf]
    %v1963 = vld [vmem:[%s1956 + $0x18] sm:$0xf]
    %v1964 = vld [vmem:[%s1956 + $0x1c] sm:$0xf]
    %v1973 = vunpack.c.l.b16 %v1957
    %v1974 = vunpack.c.l.b16 %v1958
    %v1975 = vunpack.c.l.b16 %v1959
    %v1976 = vunpack.c.l.b16 %v1960
    %v1977 = vunpack.c.l.b16 %v1961
    %v1978 = vunpack.c.l.b16 %v1962
    %v1979 = vunpack.c.l.b16 %v1963
    %v1980 = vunpack.c.l.b16 %v1964
    %v1981 = vpack.c.b16 %v1974, %v1973
    %v1982 = vpack.c.b16 %v1976, %v1975
    %v1983 = vpack.c.b16 %v1978, %v1977
    %v1984 = vpack.c.b16 %v1980, %v1979
    %1989 = vmatpush.bf16.msra.mxu0 0
    %1990 = vmatpush.bf16.msra.mxu0 0
    %1991 = vmatpush.bf16.msra.mxu0 0
    %1992 = vmatpush.bf16.msra.mxu0 0
    %1993 = vmatpush.bf16.msra.mxu0 %v1984
    %1994 = vmatpush.bf16.msra.mxu0 %v1983
    %1995 = vmatpush.bf16.msra.mxu0 %v1982
    %1996 = vmatpush.bf16.msra.mxu0 %v1981
    %1997 = vmatmul.bf16.gmra.mxu0 %v1923
    %v1998 = vpop.f32.mrf.mxu0
    %v1999 = vadd.f32 0.0, %v1998
    %v2000 = vpop.f32.mrf.mxu0
    %v2001 = vadd.f32 0.0, %v2000
    %2002 = vmatmul.bf16.gmra.mxu0 %v1926
    %v2003 = vpop.f32.mrf.mxu0
    %v2004 = vadd.f32 0.0, %v2003
    %v2005 = vpop.f32.mrf.mxu0
    %v2006 = vadd.f32 0.0, %v2005
    %2007 = vdwg.mxu0
    %v2012 = vrot.slane %v1938, 7
    %v2013 = vrot.slane %v1940, 7
    %v2014 = vsel %vm259, %v2012, %v2013
    %v2015 = vrot.slane %v1943, 7
    %v2016 = vsel %vm259, %v2013, %v2015
    %v2017 = vrot.slane %v1945, 7
    %v2018 = vsel %vm259, %v2015, %v2017
    %v2023 = vsel %vm259, 0.0, %v2012
    %v2024 = vsel %vm276, 0.0, %v2023
    %v2025 = vsel %vm277, 0.0, %v2014
    %v2026 = vsel %vm278, 0.0, %v2016
    %v2027 = vsel %vm279, 0.0, %v2018
    %v2036 = vunpack.c.l.b16 %v1948
    %v2037 = vunpack.c.l.b16 %v1949
    %v2038 = vunpack.c.l.b16 %v1950
    %v2039 = vunpack.c.l.b16 %v1951
    %v2040 = vunpack.c.l.b16 %v1952
    %v2041 = vunpack.c.l.b16 %v1953
    %v2042 = vunpack.c.l.b16 %v1954
    %v2043 = vunpack.c.l.b16 %v1955
    %v2044 = vpack.c.b16 %v2037, %v2036
    %v2045 = vpack.c.b16 %v2039, %v2038
    %v2046 = vpack.c.b16 %v2041, %v2040
    %v2047 = vpack.c.b16 %v2043, %v2042
    %2052 = vmatpush.bf16.msra.mxu0 0
    %2053 = vmatpush.bf16.msra.mxu0 0
    %2054 = vmatpush.bf16.msra.mxu0 0
    %2055 = vmatpush.bf16.msra.mxu0 0
    %2056 = vmatpush.bf16.msra.mxu0 %v2047
    %2057 = vmatpush.bf16.msra.mxu0 %v2046
    %2058 = vmatpush.bf16.msra.mxu0 %v2045
    %2059 = vmatpush.bf16.msra.mxu0 %v2044
    %2060 = vmatmul.bf16.gmra.mxu0 %v1923
    %v2061 = vpop.f32.mrf.mxu0
    %v2062 = vadd.f32 %v2024, %v2061
    %v2063 = vpop.f32.mrf.mxu0
    %v2064 = vadd.f32 %v2025, %v2063
    %2065 = vmatmul.bf16.gmra.mxu0 %v1926
    %v2066 = vpop.f32.mrf.mxu0
    %v2067 = vadd.f32 %v2026, %v2066
    %v2068 = vpop.f32.mrf.mxu0
    %v2069 = vadd.f32 %v2027, %v2068
    %2070 = vdwg.mxu0
    %v2075 = vrot.slane %v1999, 1
    %v2076 = vrot.slane %v2001, 1
    %v2077 = vsel %vm331, %v2075, %v2076
    %v2078 = vrot.slane %v2004, 1
    %v2079 = vsel %vm331, %v2076, %v2078
    %v2080 = vrot.slane %v2006, 1
    %v2081 = vsel %vm331, %v2078, %v2080
    %v2086 = vsel %vm331, %v2080, 0.0
    %v2087 = vsel %vm348, 0.0, %v2077
    %v2088 = vsel %vm349, 0.0, %v2079
    %v2089 = vsel %vm350, 0.0, %v2081
    %v2090 = vsel %vm351, 0.0, %v2086
    %v2091 = vadd.f32 %v2062, %v2087
    %v2092 = vadd.f32 %v2064, %v2088
    %v2093 = vadd.f32 %v2067, %v2089
    %v2094 = vadd.f32 %v2069, %v2090
    %v2095 = vsel %vm168, %v2091, 0.0
    %v2096 = vsel %vm168, %v2092, 0.0
    %v2097 = vadd.f32 %v2095, %v2096
    %v2098 = vsel %vm168, %v2093, 0.0
    %v2099 = vadd.f32 %v2097, %v2098
    %v2100 = vsel %vm168, %v2094, 0.0
    %v2101 = vadd.f32 %v2099, %v2100
    %v2102 = vrot.slane %v2101, 4
    %v2103 = vadd.f32 %v2101, %v2102
    %v2104 = vrot.slane %v2103, 2
    %v2105 = vadd.f32 %v2103, %v2104
    %v2106 = vrot.slane %v2105, 1
    %v2107 = vadd.f32 %v2105, %v2106
    %2109 = vrot.lane.b32.xlu0 %v2107, 124
    %v2110 = vpop.permute.xlu0 %2109
    %2112 = vrot.lane.b32.xlu0 %v2107, 60
    %v2113 = vpop.permute.xlu0 %2112
    %v2115 = vsel %vm1294, %v2110, %v2113
    %v2116 = vadd.f32 %v2107, %v2115
    %2118 = vrot.lane.b32.xlu0 %v2116, 120
    %v2119 = vpop.permute.xlu0 %2118
    %2121 = vrot.lane.b32.xlu0 %v2116, 56
    %v2122 = vpop.permute.xlu0 %2121
    %v2124 = vsel %vm1304, %v2119, %v2122
    %v2125 = vadd.f32 %v2116, %v2124
    %2127 = vrot.lane.b32.xlu0 %v2125, 112
    %v2128 = vpop.permute.xlu0 %2127
    %2130 = vrot.lane.b32.xlu0 %v2125, 48
    %v2131 = vpop.permute.xlu0 %2130
    %v2133 = vsel %vm1314, %v2128, %v2131
    %v2134 = vadd.f32 %v2125, %v2133
    %2136 = vrot.lane.b32.xlu0 %v2134, 96
    %v2137 = vpop.permute.xlu0 %2136
    %2139 = vrot.lane.b32.xlu0 %v2134, 32
    %v2140 = vpop.permute.xlu0 %2139
    %v2142 = vsel %vm1324, %v2137, %v2140
    %v2143 = vadd.f32 %v2134, %v2142
    %v2144 = vmul.f32 %v2143, 0.001953125
    %v2145 = vperm.slane %v2144, 0
    %v2146 = vsub.f32 %v2091, %v2145
    %v2147 = vsub.f32 %v2092, %v2145
    %v2148 = vsub.f32 %v2093, %v2145
    %v2149 = vsub.f32 %v2094, %v2145
    %v2150 = vmul.f32 %v2146, %v2146
    %v2151 = vmul.f32 %v2147, %v2147
    %v2152 = vmul.f32 %v2148, %v2148
    %v2153 = vmul.f32 %v2149, %v2149
    %v2154 = vsel %vm168, %v2150, 0.0
    %v2155 = vsel %vm168, %v2151, 0.0
    %v2156 = vadd.f32 %v2154, %v2155
    %v2157 = vsel %vm168, %v2152, 0.0
    %v2158 = vadd.f32 %v2156, %v2157
    %v2159 = vsel %vm168, %v2153, 0.0
    %v2160 = vadd.f32 %v2158, %v2159
    %v2161 = vrot.slane %v2160, 4
    %v2162 = vadd.f32 %v2160, %v2161
    %v2163 = vrot.slane %v2162, 2
    %v2164 = vadd.f32 %v2162, %v2163
    %v2165 = vrot.slane %v2164, 1
    %v2166 = vadd.f32 %v2164, %v2165
    %2168 = vrot.lane.b32.xlu0 %v2166, 124
    %v2169 = vpop.permute.xlu0 %2168
    %2171 = vrot.lane.b32.xlu0 %v2166, 60
    %v2172 = vpop.permute.xlu0 %2171
    %v2174 = vsel %vm1294, %v2169, %v2172
    %v2175 = vadd.f32 %v2166, %v2174
    %2177 = vrot.lane.b32.xlu0 %v2175, 120
    %v2178 = vpop.permute.xlu0 %2177
    %2180 = vrot.lane.b32.xlu0 %v2175, 56
    %v2181 = vpop.permute.xlu0 %2180
    %v2183 = vsel %vm1304, %v2178, %v2181
    %v2184 = vadd.f32 %v2175, %v2183
    %2186 = vrot.lane.b32.xlu0 %v2184, 112
    %v2187 = vpop.permute.xlu0 %2186
    %2189 = vrot.lane.b32.xlu0 %v2184, 48
    %v2190 = vpop.permute.xlu0 %2189
    %v2192 = vsel %vm1314, %v2187, %v2190
    %v2193 = vadd.f32 %v2184, %v2192
    %2195 = vrot.lane.b32.xlu0 %v2193, 96
    %v2196 = vpop.permute.xlu0 %2195
    %2198 = vrot.lane.b32.xlu0 %v2193, 32
    %v2199 = vpop.permute.xlu0 %2198
    %v2201 = vsel %vm1324, %v2196, %v2199
    %v2202 = vadd.f32 %v2193, %v2201
    %v2203 = vmul.f32 %v2202, 0.001953125
    %v2204 = vadd.f32 %v2203, 1e-05
    %v2205 = vrsqrt.pop %v2204
    %v2206 = vmul.f32 %v2205, %v2204
    %v2207 = vmul.f32 %v2206, %v2205
    %v2208 = vmul.f32 0.5, %v2207
    %v2209 = vsub.f32 1.5, %v2208
    %v2210 = vmul.f32 %v2205, %v2209
    %vm2211 = vweird.f32 %v2204
    %vm2212 = vweird.f32 %v2205
    %vm2213 = vmor %vm2211, %vm2212
    %v2214 = vsel %vm2213, %v2205, %v2210
    %v2215 = vperm.slane %v2214, 0
    %v2216 = vmul.f32 %v2146, %v2215
    %v2217 = vmul.f32 %v2147, %v2215
    %v2218 = vmul.f32 %v2148, %v2215
    %v2219 = vmul.f32 %v2149, %v2215
    %v2220 = vld [vmem:[%s12] sm:$0xff]
    %v2221 = vld [vmem:[%s12 + $0x8] sm:$0xff]
    %v2222 = vld [vmem:[%s12 + $0x10] sm:$0xff]
    %v2223 = vld [vmem:[%s12 + $0x18] sm:$0xff]
    %v2224 = vadd.f32 %v2216, %v2220
    %v2225 = vadd.f32 %v2217, %v2221
    %v2226 = vadd.f32 %v2218, %v2222
    %v2227 = vadd.f32 %v2219, %v2223
    %v2228 = vpack.c.bf16 %v2225, %v2224
    %v2229 = vpack.c.bf16 %v2227, %v2226
    %v2230 = vld [vmem:[%s6] sm:$0xf]
    %v2231 = vld [vmem:[%s6 + $0x4] sm:$0xf]
    %v2232 = vld [vmem:[%s6 + $0x8] sm:$0xf]
    %v2233 = vld [vmem:[%s6 + $0xc] sm:$0xf]
    %v2234 = vld [vmem:[%s6 + $0x10] sm:$0xf]
    %v2235 = vld [vmem:[%s6 + $0x14] sm:$0xf]
    %v2236 = vld [vmem:[%s6 + $0x18] sm:$0xf]
    %v2237 = vld [vmem:[%s6 + $0x1c] sm:$0xf]
    %v2246 = vunpack.c.l.b16 %v2230
    %v2247 = vunpack.c.l.b16 %v2231
    %v2248 = vunpack.c.l.b16 %v2232
    %v2249 = vunpack.c.l.b16 %v2233
    %v2250 = vunpack.c.l.b16 %v2234
    %v2251 = vunpack.c.l.b16 %v2235
    %v2252 = vunpack.c.l.b16 %v2236
    %v2253 = vunpack.c.l.b16 %v2237
    %v2254 = vpack.c.b16 %v2247, %v2246
    %v2255 = vpack.c.b16 %v2249, %v2248
    %v2256 = vpack.c.b16 %v2251, %v2250
    %v2257 = vpack.c.b16 %v2253, %v2252
    %v2263 = vsel %vm168, %v2228, 0
    %v2266 = vsel %vm168, %v2229, 0
    %2268 = vmatpush.bf16.msra.mxu0 0
    %2269 = vmatpush.bf16.msra.mxu0 0
    %2270 = vmatpush.bf16.msra.mxu0 0
    %2271 = vmatpush.bf16.msra.mxu0 0
    %2272 = vmatpush.bf16.msra.mxu0 %v2257
    %2273 = vmatpush.bf16.msra.mxu0 %v2256
    %2274 = vmatpush.bf16.msra.mxu0 %v2255
    %2275 = vmatpush.bf16.msra.mxu0 %v2254
    %2276 = vmatmul.bf16.gmra.mxu0 %v2263
    %v2277 = vpop.f32.mrf.mxu0
    %v2278 = vadd.f32 0.0, %v2277
    %v2279 = vpop.f32.mrf.mxu0
    %v2280 = vadd.f32 0.0, %v2279
    %2281 = vmatmul.bf16.gmra.mxu0 %v2266
    %v2282 = vpop.f32.mrf.mxu0
    %v2283 = vadd.f32 0.0, %v2282
    %v2284 = vpop.f32.mrf.mxu0
    %v2285 = vadd.f32 0.0, %v2284
    %2286 = vdwg.mxu0
    %s2287 = scalar_lea.vmem %s6, 32
    %v2288 = vld [vmem:[%s2287] sm:$0xf]
    %v2289 = vld [vmem:[%s2287 + $0x4] sm:$0xf]
    %v2290 = vld [vmem:[%s2287 + $0x8] sm:$0xf]
    %v2291 = vld [vmem:[%s2287 + $0xc] sm:$0xf]
    %v2292 = vld [vmem:[%s2287 + $0x10] sm:$0xf]
    %v2293 = vld [vmem:[%s2287 + $0x14] sm:$0xf]
    %v2294 = vld [vmem:[%s2287 + $0x18] sm:$0xf]
    %v2295 = vld [vmem:[%s2287 + $0x1c] sm:$0xf]
    %s2296 = scalar_lea.vmem %s6, 64
    %v2297 = vld [vmem:[%s2296] sm:$0xf]
    %v2298 = vld [vmem:[%s2296 + $0x4] sm:$0xf]
    %v2299 = vld [vmem:[%s2296 + $0x8] sm:$0xf]
    %v2300 = vld [vmem:[%s2296 + $0xc] sm:$0xf]
    %v2301 = vld [vmem:[%s2296 + $0x10] sm:$0xf]
    %v2302 = vld [vmem:[%s2296 + $0x14] sm:$0xf]
    %v2303 = vld [vmem:[%s2296 + $0x18] sm:$0xf]
    %v2304 = vld [vmem:[%s2296 + $0x1c] sm:$0xf]
    %v2313 = vunpack.c.l.b16 %v2297
    %v2314 = vunpack.c.l.b16 %v2298
    %v2315 = vunpack.c.l.b16 %v2299
    %v2316 = vunpack.c.l.b16 %v2300
    %v2317 = vunpack.c.l.b16 %v2301
    %v2318 = vunpack.c.l.b16 %v2302
    %v2319 = vunpack.c.l.b16 %v2303
    %v2320 = vunpack.c.l.b16 %v2304
    %v2321 = vpack.c.b16 %v2314, %v2313
    %v2322 = vpack.c.b16 %v2316, %v2315
    %v2323 = vpack.c.b16 %v2318, %v2317
    %v2324 = vpack.c.b16 %v2320, %v2319
    %2329 = vmatpush.bf16.msra.mxu0 0
    %2330 = vmatpush.bf16.msra.mxu0 0
    %2331 = vmatpush.bf16.msra.mxu0 0
    %2332 = vmatpush.bf16.msra.mxu0 0
    %2333 = vmatpush.bf16.msra.mxu0 %v2324
    %2334 = vmatpush.bf16.msra.mxu0 %v2323
    %2335 = vmatpush.bf16.msra.mxu0 %v2322
    %2336 = vmatpush.bf16.msra.mxu0 %v2321
    %2337 = vmatmul.bf16.gmra.mxu0 %v2263
    %v2338 = vpop.f32.mrf.mxu0
    %v2339 = vadd.f32 0.0, %v2338
    %v2340 = vpop.f32.mrf.mxu0
    %v2341 = vadd.f32 0.0, %v2340
    %2342 = vmatmul.bf16.gmra.mxu0 %v2266
    %v2343 = vpop.f32.mrf.mxu0
    %v2344 = vadd.f32 0.0, %v2343
    %v2345 = vpop.f32.mrf.mxu0
    %v2346 = vadd.f32 0.0, %v2345
    %2347 = vdwg.mxu0
    %v2352 = vrot.slane %v2278, 7
    %v2353 = vrot.slane %v2280, 7
    %v2354 = vsel %vm259, %v2352, %v2353
    %v2355 = vrot.slane %v2283, 7
    %v2356 = vsel %vm259, %v2353, %v2355
    %v2357 = vrot.slane %v2285, 7
    %v2358 = vsel %vm259, %v2355, %v2357
    %v2363 = vsel %vm259, 0.0, %v2352
    %v2364 = vsel %vm276, 0.0, %v2363
    %v2365 = vsel %vm277, 0.0, %v2354
    %v2366 = vsel %vm278, 0.0, %v2356
    %v2367 = vsel %vm279, 0.0, %v2358
    %v2376 = vunpack.c.l.b16 %v2288
    %v2377 = vunpack.c.l.b16 %v2289
    %v2378 = vunpack.c.l.b16 %v2290
    %v2379 = vunpack.c.l.b16 %v2291
    %v2380 = vunpack.c.l.b16 %v2292
    %v2381 = vunpack.c.l.b16 %v2293
    %v2382 = vunpack.c.l.b16 %v2294
    %v2383 = vunpack.c.l.b16 %v2295
    %v2384 = vpack.c.b16 %v2377, %v2376
    %v2385 = vpack.c.b16 %v2379, %v2378
    %v2386 = vpack.c.b16 %v2381, %v2380
    %v2387 = vpack.c.b16 %v2383, %v2382
    %2392 = vmatpush.bf16.msra.mxu0 0
    %2393 = vmatpush.bf16.msra.mxu0 0
    %2394 = vmatpush.bf16.msra.mxu0 0
    %2395 = vmatpush.bf16.msra.mxu0 0
    %2396 = vmatpush.bf16.msra.mxu0 %v2387
    %2397 = vmatpush.bf16.msra.mxu0 %v2386
    %2398 = vmatpush.bf16.msra.mxu0 %v2385
    %2399 = vmatpush.bf16.msra.mxu0 %v2384
    %2400 = vmatmul.bf16.gmra.mxu0 %v2263
    %v2401 = vpop.f32.mrf.mxu0
    %v2402 = vadd.f32 %v2364, %v2401
    %v2403 = vpop.f32.mrf.mxu0
    %v2404 = vadd.f32 %v2365, %v2403
    %2405 = vmatmul.bf16.gmra.mxu0 %v2266
    %v2406 = vpop.f32.mrf.mxu0
    %v2407 = vadd.f32 %v2366, %v2406
    %v2408 = vpop.f32.mrf.mxu0
    %v2409 = vadd.f32 %v2367, %v2408
    %2410 = vdwg.mxu0
    %v2415 = vrot.slane %v2339, 1
    %v2416 = vrot.slane %v2341, 1
    %v2417 = vsel %vm331, %v2415, %v2416
    %v2418 = vrot.slane %v2344, 1
    %v2419 = vsel %vm331, %v2416, %v2418
    %v2420 = vrot.slane %v2346, 1
    %v2421 = vsel %vm331, %v2418, %v2420
    %v2426 = vsel %vm331, %v2420, 0.0
    %v2427 = vsel %vm348, 0.0, %v2417
    %v2428 = vsel %vm349, 0.0, %v2419
    %v2429 = vsel %vm350, 0.0, %v2421
    %v2430 = vsel %vm351, 0.0, %v2426
    %v2431 = vadd.f32 %v2402, %v2427
    %v2432 = vadd.f32 %v2404, %v2428
    %v2433 = vadd.f32 %v2407, %v2429
    %v2434 = vadd.f32 %v2409, %v2430
    %v2435 = vsel %vm168, %v2431, 0.0
    %v2436 = vsel %vm168, %v2432, 0.0
    %v2437 = vadd.f32 %v2435, %v2436
    %v2438 = vsel %vm168, %v2433, 0.0
    %v2439 = vadd.f32 %v2437, %v2438
    %v2440 = vsel %vm168, %v2434, 0.0
    %v2441 = vadd.f32 %v2439, %v2440
    %v2442 = vrot.slane %v2441, 4
    %v2443 = vadd.f32 %v2441, %v2442
    %v2444 = vrot.slane %v2443, 2
    %v2445 = vadd.f32 %v2443, %v2444
    %v2446 = vrot.slane %v2445, 1
    %v2447 = vadd.f32 %v2445, %v2446
    %2449 = vrot.lane.b32.xlu0 %v2447, 124
    %v2450 = vpop.permute.xlu0 %2449
    %2452 = vrot.lane.b32.xlu0 %v2447, 60
    %v2453 = vpop.permute.xlu0 %2452
    %v2455 = vsel %vm1294, %v2450, %v2453
    %v2456 = vadd.f32 %v2447, %v2455
    %2458 = vrot.lane.b32.xlu0 %v2456, 120
    %v2459 = vpop.permute.xlu0 %2458
    %2461 = vrot.lane.b32.xlu0 %v2456, 56
    %v2462 = vpop.permute.xlu0 %2461
    %v2464 = vsel %vm1304, %v2459, %v2462
    %v2465 = vadd.f32 %v2456, %v2464
    %2467 = vrot.lane.b32.xlu0 %v2465, 112
    %v2468 = vpop.permute.xlu0 %2467
    %2470 = vrot.lane.b32.xlu0 %v2465, 48
    %v2471 = vpop.permute.xlu0 %2470
    %v2473 = vsel %vm1314, %v2468, %v2471
    %v2474 = vadd.f32 %v2465, %v2473
    %2476 = vrot.lane.b32.xlu0 %v2474, 96
    %v2477 = vpop.permute.xlu0 %2476
    %2479 = vrot.lane.b32.xlu0 %v2474, 32
    %v2480 = vpop.permute.xlu0 %2479
    %v2482 = vsel %vm1324, %v2477, %v2480
    %v2483 = vadd.f32 %v2474, %v2482
    %v2484 = vmul.f32 %v2483, 0.001953125
    %v2485 = vperm.slane %v2484, 0
    %v2486 = vsub.f32 %v2431, %v2485
    %v2487 = vsub.f32 %v2432, %v2485
    %v2488 = vsub.f32 %v2433, %v2485
    %v2489 = vsub.f32 %v2434, %v2485
    %v2490 = vmul.f32 %v2486, %v2486
    %v2491 = vmul.f32 %v2487, %v2487
    %v2492 = vmul.f32 %v2488, %v2488
    %v2493 = vmul.f32 %v2489, %v2489
    %v2494 = vsel %vm168, %v2490, 0.0
    %v2495 = vsel %vm168, %v2491, 0.0
    %v2496 = vadd.f32 %v2494, %v2495
    %v2497 = vsel %vm168, %v2492, 0.0
    %v2498 = vadd.f32 %v2496, %v2497
    %v2499 = vsel %vm168, %v2493, 0.0
    %v2500 = vadd.f32 %v2498, %v2499
    %v2501 = vrot.slane %v2500, 4
    %v2502 = vadd.f32 %v2500, %v2501
    %v2503 = vrot.slane %v2502, 2
    %v2504 = vadd.f32 %v2502, %v2503
    %v2505 = vrot.slane %v2504, 1
    %v2506 = vadd.f32 %v2504, %v2505
    %2508 = vrot.lane.b32.xlu0 %v2506, 124
    %v2509 = vpop.permute.xlu0 %2508
    %2511 = vrot.lane.b32.xlu0 %v2506, 60
    %v2512 = vpop.permute.xlu0 %2511
    %v2514 = vsel %vm1294, %v2509, %v2512
    %v2515 = vadd.f32 %v2506, %v2514
    %2517 = vrot.lane.b32.xlu0 %v2515, 120
    %v2518 = vpop.permute.xlu0 %2517
    %2520 = vrot.lane.b32.xlu0 %v2515, 56
    %v2521 = vpop.permute.xlu0 %2520
    %v2523 = vsel %vm1304, %v2518, %v2521
    %v2524 = vadd.f32 %v2515, %v2523
    %2526 = vrot.lane.b32.xlu0 %v2524, 112
    %v2527 = vpop.permute.xlu0 %2526
    %2529 = vrot.lane.b32.xlu0 %v2524, 48
    %v2530 = vpop.permute.xlu0 %2529
    %v2532 = vsel %vm1314, %v2527, %v2530
    %v2533 = vadd.f32 %v2524, %v2532
    %2535 = vrot.lane.b32.xlu0 %v2533, 96
    %v2536 = vpop.permute.xlu0 %2535
    %2538 = vrot.lane.b32.xlu0 %v2533, 32
    %v2539 = vpop.permute.xlu0 %2538
    %v2541 = vsel %vm1324, %v2536, %v2539
    %v2542 = vadd.f32 %v2533, %v2541
    %v2543 = vmul.f32 %v2542, 0.001953125
    %v2544 = vadd.f32 %v2543, 1e-05
    %v2545 = vrsqrt.pop %v2544
    %v2546 = vmul.f32 %v2545, %v2544
    %v2547 = vmul.f32 %v2546, %v2545
    %v2548 = vmul.f32 0.5, %v2547
    %v2549 = vsub.f32 1.5, %v2548
    %v2550 = vmul.f32 %v2545, %v2549
    %vm2551 = vweird.f32 %v2544
    %vm2552 = vweird.f32 %v2545
    %vm2553 = vmor %vm2551, %vm2552
    %v2554 = vsel %vm2553, %v2545, %v2550
    %v2555 = vperm.slane %v2554, 0
    %v2556 = vmul.f32 %v2486, %v2555
    %v2557 = vmul.f32 %v2487, %v2555
    %v2558 = vmul.f32 %v2488, %v2555
    %v2559 = vmul.f32 %v2489, %v2555
    %v2560 = vxor.u32 %v2556, 2147483648
    %v2561 = vxor.u32 %v2557, 2147483648
    %v2562 = vxor.u32 %v2558, 2147483648
    %v2563 = vxor.u32 %v2559, 2147483648
    %v2564 = vmul.f32 %v2560, 1.442695
    %v2565 = vpow.pop %v2564
    %v2566 = vmul.f32 %v2561, 1.442695
    %v2567 = vpow.pop %v2566
    %v2568 = vmul.f32 %v2562, 1.442695
    %v2569 = vpow.pop %v2568
    %v2570 = vmul.f32 %v2563, 1.442695
    %v2571 = vpow.pop %v2570
    %v2572 = vadd.f32 %v2565, 1.0
    %v2573 = vadd.f32 %v2567, 1.0
    %v2574 = vadd.f32 %v2569, 1.0
    %v2575 = vadd.f32 %v2571, 1.0
    %v2576 = vrcp.pop %v2572
    %v2577 = vmul.f32 %v2572, %v2576
    %v2578 = vsub.f32 1.0, %v2577
    %v2579 = vmul.f32 %v2576, %v2578
    %v2580 = vadd.f32 %v2576, %v2579
    %vm2581 = vweird.f32 %v2572
    %vm2582 = vweird.f32 %v2576
    %vm2583 = vmor %vm2581, %vm2582
    %v2584 = vsel %vm2583, %v2576, %v2580
    %v2585 = vand.u32 2147483647, %v2572
    %vm2586 = vcmp.eq.f32.partialorder %v2585, 8.507059e+37
    %v2587 = vand.u32 %v2572, 2147483648
    %v2588 = vor.u32 1.1754944e-38, %v2587
    %v2589 = vsel %vm2586, %v2588, %v2584
    %v2590 = vmul.f32 1.0, %v2589
    %v2591 = vrcp.pop %v2573
    %v2592 = vmul.f32 %v2573, %v2591
    %v2593 = vsub.f32 1.0, %v2592
    %v2594 = vmul.f32 %v2591, %v2593
    %v2595 = vadd.f32 %v2591, %v2594
    %vm2596 = vweird.f32 %v2573
    %vm2597 = vweird.f32 %v2591
    %vm2598 = vmor %vm2596, %vm2597
    %v2599 = vsel %vm2598, %v2591, %v2595
    %v2600 = vand.u32 2147483647, %v2573
    %vm2601 = vcmp.eq.f32.partialorder %v2600, 8.507059e+37
    %v2602 = vand.u32 %v2573, 2147483648
    %v2603 = vor.u32 1.1754944e-38, %v2602
    %v2604 = vsel %vm2601, %v2603, %v2599
    %v2605 = vmul.f32 1.0, %v2604
    %v2606 = vrcp.pop %v2574
    %v2607 = vmul.f32 %v2574, %v2606
    %v2608 = vsub.f32 1.0, %v2607
    %v2609 = vmul.f32 %v2606, %v2608
    %v2610 = vadd.f32 %v2606, %v2609
    %vm2611 = vweird.f32 %v2574
    %vm2612 = vweird.f32 %v2606
    %vm2613 = vmor %vm2611, %vm2612
    %v2614 = vsel %vm2613, %v2606, %v2610
    %v2615 = vand.u32 2147483647, %v2574
    %vm2616 = vcmp.eq.f32.partialorder %v2615, 8.507059e+37
    %v2617 = vand.u32 %v2574, 2147483648
    %v2618 = vor.u32 1.1754944e-38, %v2617
    %v2619 = vsel %vm2616, %v2618, %v2614
    %v2620 = vmul.f32 1.0, %v2619
    %v2621 = vrcp.pop %v2575
    %v2622 = vmul.f32 %v2575, %v2621
    %v2623 = vsub.f32 1.0, %v2622
    %v2624 = vmul.f32 %v2621, %v2623
    %v2625 = vadd.f32 %v2621, %v2624
    %vm2626 = vweird.f32 %v2575
    %vm2627 = vweird.f32 %v2621
    %vm2628 = vmor %vm2626, %vm2627
    %v2629 = vsel %vm2628, %v2621, %v2625
    %v2630 = vand.u32 2147483647, %v2575
    %vm2631 = vcmp.eq.f32.partialorder %v2630, 8.507059e+37
    %v2632 = vand.u32 %v2575, 2147483648
    %v2633 = vor.u32 1.1754944e-38, %v2632
    %v2634 = vsel %vm2631, %v2633, %v2629
    %v2635 = vmul.f32 1.0, %v2634
    %v2636 = vsub.f32 %v2216, %v2220
    %v2637 = vsub.f32 %v2217, %v2221
    %v2638 = vsub.f32 %v2218, %v2222
    %v2639 = vsub.f32 %v2219, %v2223
    %v2640 = vmul.f32 %v2636, %v2590
    %v2641 = vmul.f32 %v2637, %v2605
    %v2642 = vmul.f32 %v2638, %v2620
    %v2643 = vmul.f32 %v2639, %v2635
    %v2644 = vadd.f32 %v2220, %v2640
    %v2645 = vadd.f32 %v2221, %v2641
    %v2646 = vadd.f32 %v2222, %v2642
    %v2647 = vadd.f32 %v2223, %v2643
    %vm2648 = vcmp.gt.f32.partialorder %v2644, 1.0
    %vm2649 = vcmp.gt.f32.partialorder %v2645, 1.0
    %vm2650 = vcmp.gt.f32.partialorder %v2646, 1.0
    %vm2651 = vcmp.gt.f32.partialorder %v2647, 1.0
    %v2652 = vsel %vm2648, 1, 0
    %v2653 = vsel %vm2649, 1, 0
    %v2654 = vsel %vm2650, 1, 0
    %v2655 = vsel %vm2651, 1, 0
    %v2656 = vcvt.s32.f32 %v2652
    %v2657 = vcvt.s32.f32 %v2653
    %v2658 = vcvt.s32.f32 %v2654
    %v2659 = vcvt.s32.f32 %v2655
    %v2660 = vsub.f32 1.0, %v2656
    %v2661 = vsub.f32 1.0, %v2657
    %v2662 = vsub.f32 1.0, %v2658
    %v2663 = vsub.f32 1.0, %v2659
    %v2664 = vmul.f32 %v2660, %v2644
    %v2665 = vmul.f32 %v2661, %v2645
    %v2666 = vmul.f32 %v2662, %v2646
    %v2667 = vmul.f32 %v2663, %v2647
    %2668 = vst.msk [vmem:[%s16] sm:$0xff] %vm168, %v2664
    %2669 = vst.msk [vmem:[%s16 + $0x8] sm:$0xff] %vm168, %v2665
    %2670 = vst.msk [vmem:[%s16 + $0x10] sm:$0xff] %vm168, %v2666
    %2671 = vst.msk [vmem:[%s16 + $0x18] sm:$0xff] %vm168, %v2667
    %v2672 = vpack.c.bf16 %v2656, %v2656
    %v2673 = vpack.c.bf16 %v2657, %v2657
    %v2674 = vpack.c.bf16 %v2658, %v2658
    %v2675 = vpack.c.bf16 %v2659, %v2659
    %2676 = vst.msk [vmem:[%s20] sm:$0xf] %vm1859, %v2672
    %2677 = vst.msk [vmem:[%s20 + $0x4] sm:$0xf] %vm1859, %v2673
    %2678 = vst.msk [vmem:[%s20 + $0x8] sm:$0xf] %vm1859, %v2674
    %2679 = vst.msk [vmem:[%s20 + $0xc] sm:$0xf] %vm1859, %v2675
    %v2680 = vsel %vm168, %v2656, 0.0
    %v2681 = vsel %vm168, %v2657, 0.0
    %v2682 = vadd.f32 %v2680, %v2681
    %v2683 = vsel %vm168, %v2658, 0.0
    %v2684 = vadd.f32 %v2682, %v2683
    %v2685 = vsel %vm168, %v2659, 0.0
    %v2686 = vadd.f32 %v2684, %v2685
    %v2687 = vrot.slane %v2686, 4
    %v2688 = vadd.f32 %v2686, %v2687
    %v2689 = vrot.slane %v2688, 2
    %v2690 = vadd.f32 %v2688, %v2689
    %v2691 = vrot.slane %v2690, 1
    %v2692 = vadd.f32 %v2690, %v2691
    %v2693 = vsel %vm168, %v2692, 0.0
    %2694 = vadd.xlane.f32.xlu0 %v2693
    %v2695 = vpop.xlane.xlu0 %2694
    %v2696 = vld [vmem:[%s7] sm:$0xf]
    %v2697 = vld [vmem:[%s7 + $0x4] sm:$0xf]
    %v2698 = vld [vmem:[%s7 + $0x8] sm:$0xf]
    %v2699 = vld [vmem:[%s7 + $0xc] sm:$0xf]
    %v2700 = vld [vmem:[%s7 + $0x10] sm:$0xf]
    %v2701 = vld [vmem:[%s7 + $0x14] sm:$0xf]
    %v2702 = vld [vmem:[%s7 + $0x18] sm:$0xf]
    %v2703 = vld [vmem:[%s7 + $0x1c] sm:$0xf]
    %v2704 = vld [vmem:[%s8] sm:$0xf]
    %v2705 = vld [vmem:[%s8 + $0x4] sm:$0xf]
    %v2706 = vld [vmem:[%s8 + $0x8] sm:$0xf]
    %v2707 = vld [vmem:[%s8 + $0xc] sm:$0xf]
    %v2708 = vld [vmem:[%s8 + $0x10] sm:$0xf]
    %v2709 = vld [vmem:[%s8 + $0x14] sm:$0xf]
    %v2710 = vld [vmem:[%s8 + $0x18] sm:$0xf]
    %v2711 = vld [vmem:[%s8 + $0x1c] sm:$0xf]
    %v2720 = vunpack.c.l.b16 %v2704
    %v2721 = vunpack.c.l.b16 %v2705
    %v2722 = vunpack.c.l.b16 %v2706
    %v2723 = vunpack.c.l.b16 %v2707
    %v2724 = vunpack.c.l.b16 %v2708
    %v2725 = vunpack.c.l.b16 %v2709
    %v2726 = vunpack.c.l.b16 %v2710
    %v2727 = vunpack.c.l.b16 %v2711
    %v2728 = vpack.c.b16 %v2721, %v2720
    %v2729 = vpack.c.b16 %v2723, %v2722
    %v2730 = vpack.c.b16 %v2725, %v2724
    %v2731 = vpack.c.b16 %v2727, %v2726
    %2736 = vmatpush.bf16.msra.mxu0 0
    %2737 = vmatpush.bf16.msra.mxu0 0
    %2738 = vmatpush.bf16.msra.mxu0 0
    %2739 = vmatpush.bf16.msra.mxu0 0
    %2740 = vmatpush.bf16.msra.mxu0 %v2731
    %2741 = vmatpush.bf16.msra.mxu0 %v2730
    %2742 = vmatpush.bf16.msra.mxu0 %v2729
    %2743 = vmatpush.bf16.msra.mxu0 %v2728
    %2744 = vmatmul.bf16.gmra.mxu0 %v1923
    %v2745 = vpop.f32.mrf.mxu0
    %v2746 = vadd.f32 0.0, %v2745
    %v2747 = vpop.f32.mrf.mxu0
    %v2748 = vadd.f32 0.0, %v2747
    %2749 = vmatmul.bf16.gmra.mxu0 %v1926
    %v2750 = vpop.f32.mrf.mxu0
    %v2751 = vadd.f32 0.0, %v2750
    %v2752 = vpop.f32.mrf.mxu0
    %v2753 = vadd.f32 0.0, %v2752
    %2754 = vdwg.mxu0
    %v2759 = vunpack.c.l.b16 %v2672
    %v2760 = vunpack.c.l.b16 %v2673
    %v2761 = vunpack.c.l.b16 %v2674
    %v2762 = vunpack.c.l.b16 %v2675
    %v2763 = vpack.c.b16 %v2760, %v2759
    %v2764 = vpack.c.b16 %v2762, %v2761
    %v2773 = vunpack.c.l.b16 %v2696
    %v2774 = vunpack.c.l.b16 %v2697
    %v2775 = vunpack.c.l.b16 %v2698
    %v2776 = vunpack.c.l.b16 %v2699
    %v2777 = vunpack.c.l.b16 %v2700
    %v2778 = vunpack.c.l.b16 %v2701
    %v2779 = vunpack.c.l.b16 %v2702
    %v2780 = vunpack.c.l.b16 %v2703
    %v2781 = vpack.c.b16 %v2774, %v2773
    %v2782 = vpack.c.b16 %v2776, %v2775
    %v2783 = vpack.c.b16 %v2778, %v2777
    %v2784 = vpack.c.b16 %v2780, %v2779
    %v2790 = vsel %vm168, %v2763, 0
    %v2793 = vsel %vm168, %v2764, 0
    %2795 = vmatpush.bf16.msra.mxu0 0
    %2796 = vmatpush.bf16.msra.mxu0 0
    %2797 = vmatpush.bf16.msra.mxu0 0
    %2798 = vmatpush.bf16.msra.mxu0 0
    %2799 = vmatpush.bf16.msra.mxu0 %v2784
    %2800 = vmatpush.bf16.msra.mxu0 %v2783
    %2801 = vmatpush.bf16.msra.mxu0 %v2782
    %2802 = vmatpush.bf16.msra.mxu0 %v2781
    %2803 = vmatmul.bf16.gmra.mxu0 %v2790
    %v2804 = vpop.f32.mrf.mxu0
    %v2805 = vadd.f32 %v2746, %v2804
    %v2806 = vpop.f32.mrf.mxu0
    %v2807 = vadd.f32 %v2748, %v2806
    %2808 = vmatmul.bf16.gmra.mxu0 %v2793
    %v2809 = vpop.f32.mrf.mxu0
    %v2810 = vadd.f32 %v2751, %v2809
    %v2811 = vpop.f32.mrf.mxu0
    %v2812 = vadd.f32 %v2753, %v2811
    %2813 = vdwg.mxu0
    %v2814 = vadd.f32 %v2805, %v2807
    %v2815 = vadd.f32 %v2814, %v2810
    %v2816 = vadd.f32 %v2815, %v2812
    %v2817 = vrot.slane %v2816, 4
    %v2818 = vadd.f32 %v2816, %v2817
    %v2819 = vrot.slane %v2818, 2
    %v2820 = vadd.f32 %v2818, %v2819
    %v2821 = vrot.slane %v2820, 1
    %v2822 = vadd.f32 %v2820, %v2821
    %2824 = vrot.lane.b32.xlu0 %v2822, 120
    %v2825 = vpop.permute.xlu0 %2824
    %v2827 = vadd.f32 %v2822, %v2825
    %2829 = vrot.lane.b32.xlu0 %v2827, 112
    %v2830 = vpop.permute.xlu0 %2829
    %v2832 = vadd.f32 %v2827, %v2830
    %2834 = vrot.lane.b32.xlu0 %v2832, 96
    %v2835 = vpop.permute.xlu0 %2834
    %v2837 = vadd.f32 %v2832, %v2835
    %2839 = vrot.lane.b32.xlu0 %v2837, 64
    %v2840 = vpop.permute.xlu0 %2839
    %v2842 = vadd.f32 %v2837, %v2840
    %v2843 = vmul.f32 %v2842, 0.001953125
    %v2844 = vperm.slane %v2843, 0
    %v2845 = vsub.f32 %v2805, %v2844
    %v2846 = vsub.f32 %v2807, %v2844
    %v2847 = vsub.f32 %v2810, %v2844
    %v2848 = vsub.f32 %v2812, %v2844
    %v2849 = vmul.f32 %v2845, %v2845
    %v2850 = vmul.f32 %v2846, %v2846
    %v2851 = vmul.f32 %v2847, %v2847
    %v2852 = vmul.f32 %v2848, %v2848
    %v2853 = vadd.f32 %v2849, %v2850
    %v2854 = vadd.f32 %v2853, %v2851
    %v2855 = vadd.f32 %v2854, %v2852
    %v2856 = vrot.slane %v2855, 4
    %v2857 = vadd.f32 %v2855, %v2856
    %v2858 = vrot.slane %v2857, 2
    %v2859 = vadd.f32 %v2857, %v2858
    %v2860 = vrot.slane %v2859, 1
    %v2861 = vadd.f32 %v2859, %v2860
    %2863 = vrot.lane.b32.xlu0 %v2861, 120
    %v2864 = vpop.permute.xlu0 %2863
    %v2866 = vadd.f32 %v2861, %v2864
    %2868 = vrot.lane.b32.xlu0 %v2866, 112
    %v2869 = vpop.permute.xlu0 %2868
    %v2871 = vadd.f32 %v2866, %v2869
    %2873 = vrot.lane.b32.xlu0 %v2871, 96
    %v2874 = vpop.permute.xlu0 %2873
    %v2876 = vadd.f32 %v2871, %v2874
    %2878 = vrot.lane.b32.xlu0 %v2876, 64
    %v2879 = vpop.permute.xlu0 %2878
    %v2881 = vadd.f32 %v2876, %v2879
    %v2882 = vmul.f32 %v2881, 0.001953125
    %v2883 = vadd.f32 %v2882, 1e-05
    %v2884 = vrsqrt.pop %v2883
    %v2885 = vmul.f32 %v2884, %v2883
    %v2886 = vmul.f32 %v2885, %v2884
    %v2887 = vmul.f32 0.5, %v2886
    %v2888 = vsub.f32 1.5, %v2887
    %v2889 = vmul.f32 %v2884, %v2888
    %vm2890 = vweird.f32 %v2883
    %vm2891 = vweird.f32 %v2884
    %vm2892 = vmor %vm2890, %vm2891
    %v2893 = vsel %vm2892, %v2884, %v2889
    %v2894 = vperm.slane %v2893, 0
    %v2895 = vmul.f32 %v2845, %v2894
    %v2896 = vmul.f32 %v2846, %v2894
    %v2897 = vmul.f32 %v2847, %v2894
    %v2898 = vmul.f32 %v2848, %v2894
    %v2899 = vld [vmem:[%s13] sm:$0xff]
    %v2900 = vld [vmem:[%s13 + $0x8] sm:$0xff]
    %v2901 = vld [vmem:[%s13 + $0x10] sm:$0xff]
    %v2902 = vld [vmem:[%s13 + $0x18] sm:$0xff]
    %v2903 = vadd.f32 %v2895, %v2899
    %v2904 = vadd.f32 %v2896, %v2900
    %v2905 = vadd.f32 %v2897, %v2901
    %v2906 = vadd.f32 %v2898, %v2902
    %v2907 = vpack.c.bf16 %v2904, %v2903
    %v2908 = vpack.c.bf16 %v2906, %v2905
    %v2909 = vld [vmem:[%s9] sm:$0xf]
    %v2910 = vld [vmem:[%s9 + $0x4] sm:$0xf]
    %v2911 = vld [vmem:[%s9 + $0x8] sm:$0xf]
    %v2912 = vld [vmem:[%s9 + $0xc] sm:$0xf]
    %v2913 = vld [vmem:[%s9 + $0x10] sm:$0xf]
    %v2914 = vld [vmem:[%s9 + $0x14] sm:$0xf]
    %v2915 = vld [vmem:[%s9 + $0x18] sm:$0xf]
    %v2916 = vld [vmem:[%s9 + $0x1c] sm:$0xf]
    %v2917 = vld [vmem:[%s9 + $0x20] sm:$0xf]
    %v2918 = vld [vmem:[%s9 + $0x24] sm:$0xf]
    %v2919 = vld [vmem:[%s9 + $0x28] sm:$0xf]
    %v2920 = vld [vmem:[%s9 + $0x2c] sm:$0xf]
    %v2921 = vld [vmem:[%s9 + $0x30] sm:$0xf]
    %v2922 = vld [vmem:[%s9 + $0x34] sm:$0xf]
    %v2923 = vld [vmem:[%s9 + $0x38] sm:$0xf]
    %v2924 = vld [vmem:[%s9 + $0x3c] sm:$0xf]
    %v2941 = vunpack.c.l.b16 %v2909
    %v2942 = vunpack.c.l.b16 %v2910
    %v2943 = vunpack.c.l.b16 %v2911
    %v2944 = vunpack.c.l.b16 %v2912
    %v2945 = vunpack.c.l.b16 %v2913
    %v2946 = vunpack.c.l.b16 %v2914
    %v2947 = vunpack.c.l.b16 %v2915
    %v2948 = vunpack.c.l.b16 %v2916
    %v2949 = vunpack.c.l.b16 %v2917
    %v2950 = vunpack.c.l.b16 %v2918
    %v2951 = vunpack.c.l.b16 %v2919
    %v2952 = vunpack.c.l.b16 %v2920
    %v2953 = vunpack.c.l.b16 %v2921
    %v2954 = vunpack.c.l.b16 %v2922
    %v2955 = vunpack.c.l.b16 %v2923
    %v2956 = vunpack.c.l.b16 %v2924
    %v2957 = vpack.c.b16 %v2942, %v2941
    %v2958 = vpack.c.b16 %v2944, %v2943
    %v2959 = vpack.c.b16 %v2946, %v2945
    %v2960 = vpack.c.b16 %v2948, %v2947
    %v2961 = vpack.c.b16 %v2950, %v2949
    %v2962 = vpack.c.b16 %v2952, %v2951
    %v2963 = vpack.c.b16 %v2954, %v2953
    %v2964 = vpack.c.b16 %v2956, %v2955
    %2973 = vmatpush.bf16.msra.mxu0 %v2964
    %2974 = vmatpush.bf16.msra.mxu0 %v2963
    %2975 = vmatpush.bf16.msra.mxu0 %v2962
    %2976 = vmatpush.bf16.msra.mxu0 %v2961
    %2977 = vmatpush.bf16.msra.mxu0 %v2960
    %2978 = vmatpush.bf16.msra.mxu0 %v2959
    %2979 = vmatpush.bf16.msra.mxu0 %v2958
    %2980 = vmatpush.bf16.msra.mxu0 %v2957
    %2981 = vmatmul.bf16.gmra.mxu0 %v2907
    %v2982 = vpop.f32.mrf.mxu0
    %v2983 = vadd.f32 0.0, %v2982
    %v2984 = vpop.f32.mrf.mxu0
    %v2985 = vadd.f32 0.0, %v2984
    %2986 = vmatmul.bf16.gmra.mxu0 %v2908
    %v2987 = vpop.f32.mrf.mxu0
    %v2988 = vadd.f32 0.0, %v2987
    %v2989 = vpop.f32.mrf.mxu0
    %v2990 = vadd.f32 0.0, %v2989
    %2991 = vdwg.mxu0
    %s2992 = scalar_lea.vmem %s9, 64
    %v2993 = vld [vmem:[%s2992] sm:$0xf]
    %v2994 = vld [vmem:[%s2992 + $0x4] sm:$0xf]
    %v2995 = vld [vmem:[%s2992 + $0x8] sm:$0xf]
    %v2996 = vld [vmem:[%s2992 + $0xc] sm:$0xf]
    %v2997 = vld [vmem:[%s2992 + $0x10] sm:$0xf]
    %v2998 = vld [vmem:[%s2992 + $0x14] sm:$0xf]
    %v2999 = vld [vmem:[%s2992 + $0x18] sm:$0xf]
    %v3000 = vld [vmem:[%s2992 + $0x1c] sm:$0xf]
    %v3001 = vld [vmem:[%s2992 + $0x20] sm:$0xf]
    %v3002 = vld [vmem:[%s2992 + $0x24] sm:$0xf]
    %v3003 = vld [vmem:[%s2992 + $0x28] sm:$0xf]
    %v3004 = vld [vmem:[%s2992 + $0x2c] sm:$0xf]
    %v3005 = vld [vmem:[%s2992 + $0x30] sm:$0xf]
    %v3006 = vld [vmem:[%s2992 + $0x34] sm:$0xf]
    %v3007 = vld [vmem:[%s2992 + $0x38] sm:$0xf]
    %v3008 = vld [vmem:[%s2992 + $0x3c] sm:$0xf]
    %s3009 = scalar_lea.vmem %s9, 128
    %v3010 = vld [vmem:[%s3009] sm:$0xf]
    %v3011 = vld [vmem:[%s3009 + $0x4] sm:$0xf]
    %v3012 = vld [vmem:[%s3009 + $0x8] sm:$0xf]
    %v3013 = vld [vmem:[%s3009 + $0xc] sm:$0xf]
    %v3014 = vld [vmem:[%s3009 + $0x10] sm:$0xf]
    %v3015 = vld [vmem:[%s3009 + $0x14] sm:$0xf]
    %v3016 = vld [vmem:[%s3009 + $0x18] sm:$0xf]
    %v3017 = vld [vmem:[%s3009 + $0x1c] sm:$0xf]
    %v3018 = vld [vmem:[%s3009 + $0x20] sm:$0xf]
    %v3019 = vld [vmem:[%s3009 + $0x24] sm:$0xf]
    %v3020 = vld [vmem:[%s3009 + $0x28] sm:$0xf]
    %v3021 = vld [vmem:[%s3009 + $0x2c] sm:$0xf]
    %v3022 = vld [vmem:[%s3009 + $0x30] sm:$0xf]
    %v3023 = vld [vmem:[%s3009 + $0x34] sm:$0xf]
    %v3024 = vld [vmem:[%s3009 + $0x38] sm:$0xf]
    %v3025 = vld [vmem:[%s3009 + $0x3c] sm:$0xf]
    %v3042 = vunpack.c.l.b16 %v3010
    %v3043 = vunpack.c.l.b16 %v3011
    %v3044 = vunpack.c.l.b16 %v3012
    %v3045 = vunpack.c.l.b16 %v3013
    %v3046 = vunpack.c.l.b16 %v3014
    %v3047 = vunpack.c.l.b16 %v3015
    %v3048 = vunpack.c.l.b16 %v3016
    %v3049 = vunpack.c.l.b16 %v3017
    %v3050 = vunpack.c.l.b16 %v3018
    %v3051 = vunpack.c.l.b16 %v3019
    %v3052 = vunpack.c.l.b16 %v3020
    %v3053 = vunpack.c.l.b16 %v3021
    %v3054 = vunpack.c.l.b16 %v3022
    %v3055 = vunpack.c.l.b16 %v3023
    %v3056 = vunpack.c.l.b16 %v3024
    %v3057 = vunpack.c.l.b16 %v3025
    %v3058 = vpack.c.b16 %v3043, %v3042
    %v3059 = vpack.c.b16 %v3045, %v3044
    %v3060 = vpack.c.b16 %v3047, %v3046
    %v3061 = vpack.c.b16 %v3049, %v3048
    %v3062 = vpack.c.b16 %v3051, %v3050
    %v3063 = vpack.c.b16 %v3053, %v3052
    %v3064 = vpack.c.b16 %v3055, %v3054
    %v3065 = vpack.c.b16 %v3057, %v3056
    %3074 = vmatpush.bf16.msra.mxu0 %v3065
    %3075 = vmatpush.bf16.msra.mxu0 %v3064
    %3076 = vmatpush.bf16.msra.mxu0 %v3063
    %3077 = vmatpush.bf16.msra.mxu0 %v3062
    %3078 = vmatpush.bf16.msra.mxu0 %v3061
    %3079 = vmatpush.bf16.msra.mxu0 %v3060
    %3080 = vmatpush.bf16.msra.mxu0 %v3059
    %3081 = vmatpush.bf16.msra.mxu0 %v3058
    %3082 = vmatmul.bf16.gmra.mxu0 %v2907
    %v3083 = vpop.f32.mrf.mxu0
    %v3084 = vadd.f32 0.0, %v3083
    %v3085 = vpop.f32.mrf.mxu0
    %v3086 = vadd.f32 0.0, %v3085
    %3087 = vmatmul.bf16.gmra.mxu0 %v2908
    %v3088 = vpop.f32.mrf.mxu0
    %v3089 = vadd.f32 0.0, %v3088
    %v3090 = vpop.f32.mrf.mxu0
    %v3091 = vadd.f32 0.0, %v3090
    %3092 = vdwg.mxu0
    %v3097 = vrot.slane %v2983, 7
    %v3098 = vrot.slane %v2985, 7
    %v3099 = vsel %vm259, %v3097, %v3098
    %v3100 = vrot.slane %v2988, 7
    %v3101 = vsel %vm259, %v3098, %v3100
    %v3102 = vrot.slane %v2990, 7
    %v3103 = vsel %vm259, %v3100, %v3102
    %v3108 = vsel %vm259, 0.0, %v3097
    %v3109 = vsel %vm276, 0.0, %v3108
    %v3110 = vsel %vm277, 0.0, %v3099
    %v3111 = vsel %vm278, 0.0, %v3101
    %v3112 = vsel %vm279, 0.0, %v3103
    %v3129 = vunpack.c.l.b16 %v2993
    %v3130 = vunpack.c.l.b16 %v2994
    %v3131 = vunpack.c.l.b16 %v2995
    %v3132 = vunpack.c.l.b16 %v2996
    %v3133 = vunpack.c.l.b16 %v2997
    %v3134 = vunpack.c.l.b16 %v2998
    %v3135 = vunpack.c.l.b16 %v2999
    %v3136 = vunpack.c.l.b16 %v3000
    %v3137 = vunpack.c.l.b16 %v3001
    %v3138 = vunpack.c.l.b16 %v3002
    %v3139 = vunpack.c.l.b16 %v3003
    %v3140 = vunpack.c.l.b16 %v3004
    %v3141 = vunpack.c.l.b16 %v3005
    %v3142 = vunpack.c.l.b16 %v3006
    %v3143 = vunpack.c.l.b16 %v3007
    %v3144 = vunpack.c.l.b16 %v3008
    %v3145 = vpack.c.b16 %v3130, %v3129
    %v3146 = vpack.c.b16 %v3132, %v3131
    %v3147 = vpack.c.b16 %v3134, %v3133
    %v3148 = vpack.c.b16 %v3136, %v3135
    %v3149 = vpack.c.b16 %v3138, %v3137
    %v3150 = vpack.c.b16 %v3140, %v3139
    %v3151 = vpack.c.b16 %v3142, %v3141
    %v3152 = vpack.c.b16 %v3144, %v3143
    %3161 = vmatpush.bf16.msra.mxu0 %v3152
    %3162 = vmatpush.bf16.msra.mxu0 %v3151
    %3163 = vmatpush.bf16.msra.mxu0 %v3150
    %3164 = vmatpush.bf16.msra.mxu0 %v3149
    %3165 = vmatpush.bf16.msra.mxu0 %v3148
    %3166 = vmatpush.bf16.msra.mxu0 %v3147
    %3167 = vmatpush.bf16.msra.mxu0 %v3146
    %3168 = vmatpush.bf16.msra.mxu0 %v3145
    %3169 = vmatmul.bf16.gmra.mxu0 %v2907
    %v3170 = vpop.f32.mrf.mxu0
    %v3171 = vadd.f32 %v3109, %v3170
    %v3172 = vpop.f32.mrf.mxu0
    %v3173 = vadd.f32 %v3110, %v3172
    %3174 = vmatmul.bf16.gmra.mxu0 %v2908
    %v3175 = vpop.f32.mrf.mxu0
    %v3176 = vadd.f32 %v3111, %v3175
    %v3177 = vpop.f32.mrf.mxu0
    %v3178 = vadd.f32 %v3112, %v3177
    %3179 = vdwg.mxu0
    %v3184 = vrot.slane %v3084, 1
    %v3185 = vrot.slane %v3086, 1
    %v3186 = vsel %vm331, %v3184, %v3185
    %v3187 = vrot.slane %v3089, 1
    %v3188 = vsel %vm331, %v3185, %v3187
    %v3189 = vrot.slane %v3091, 1
    %v3190 = vsel %vm331, %v3187, %v3189
    %v3195 = vsel %vm331, %v3189, 0.0
    %v3196 = vsel %vm348, 0.0, %v3186
    %v3197 = vsel %vm349, 0.0, %v3188
    %v3198 = vsel %vm350, 0.0, %v3190
    %v3199 = vsel %vm351, 0.0, %v3195
    %v3200 = vadd.f32 %v3171, %v3196
    %v3201 = vadd.f32 %v3173, %v3197
    %v3202 = vadd.f32 %v3176, %v3198
    %v3203 = vadd.f32 %v3178, %v3199
    %v3204 = vadd.f32 %v3200, %v3201
    %v3205 = vadd.f32 %v3204, %v3202
    %v3206 = vadd.f32 %v3205, %v3203
    %v3207 = vrot.slane %v3206, 4
    %v3208 = vadd.f32 %v3206, %v3207
    %v3209 = vrot.slane %v3208, 2
    %v3210 = vadd.f32 %v3208, %v3209
    %v3211 = vrot.slane %v3210, 1
    %v3212 = vadd.f32 %v3210, %v3211
    %3214 = vrot.lane.b32.xlu0 %v3212, 120
    %v3215 = vpop.permute.xlu0 %3214
    %v3217 = vadd.f32 %v3212, %v3215
    %3219 = vrot.lane.b32.xlu0 %v3217, 112
    %v3220 = vpop.permute.xlu0 %3219
    %v3222 = vadd.f32 %v3217, %v3220
    %3224 = vrot.lane.b32.xlu0 %v3222, 96
    %v3225 = vpop.permute.xlu0 %3224
    %v3227 = vadd.f32 %v3222, %v3225
    %3229 = vrot.lane.b32.xlu0 %v3227, 64
    %v3230 = vpop.permute.xlu0 %3229
    %v3232 = vadd.f32 %v3227, %v3230
    %v3233 = vmul.f32 %v3232, 0.001953125
    %v3234 = vperm.slane %v3233, 0
    %v3235 = vsub.f32 %v3200, %v3234
    %v3236 = vsub.f32 %v3201, %v3234
    %v3237 = vsub.f32 %v3202, %v3234
    %v3238 = vsub.f32 %v3203, %v3234
    %v3239 = vmul.f32 %v3235, %v3235
    %v3240 = vmul.f32 %v3236, %v3236
    %v3241 = vmul.f32 %v3237, %v3237
    %v3242 = vmul.f32 %v3238, %v3238
    %v3243 = vadd.f32 %v3239, %v3240
    %v3244 = vadd.f32 %v3243, %v3241
    %v3245 = vadd.f32 %v3244, %v3242
    %v3246 = vrot.slane %v3245, 4
    %v3247 = vadd.f32 %v3245, %v3246
    %v3248 = vrot.slane %v3247, 2
    %v3249 = vadd.f32 %v3247, %v3248
    %v3250 = vrot.slane %v3249, 1
    %v3251 = vadd.f32 %v3249, %v3250
    %3253 = vrot.lane.b32.xlu0 %v3251, 120
    %v3254 = vpop.permute.xlu0 %3253
    %v3256 = vadd.f32 %v3251, %v3254
    %3258 = vrot.lane.b32.xlu0 %v3256, 112
    %v3259 = vpop.permute.xlu0 %3258
    %v3261 = vadd.f32 %v3256, %v3259
    %3263 = vrot.lane.b32.xlu0 %v3261, 96
    %v3264 = vpop.permute.xlu0 %3263
    %v3266 = vadd.f32 %v3261, %v3264
    %3268 = vrot.lane.b32.xlu0 %v3266, 64
    %v3269 = vpop.permute.xlu0 %3268
    %v3271 = vadd.f32 %v3266, %v3269
    %v3272 = vmul.f32 %v3271, 0.001953125
    %v3273 = vadd.f32 %v3272, 1e-05
    %v3274 = vrsqrt.pop %v3273
    %v3275 = vmul.f32 %v3274, %v3273
    %v3276 = vmul.f32 %v3275, %v3274
    %v3277 = vmul.f32 0.5, %v3276
    %v3278 = vsub.f32 1.5, %v3277
    %v3279 = vmul.f32 %v3274, %v3278
    %vm3280 = vweird.f32 %v3273
    %vm3281 = vweird.f32 %v3274
    %vm3282 = vmor %vm3280, %vm3281
    %v3283 = vsel %vm3282, %v3274, %v3279
    %v3284 = vperm.slane %v3283, 0
    %v3285 = vmul.f32 %v3235, %v3284
    %v3286 = vmul.f32 %v3236, %v3284
    %v3287 = vmul.f32 %v3237, %v3284
    %v3288 = vmul.f32 %v3238, %v3284
    %v3289 = vxor.u32 %v3285, 2147483648
    %v3290 = vxor.u32 %v3286, 2147483648
    %v3291 = vxor.u32 %v3287, 2147483648
    %v3292 = vxor.u32 %v3288, 2147483648
    %v3293 = vmul.f32 %v3289, 1.442695
    %v3294 = vpow.pop %v3293
    %v3295 = vmul.f32 %v3290, 1.442695
    %v3296 = vpow.pop %v3295
    %v3297 = vmul.f32 %v3291, 1.442695
    %v3298 = vpow.pop %v3297
    %v3299 = vmul.f32 %v3292, 1.442695
    %v3300 = vpow.pop %v3299
    %v3301 = vadd.f32 %v3294, 1.0
    %v3302 = vadd.f32 %v3296, 1.0
    %v3303 = vadd.f32 %v3298, 1.0
    %v3304 = vadd.f32 %v3300, 1.0
    %v3305 = vrcp.pop %v3301
    %v3306 = vmul.f32 %v3301, %v3305
    %v3307 = vsub.f32 1.0, %v3306
    %v3308 = vmul.f32 %v3305, %v3307
    %v3309 = vadd.f32 %v3305, %v3308
    %vm3310 = vweird.f32 %v3301
    %vm3311 = vweird.f32 %v3305
    %vm3312 = vmor %vm3310, %vm3311
    %v3313 = vsel %vm3312, %v3305, %v3309
    %v3314 = vand.u32 2147483647, %v3301
    %vm3315 = vcmp.eq.f32.partialorder %v3314, 8.507059e+37
    %v3316 = vand.u32 %v3301, 2147483648
    %v3317 = vor.u32 1.1754944e-38, %v3316
    %v3318 = vsel %vm3315, %v3317, %v3313
    %v3319 = vmul.f32 1.0, %v3318
    %v3320 = vrcp.pop %v3302
    %v3321 = vmul.f32 %v3302, %v3320
    %v3322 = vsub.f32 1.0, %v3321
    %v3323 = vmul.f32 %v3320, %v3322
    %v3324 = vadd.f32 %v3320, %v3323
    %vm3325 = vweird.f32 %v3302
    %vm3326 = vweird.f32 %v3320
    %vm3327 = vmor %vm3325, %vm3326
    %v3328 = vsel %vm3327, %v3320, %v3324
    %v3329 = vand.u32 2147483647, %v3302
    %vm3330 = vcmp.eq.f32.partialorder %v3329, 8.507059e+37
    %v3331 = vand.u32 %v3302, 2147483648
    %v3332 = vor.u32 1.1754944e-38, %v3331
    %v3333 = vsel %vm3330, %v3332, %v3328
    %v3334 = vmul.f32 1.0, %v3333
    %v3335 = vrcp.pop %v3303
    %v3336 = vmul.f32 %v3303, %v3335
    %v3337 = vsub.f32 1.0, %v3336
    %v3338 = vmul.f32 %v3335, %v3337
    %v3339 = vadd.f32 %v3335, %v3338
    %vm3340 = vweird.f32 %v3303
    %vm3341 = vweird.f32 %v3335
    %vm3342 = vmor %vm3340, %vm3341
    %v3343 = vsel %vm3342, %v3335, %v3339
    %v3344 = vand.u32 2147483647, %v3303
    %vm3345 = vcmp.eq.f32.partialorder %v3344, 8.507059e+37
    %v3346 = vand.u32 %v3303, 2147483648
    %v3347 = vor.u32 1.1754944e-38, %v3346
    %v3348 = vsel %vm3345, %v3347, %v3343
    %v3349 = vmul.f32 1.0, %v3348
    %v3350 = vrcp.pop %v3304
    %v3351 = vmul.f32 %v3304, %v3350
    %v3352 = vsub.f32 1.0, %v3351
    %v3353 = vmul.f32 %v3350, %v3352
    %v3354 = vadd.f32 %v3350, %v3353
    %vm3355 = vweird.f32 %v3304
    %vm3356 = vweird.f32 %v3350
    %vm3357 = vmor %vm3355, %vm3356
    %v3358 = vsel %vm3357, %v3350, %v3354
    %v3359 = vand.u32 2147483647, %v3304
    %vm3360 = vcmp.eq.f32.partialorder %v3359, 8.507059e+37
    %v3361 = vand.u32 %v3304, 2147483648
    %v3362 = vor.u32 1.1754944e-38, %v3361
    %v3363 = vsel %vm3360, %v3362, %v3358
    %v3364 = vmul.f32 1.0, %v3363
    %v3365 = vsub.f32 %v2895, %v2899
    %v3366 = vsub.f32 %v2896, %v2900
    %v3367 = vsub.f32 %v2897, %v2901
    %v3368 = vsub.f32 %v2898, %v2902
    %v3369 = vmul.f32 %v3365, %v3319
    %v3370 = vmul.f32 %v3366, %v3334
    %v3371 = vmul.f32 %v3367, %v3349
    %v3372 = vmul.f32 %v3368, %v3364
    %v3373 = vadd.f32 %v2899, %v3369
    %v3374 = vadd.f32 %v2900, %v3370
    %v3375 = vadd.f32 %v2901, %v3371
    %v3376 = vadd.f32 %v2902, %v3372
    %vm3377 = vcmp.gt.f32.partialorder %v3373, 1.0
    %vm3378 = vcmp.gt.f32.partialorder %v3374, 1.0
    %vm3379 = vcmp.gt.f32.partialorder %v3375, 1.0
    %vm3380 = vcmp.gt.f32.partialorder %v3376, 1.0
    %v3381 = vsel %vm3377, 1, 0
    %v3382 = vsel %vm3378, 1, 0
    %v3383 = vsel %vm3379, 1, 0
    %v3384 = vsel %vm3380, 1, 0
    %v3385 = vcvt.s32.f32 %v3381
    %v3386 = vcvt.s32.f32 %v3382
    %v3387 = vcvt.s32.f32 %v3383
    %v3388 = vcvt.s32.f32 %v3384
    %v3389 = vsub.f32 1.0, %v3385
    %v3390 = vsub.f32 1.0, %v3386
    %v3391 = vsub.f32 1.0, %v3387
    %v3392 = vsub.f32 1.0, %v3388
    %v3393 = vmul.f32 %v3389, %v3373
    %v3394 = vmul.f32 %v3390, %v3374
    %v3395 = vmul.f32 %v3391, %v3375
    %v3396 = vmul.f32 %v3392, %v3376
    %3397 = vst [vmem:[%s17] sm:$0xff] %v3393
    %3398 = vst [vmem:[%s17 + $0x8] sm:$0xff] %v3394
    %3399 = vst [vmem:[%s17 + $0x10] sm:$0xff] %v3395
    %3400 = vst [vmem:[%s17 + $0x18] sm:$0xff] %v3396
    %v3401 = vpack.c.bf16 %v3385, %v3385
    %v3402 = vpack.c.bf16 %v3386, %v3386
    %v3403 = vpack.c.bf16 %v3387, %v3387
    %v3404 = vpack.c.bf16 %v3388, %v3388
    %3405 = vst [vmem:[%s21] sm:$0xf] %v3401
    %3406 = vst [vmem:[%s21 + $0x4] sm:$0xf] %v3402
    %3407 = vst [vmem:[%s21 + $0x8] sm:$0xf] %v3403
    %3408 = vst [vmem:[%s21 + $0xc] sm:$0xf] %v3404
    %v3409 = vadd.f32 %v3385, %v3386
    %v3410 = vadd.f32 %v3409, %v3387
    %v3411 = vadd.f32 %v3410, %v3388
    %v3412 = vrot.slane %v3411, 4
    %v3413 = vadd.f32 %v3411, %v3412
    %v3414 = vrot.slane %v3413, 2
    %v3415 = vadd.f32 %v3413, %v3414
    %v3416 = vrot.slane %v3415, 1
    %v3417 = vadd.f32 %v3415, %v3416
    %3418 = vadd.xlane.f32.xlu0 %v3417
    %v3419 = vpop.xlane.xlu0 %3418
    %v3420 = vadd.f32 %v966, %v3419
    %v3421 = vmul.f32 %v3420, 0.00024414063
    %v3422 = vadd.f32 %v1879, %v2695
    %v3423 = vmul.f32 %v3422, 0.00048828125
    %v3424 = vadd.f32 %v3421, %v3423
    %vm3425 = vcmask 0
    %3426 = vst.msk [vmem:[#allocation2] sm:$0x1] %vm3425, %v3424
    %v3427 = vunpack.c.l.bf16 %v948
    %v3429 = vrot.slane %v3427, 1
    %v3431 = vmax.f32 %v3427, %v3429
    %v3432 = vpack.c.bf16 %v3431, %v3431
    %v3433 = vunpack.c.l.bf16 %v949
    %v3435 = vrot.slane %v3433, 1
    %v3437 = vmax.f32 %v3433, %v3435
    %v3438 = vpack.c.bf16 %v3437, %v3437
    %v3439 = vunpack.c.l.bf16 %v950
    %v3441 = vrot.slane %v3439, 1
    %v3443 = vmax.f32 %v3439, %v3441
    %v3444 = vpack.c.bf16 %v3443, %v3443
    %v3445 = vunpack.c.l.bf16 %v951
    %v3447 = vrot.slane %v3445, 1
    %v3449 = vmax.f32 %v3445, %v3447
    %v3450 = vpack.c.bf16 %v3449, %v3449
    %v3452 = vunpack.c.l.b16 %v3432
    %v3453 = vpack.c.b16 %v3452, %v3452
    %v3455 = vshll.u32 %v3453, 16
    %v3457 = vrot.slane %v3455, 1
    %v3459 = vrot.slane %v3453, 1
    %v3460 = vrot.slane %v3455, 2
    %v3463 = vunpack.c.l.b16 %v3438
    %v3464 = vpack.c.b16 %v3463, %v3463
    %v3465 = vrot.slane %v3464, 6
    %v3467 = vshll.u32 %v3464, 16
    %v3469 = vrot.slane %v3467, 7
    %v3471 = vrot.slane %v3464, 7
    %v3474 = vunpack.c.l.b16 %v3444
    %v3475 = vpack.c.b16 %v3474, %v3474
    %v3477 = vshll.u32 %v3475, 16
    %v3479 = vrot.slane %v3477, 5
    %v3481 = vrot.slane %v3475, 5
    %v3482 = vrot.slane %v3477, 6
    %v3485 = vunpack.c.l.b16 %v3450
    %v3486 = vpack.c.b16 %v3485, %v3485
    %v3487 = vrot.slane %v3486, 2
    %v3489 = vshll.u32 %v3486, 16
    %v3491 = vrot.slane %v3489, 3
    %v3493 = vrot.slane %v3486, 3
    %v3494 = vrot.slane %v3489, 4
    %vm3496 = vcmask 1040384
    %vm3497 = vsmask.f32 256
    %vm3498 = vmand %vm3496, %vm3497
    %v3499 = vsel %vm3498, %v3432, %v3457
    %v3502 = vsel %vm259, %v3499, %v3459
    %vm3504 = vcmask 1041408
    %vm3505 = vsmask.f32 1280
    %vm3506 = vmand %vm3504, %vm3505
    %v3507 = vsel %vm3506, %v3502, %v3460
    %vm3508 = vcmask 1041408
    %v3511 = vsel %vm3508, %v3507, %v3465
    %vm3513 = vcmask 1042432
    %vm3514 = vsmask.f32 2304
    %vm3515 = vmand %vm3513, %vm3514
    %v3516 = vsel %vm3515, %v3511, %v3469
    %vm3517 = vcmask 1042432
    %v3520 = vsel %vm3517, %v3516, %v3471
    %vm3522 = vcmask 1043456
    %vm3523 = vsmask.f32 3328
    %vm3524 = vmand %vm3522, %vm3523
    %v3525 = vsel %vm3524, %v3520, %v3467
    %vm3526 = vcmask 1043456
    %v3528 = vsel %vm3526, %v3525, %v3475
    %vm3530 = vcmask 1044480
    %vm3531 = vsmask.f32 4352
    %vm3532 = vmand %vm3530, %vm3531
    %v3533 = vsel %vm3532, %v3528, %v3479
    %vm3534 = vcmask 1044480
    %v3537 = vsel %vm3534, %v3533, %v3481
    %vm3539 = vcmask 1045504
    %vm3540 = vsmask.f32 5376
    %vm3541 = vmand %vm3539, %vm3540
    %v3542 = vsel %vm3541, %v3537, %v3482
    %vm3543 = vcmask 1045504
    %v3546 = vsel %vm3543, %v3542, %v3487
    %vm3548 = vcmask 1046528
    %vm3549 = vsmask.f32 6400
    %vm3550 = vmand %vm3548, %vm3549
    %v3551 = vsel %vm3550, %v3546, %v3491
    %v3554 = vsel %vm331, %v3551, %v3493
    %vm3556 = vcmask 1047552
    %vm3557 = vsmask.f32 7424
    %vm3558 = vmand %vm3556, %vm3557
    %v3559 = vsel %vm3558, %v3554, %v3494
    %v3560 = vunpack.c.l.bf16 %v3401
    %v3562 = vrot.slane %v3560, 1
    %v3564 = vmax.f32 %v3560, %v3562
    %v3565 = vpack.c.bf16 %v3564, %v3564
    %v3566 = vunpack.c.l.bf16 %v3402
    %v3568 = vrot.slane %v3566, 1
    %v3570 = vmax.f32 %v3566, %v3568
    %v3571 = vpack.c.bf16 %v3570, %v3570
    %v3572 = vunpack.c.l.bf16 %v3403
    %v3574 = vrot.slane %v3572, 1
    %v3576 = vmax.f32 %v3572, %v3574
    %v3577 = vpack.c.bf16 %v3576, %v3576
    %v3578 = vunpack.c.l.bf16 %v3404
    %v3580 = vrot.slane %v3578, 1
    %v3582 = vmax.f32 %v3578, %v3580
    %v3583 = vpack.c.bf16 %v3582, %v3582
    %v3585 = vunpack.c.l.b16 %v3565
    %v3586 = vpack.c.b16 %v3585, %v3585
    %v3588 = vshll.u32 %v3586, 16
    %v3590 = vrot.slane %v3588, 1
    %v3592 = vrot.slane %v3586, 1
    %v3593 = vrot.slane %v3588, 2
    %v3596 = vunpack.c.l.b16 %v3571
    %v3597 = vpack.c.b16 %v3596, %v3596
    %v3598 = vrot.slane %v3597, 6
    %v3600 = vshll.u32 %v3597, 16
    %v3602 = vrot.slane %v3600, 7
    %v3604 = vrot.slane %v3597, 7
    %v3607 = vunpack.c.l.b16 %v3577
    %v3608 = vpack.c.b16 %v3607, %v3607
    %v3610 = vshll.u32 %v3608, 16
    %v3612 = vrot.slane %v3610, 5
    %v3614 = vrot.slane %v3608, 5
    %v3615 = vrot.slane %v3610, 6
    %v3618 = vunpack.c.l.b16 %v3583
    %v3619 = vpack.c.b16 %v3618, %v3618
    %v3620 = vrot.slane %v3619, 2
    %v3622 = vshll.u32 %v3619, 16
    %v3624 = vrot.slane %v3622, 3
    %v3626 = vrot.slane %v3619, 3
    %v3627 = vrot.slane %v3622, 4
    %v3629 = vsel %vm3498, %v3565, %v3590
    %v3632 = vsel %vm259, %v3629, %v3592
    %v3634 = vsel %vm3506, %v3632, %v3593
    %v3637 = vsel %vm3508, %v3634, %v3598
    %v3639 = vsel %vm3515, %v3637, %v3602
    %v3642 = vsel %vm3517, %v3639, %v3604
    %v3644 = vsel %vm3524, %v3642, %v3600
    %v3646 = vsel %vm3526, %v3644, %v3608
    %v3648 = vsel %vm3532, %v3646, %v3612
    %v3651 = vsel %vm3534, %v3648, %v3614
    %v3653 = vsel %vm3541, %v3651, %v3615
    %v3656 = vsel %vm3543, %v3653, %v3620
    %v3658 = vsel %vm3550, %v3656, %v3624
    %v3661 = vsel %vm331, %v3658, %v3626
    %v3663 = vsel %vm3558, %v3661, %v3627
    %v3664 = vlaneseq
    %v3665 = vand.u32 %v3664, 127
    %vm3666 = vcmp.lt.s32.totalorder %v3665, 0
    %v3667 = vsub.s32 0, %v3665
    %v3668 = vsel %vm3666, %v3667, %v3665
    %v3669 = vshrl.u32 %v3668, 4
    %v3670 = vand.u32 %v3668, 15
    %v3671 = vsub.s32 0, %v3670
    %v3672 = vsel %vm3666, %v3671, %v3670
    %vm3673 = vcmp.ne.s32.totalorder %v3672, 0
    %vm3674 = vcmp.lt.s32.totalorder %v3672, 0
    %vm3675 = vmand %vm3674, %vm3673
    %v3676 = vadd.s32 %v3672, 16
    %v3677 = vsel %vm3675, %v3676, %v3672
    %vm3678 = vcmp.lt.s32.totalorder %v3677, 8
    %3680 = vrot.lane.b32.xlu0 %v3663, 8
    %v3681 = vpop.permute.xlu0 %3680
    %vm3682 = vcmask 64512
    %v3685 = vsel %vm3682, 0, %v3681
    %3688 = vrot.lane.b32.xlu0 %v3559, 120
    %v3689 = vpop.permute.xlu0 %3688
    %v3691 = vsel %vm373, %v3689, 0
    %vm3693 = vmpackc.low %vm3678, %vm3678
    %v3694 = vsel %vm3693, 65537, 0
    %v3695 = vperm.slane %v3694, 0
    %v3696 = vunpack.c.l.b16 %v3695
    %v3697 = vunpack.c.h.b16 %v3695
    %v3698 = vunpack.c.l.b16 0
    %v3699 = vunpack.c.h.b16 0
    %vm3700 = vcmp.ne.s32.totalorder %v3696, %v3698
    %vm3701 = vcmp.ne.s32.totalorder %v3697, %v3699
    %vm3702 = vmpackc.low %vm3701, %vm3700
    %v3703 = vsel %vm3702, %v3559, %v3685
    %v3704 = vsel %vm3702, %v3691, %v3663
    %v3705 = vunpack.c.l.bf16 %v3703
    %v3706 = vunpack.c.h.bf16 %v3703
    %v3707 = vunpack.c.l.bf16 %v3704
    %v3708 = vunpack.c.h.bf16 %v3704
    %v3709 = vmax.f32 %v3705, %v3707
    %v3710 = vmax.f32 %v3706, %v3708
    %v3711 = vpack.c.bf16 %v3709, %v3709
    %v3712 = vpack.c.bf16 %v3710, %v3710
    %3713 = vst [vmem:[%s22] sm:$0xf] %v3711
    %3714 = vst [vmem:[%s22 + $0x4] sm:$0xf] %v3712
    // Predicated region
    $region58: #{_lambda_.1} parent=1 // pred_check
      _
    $region59: #{_lambda_.1} parent=1 // pred_check_branch
      %3716 = sbr.rel (0) target = $region61
    $region60: #{_lambda_.1} parent=1 // pred_region
      _
    $region61: #{_lambda_.1} parent=1 // pred_fallthru
      _
    // Predicated region
    $region62: #{_lambda_.1} parent=1 // pred_check
      _
    $region63: #{_lambda_.1} parent=1 // pred_check_branch
      %3718 = sbr.rel (0) target = $region65
    $region64: #{_lambda_.1} parent=1 // pred_region
      _
    $region65: #{_lambda_.1} parent=1 // pred_fallthru
      _
    // Predicated region
    $region66: #{_lambda_.1} parent=1 // pred_check
      _
    $region67: #{_lambda_.1} parent=1 // pred_check_branch
      %3720 = sbr.rel (0) target = $region69
    $region68: #{_lambda_.1} parent=1 // pred_region
      _
    $region69: #{_lambda_.1} parent=1 // pred_fallthru
      _
    // Predicated region
    $region70: #{_lambda_.1} parent=1 // pred_check
      _
    $region71: #{_lambda_.1} parent=1 // pred_check_branch
      %3722 = sbr.rel (0) target = $region73
    $region72: #{_lambda_.1} parent=1 // pred_region
      _
    $region73: #{_lambda_.1} parent=1 // pred_fallthru
      _
    // Predicated region
    $region74: #{_lambda_.1} parent=1 // pred_check
      _
    $region75: #{_lambda_.1} parent=1 // pred_check_branch
      %3724 = sbr.rel (0) target = $region77
    $region76: #{_lambda_.1} parent=1 // pred_region
      _
    $region77: #{_lambda_.1} parent=1 // pred_fallthru
      _
    // Predicated region
    $region78: #{_lambda_.1} parent=1 // pred_check
      _
    $region79: #{_lambda_.1} parent=1 // pred_check_branch
      %3726 = sbr.rel (0) target = $region81
    $region80: #{_lambda_.1} parent=1 // pred_region
      _
    $region81: #{_lambda_.1} parent=1 // pred_fallthru
      _
    // Predicated region
    $region82: #{_lambda_.1} parent=1 // pred_check
      _
    $region83: #{_lambda_.1} parent=1 // pred_check_branch
      %3728 = sbr.rel (0) target = $region85
    $region84: #{_lambda_.1} parent=1 // pred_region
      _
    $region85: #{_lambda_.1} parent=1 // pred_fallthru
      _
    // Predicated region
    $region86: #{_lambda_.1} parent=1 // pred_check
      _
    $region87: #{_lambda_.1} parent=1 // pred_check_branch
      %3730 = sbr.rel (0) target = $region89
    $region88: #{_lambda_.1} parent=1 // pred_region
      _
    $region89: #{_lambda_.1} parent=1 // pred_fallthru
      _
    // Predicated region
    $region90: #{_lambda_.1} parent=1 // pred_check
      _
    $region91: #{_lambda_.1} parent=1 // pred_check_branch
      %3732 = sbr.rel (0) target = $region93
    $region92: #{_lambda_.1} parent=1 // pred_region
      _
    $region93: #{_lambda_.1} parent=1 // pred_fallthru
      _
    // Predicated region
    $region94: #{_lambda_.1} parent=1 // pred_check
      _
    $region95: #{_lambda_.1} parent=1 // pred_check_branch
      %3734 = sbr.rel (0) target = $region97
    $region96: #{_lambda_.1} parent=1 // pred_region
      %3736 = vsyncadd [#allocation3], 0
      %s3738 = sshll.u32 [#allocation2], 4
      %s3739 = int_to_ptr.vmem [resolvable:$true] %s3738
      %s3740 = sshll.u32 %s23, 4
      %s3741 = int_to_ptr.hbm [resolvable:$true] %s3740
      %3743 = dma.vmem_to_hbm [thread:$0]  %s3739, 16, %s3741, [#allocation3]
    $region97: #{_lambda_.1} parent=1 // pred_fallthru
      _
    // Predicated region
    $region98: #{_lambda_.1} parent=1 // pred_check
      _
    $region99: #{_lambda_.1} parent=1 // pred_check_branch
      %3745 = sbr.rel (0) target = $region101
    $region100: #{_lambda_.1} parent=1 // pred_region
      _
    $region101: #{_lambda_.1} parent=1 // pred_fallthru
      _
    // Predicated region
    $region102: #{_lambda_.1} parent=1 // pred_check
      _
    $region103: #{_lambda_.1} parent=1 // pred_check_branch
      %3747 = sbr.rel (0) target = $region105
    $region104: #{_lambda_.1} parent=1 // pred_region
      _
    $region105: #{_lambda_.1} parent=1 // pred_fallthru
      _
    // Predicated region
    $region106: #{_lambda_.1} parent=1 // pred_check
      _
    $region107: #{_lambda_.1} parent=1 // pred_check_branch
      %3749 = sbr.rel (0) target = $region109
    $region108: #{_lambda_.1} parent=1 // pred_region
      _
    $region109: #{_lambda_.1} parent=1 // pred_fallthru
      _
    // Predicated region
    $region110: #{_lambda_.1} parent=1 // pred_check
      _
    $region111: #{_lambda_.1} parent=1 // pred_check_branch
      %3751 = sbr.rel (0) target = $region113
    $region112: #{_lambda_.1} parent=1 // pred_region
      _
    $region113: #{_lambda_.1} parent=1 // pred_fallthru
      _
    // Predicated region
    $region114: #{_lambda_.1} parent=1 // pred_check
      _
    $region115: #{_lambda_.1} parent=1 // pred_check_branch
      %3753 = sbr.rel (0) target = $region117
    $region116: #{_lambda_.1} parent=1 // pred_region
      _
    $region117: #{_lambda_.1} parent=1 // pred_fallthru
      _
    // Predicated region
    $region118: #{_lambda_.1} parent=1 // pred_check
      _
    $region119: #{_lambda_.1} parent=1 // pred_check_branch
      %3755 = sbr.rel (0) target = $region121
    $region120: #{_lambda_.1} parent=1 // pred_region
      _
    $region121: #{_lambda_.1} parent=1 // pred_fallthru
      _
    // Predicated region
    $region122: #{_lambda_.1} parent=1 // pred_check
      _
    $region123: #{_lambda_.1} parent=1 // pred_check_branch
      %3757 = sbr.rel (0) target = $region125
    $region124: #{_lambda_.1} parent=1 // pred_region
      _
    $region125: #{_lambda_.1} parent=1 // pred_fallthru
      _
    // Predicated region
    $region126: #{_lambda_.1} parent=1 // pred_check
      _
    $region127: #{_lambda_.1} parent=1 // pred_check_branch
      %3759 = sbr.rel (0) target = $region129
    $region128: #{_lambda_.1} parent=1 // pred_region
      _
    $region129: #{_lambda_.1} parent=1 // pred_fallthru
      _
    // Predicated region
    $region130: #{_lambda_.1} parent=1 // pred_check
      _
    $region131: #{_lambda_.1} parent=1 // pred_check_branch
      %3761 = sbr.rel (0) target = $region133
    $region132: #{_lambda_.1} parent=1 // pred_region
      _
    $region133: #{_lambda_.1} parent=1 // pred_fallthru
      _
    // Predicated region
    $region134: #{_lambda_.1} parent=1 // pred_check
      _
    $region135: #{_lambda_.1} parent=1 // pred_check_branch
      %3763 = sbr.rel (0) target = $region137
    $region136: #{_lambda_.1} parent=1 // pred_region
      %3765 = dma.done [#allocation3], 16
    $region137: #{_lambda_.1} parent=1 // pred_fallthru
      _
    %3766 = vsyncpa [#allocation3], 1

</llo_original>
